<compile_context>
chip_gen: v5e
topology: v5e:2x2
jax: 0.10.0
libtpu: 0.0.40
codegen_flags: <defaults>
</compile_context>

<pallas_src>
import functools

import jax
import jax.numpy as jnp
from jax.experimental import pallas as pl
from jax.experimental.pallas import tpu as pltpu

LANE = 128
NEG_INF = -1e30


def _round_up(x, m):
    return (x + m - 1) // m * m


# ---------------------------------------------------------------------------
# Kernel 1: fused projection   h_ext = x @ [W | W@a_dst | W@a_src]   (one MXU call)
# ---------------------------------------------------------------------------
def gat_proj_kernel(x_ref, w_ref, h_ref, ad_ref, as_ref, *, f_out):
    x = x_ref[...].astype(jnp.bfloat16)                     # bf16 at MXU boundary
    w = w_ref[...]                                          # bf16 (Fin_p, Fp), resident
    h_ext = jnp.dot(x, w, preferred_element_type=jnp.float32)   # (TM, Fp) f32
    lane = jax.lax.broadcasted_iota(jnp.int32, h_ext.shape, 1)
    # Value path: zero the folded score lanes / pad lanes so aggregation stays clean.
    h_ref[...] = jnp.where(lane < f_out, h_ext, 0.0).astype(h_ref.dtype)
    ad_ref[...] = h_ext[:, f_out:f_out + 1]                 # h · a_dst  (per target node)
    as_ref[...] = h_ext[:, f_out + 1:f_out + 2]             # h · a_src  (per source node)


def gat_project(x_pad, w_ext, *, f_out, tm=128):
    n_pad, fin_p = x_pad.shape
    fp = w_ext.shape[1]
    tm = min(tm, n_pad)
    kernel = functools.partial(gat_proj_kernel, f_out=f_out)
    return pl.pallas_call(
        kernel,
        out_shape=(
            jax.ShapeDtypeStruct((n_pad, fp), jnp.bfloat16),   # h (values), lane-dense
            jax.ShapeDtypeStruct((n_pad, 1), jnp.float32),     # a_dst scores
            jax.ShapeDtypeStruct((n_pad, 1), jnp.float32),     # a_src scores
        ),
        grid=(n_pad // tm,),
        in_specs=[
            pl.BlockSpec((tm, fin_p), lambda i: (i, 0)),
            pl.BlockSpec((fin_p, fp), lambda i: (0, 0)),       # weights stay resident
        ],
        out_specs=(
            pl.BlockSpec((tm, fp), lambda i: (i, 0)),
            pl.BlockSpec((tm, 1), lambda i: (i, 0)),
            pl.BlockSpec((tm, 1), lambda i: (i, 0)),
        ),
        compiler_params=pltpu.CompilerParams(
            dimension_semantics=("parallel",),
            vmem_limit_bytes=32 * 1024 * 1024),
    )(x_pad, w_ext)


# ---------------------------------------------------------------------------
# Kernel 2: tiled masked softmax + aggregation (online softmax over neighbor blocks)
# ---------------------------------------------------------------------------
def gat_attn_kernel(ad_ref, as_ref, h_ref, adjb_ref, b_ref, o_ref,
                    m_sc, l_sc, acc_sc,
                    *, f_out, apply_relu, apply_log_softmax):
    j = pl.program_id(1)

    @pl.when(j == 0)
    def _():
        m_sc[...] = jnp.full_like(m_sc, NEG_INF)
        l_sc[...] = jnp.zeros_like(l_sc)
        acc_sc[...] = jnp.zeros_like(acc_sc)

    # e[i, j] = LeakyReLU(a_dst[i] + a_src[j], 0.2) + additive mask (0 / -1e30)
    e = ad_ref[...] + as_ref[...]                       # (TQ,1)+(1,TK) -> (TQ,TK)
    e = jnp.maximum(e, 0.2 * e)                         # LeakyReLU, single VPU op
    e = e + adjb_ref[...].astype(jnp.float32)           # mask-add (no compare+select)

    m_prev = m_sc[...]
    m_new = jnp.maximum(m_prev, jnp.max(e, axis=-1, keepdims=True))
    corr = jnp.exp(m_prev - m_new)                      # rescale running stats
    p = jnp.exp(e - m_new)                              # masked entries underflow to 0
    l_sc[...] = corr * l_sc[...] + jnp.sum(p, axis=-1, keepdims=True)
    acc_sc[...] = corr * acc_sc[...] + jnp.dot(
        p.astype(jnp.bfloat16), h_ref[...], preferred_element_type=jnp.float32)
    m_sc[...] = m_new

    @pl.when(j == pl.num_programs(1) - 1)
    def _():
        # self-loops guarantee >=1 neighbor per row; clamp defensively anyway.
        inv_l = pl.reciprocal(jnp.maximum(l_sc[...], 1e-30), approx=True)
        out = acc_sc[...] * inv_l + b_ref[...]
        if apply_relu:
            out = jnp.maximum(out, 0.0)
        if apply_log_softmax:
            lane = jax.lax.broadcasted_iota(jnp.int32, out.shape, 1)
            out = jnp.where(lane < f_out, out, NEG_INF)          # exclude pad lanes
            mm = jnp.max(out, axis=-1, keepdims=True)
            s = out - mm
            out = s - jnp.log(jnp.sum(jnp.exp(s), axis=-1, keepdims=True))
        o_ref[...] = out.astype(o_ref.dtype)


def gat_attention(ad, as_row, h, adj_bias, bias_pad,
                  *, f_out, apply_relu, apply_log_softmax, tq=128, tk=128):
    n_pad, fp = h.shape
    tq = min(tq, n_pad)
    tk = min(tk, n_pad)
    grid = (n_pad // tq, n_pad // tk)
    kernel = functools.partial(gat_attn_kernel, f_out=f_out,
                               apply_relu=apply_relu,
                               apply_log_softmax=apply_log_softmax)
    cost = pl.CostEstimate(
        flops=2 * n_pad * n_pad * fp + 12 * n_pad * n_pad,
        transcendentals=n_pad * n_pad,
        bytes_accessed=(adj_bias.size * adj_bias.dtype.itemsize
                        + grid[0] * h.size * h.dtype.itemsize
                        + n_pad * fp * 4 + n_pad * 8))
    return pl.pallas_call(
        kernel,
        out_shape=jax.ShapeDtypeStruct((n_pad, fp), jnp.float32),
        grid=grid,
        in_specs=[
            pl.BlockSpec((tq, 1), lambda i, j: (i, 0)),     # a_dst, target rows
            pl.BlockSpec((1, tk), lambda i, j: (0, j)),     # a_src, lane-oriented cols
            pl.BlockSpec((tk, fp), lambda i, j: (j, 0)),    # neighbor values (bf16)
            pl.BlockSpec((tq, tk), lambda i, j: (i, j)),    # additive adjacency mask
            pl.BlockSpec((1, fp), lambda i, j: (0, 0)),     # bias, resident
        ],
        out_specs=pl.BlockSpec((tq, fp), lambda i, j: (i, 0)),
        scratch_shapes=[
            pltpu.VMEM((tq, 1), jnp.float32),               # running max
            pltpu.VMEM((tq, 1), jnp.float32),               # running denom
            pltpu.VMEM((tq, fp), jnp.float32),              # accumulator
        ],
        compiler_params=pltpu.CompilerParams(
            dimension_semantics=("parallel", "arbitrary"),
            vmem_limit_bytes=32 * 1024 * 1024),
        cost_estimate=cost,
    )(ad, as_row, h, adj_bias, bias_pad)


# ---------------------------------------------------------------------------
# Layer / model wrappers
# ---------------------------------------------------------------------------
def gat_conv(x_pad, adj_bias, layer, *, apply_relu, apply_log_softmax):
    h, ad, a_s = gat_project(x_pad, layer["w_ext"], f_out=layer["f_out"])
    as_row = a_s.reshape(1, -1)          # (N,1) -> (1,N): layout plumbing only
    return gat_attention(ad, as_row, h, adj_bias, layer["bias"],
                         f_out=layer["f_out"], apply_relu=apply_relu,
                         apply_log_softmax=apply_log_softmax)


def glorot(key, shape):
    fan_in, fan_out = shape
    limit = jnp.sqrt(6.0 / (fan_in + fan_out))
    return jax.random.uniform(key, shape, jnp.float32, -limit, limit)


def init_gat_params(key, in_channels, hidden_channels, out_channels, num_layers):
    dims = [in_channels] + [hidden_channels] * (num_layers - 1) + [out_channels]
    layers = []
    fin_p = _round_up(in_channels, LANE)
    for layer in range(num_layers):
        f_in, f_out = dims[layer], dims[layer + 1]
        fp = _round_up(f_out + 2, LANE)
        key, kw, ks, kd = jax.random.split(key, 4)
        w = glorot(kw, (f_in, f_out))
        a_src = glorot(ks, (f_out, 1))
        a_dst = glorot(kd, (f_out, 1))
        # Fold attention projections into the main matmul:
        #   lanes [0, f_out) -> W,  lane f_out -> W@a_dst,  lane f_out+1 -> W@a_src
        w_ext = jnp.zeros((fin_p, fp), jnp.float32)
        w_ext = w_ext.at[:f_in, :f_out].set(w)
        w_ext = w_ext.at[:f_in, f_out].set((w @ a_dst)[:, 0])
        w_ext = w_ext.at[:f_in, f_out + 1].set((w @ a_src)[:, 0])
        layers.append(dict(w_ext=w_ext.astype(jnp.bfloat16),
                           bias=jnp.zeros((1, fp), jnp.float32),
                           f_out=f_out, f_in=f_in))
        fin_p = fp   # next layer consumes the padded activation width
    return layers


def _preprocess(x, adj, fin_p):
    """Pad to lane multiples and build the additive bf16 adjacency mask (+self-loops)."""
    n = x.shape[0]
    n_pad = _round_up(n, LANE)
    x_pad = jnp.zeros((n_pad, fin_p), jnp.float32).at[:n, :x.shape[1]].set(x)
    adj_sl = jnp.clip(adj + jnp.eye(n, dtype=adj.dtype), 0.0, 1.0)
    adj_bias = jnp.full((n_pad, n_pad), NEG_INF, jnp.float32)
    adj_bias = adj_bias.at[:n, :n].set(jnp.where(adj_sl > 0, 0.0, NEG_INF))
    return x_pad, adj_bias.astype(jnp.bfloat16)


def gat_forward(x, adj, params):
    """Mirrors GAT.forward (eval): (conv -> relu -> dropout[eval]) * (L-1), conv, log_softmax."""
    n = x.shape[0]
    x_pad, adj_bias = _preprocess(x, adj, params[0]["w_ext"].shape[0])
    num_layers = len(params)
    h = x_pad
    for idx, layer in enumerate(params):
        last = idx == num_layers - 1
        h = gat_conv(h, adj_bias, layer,
                     apply_relu=not last, apply_log_softmax=last)
        # F.dropout(p=0.5, training=False) == identity in eval mode.
    return h[:n, :params[-1]["f_out"]]


# ---------------------------------------------------------------------------
# Pure-JAX reference (mirrors the kernel's bf16 casting points)
# ---------------------------------------------------------------------------
def reference_forward(x, adj, params):
    n = x.shape[0]
    x_pad, adj_bias = _preprocess(x, adj, params[0]["w_ext"].shape[0])
    ab = adj_bias.astype(jnp.float32)
    h = x_pad
    for idx, layer in enumerate(params):
        last = idx == len(params) - 1
        f_out = layer["f_out"]
        w = layer["w_ext"].astype(jnp.float32)
        fp = w.shape[1]
        h_ext = h.astype(jnp.bfloat16).astype(jnp.float32) @ w
        lane = jnp.arange(fp)[None, :]
        hv = jnp.where(lane < f_out, h_ext, 0.0)
        ad = h_ext[:, f_out:f_out + 1]
        a_s = h_ext[:, f_out + 1:f_out + 2]
        e = ad + a_s.T
        e = jnp.maximum(e, 0.2 * e) + ab
        e = e - jnp.max(e, axis=-1, keepdims=True)
        p = jnp.exp(e)
        alpha = p / jnp.sum(p, axis=-1, keepdims=True)
        out = (alpha.astype(jnp.bfloat16).astype(jnp.float32)
               @ hv.astype(jnp.bfloat16).astype(jnp.float32)) + layer["bias"]
        if not last:
            out = jnp.maximum(out, 0.0)
        else:
            out = jnp.where(lane < f_out, out, NEG_INF)
            out = jax.nn.log_softmax(out, axis=-1)
        h = out
    return h[:n, :params[-1]["f_out"]]


if __name__ == "__main__":
    # Small synthetic graph: N=256 nodes, in=16, hidden=32, out=8, 3 layers.
    N, IN_C, HID_C, OUT_C, NUM_LAYERS = 256, 16, 32, 8, 3

    key = jax.random.PRNGKey(0)
    kx, kadj, kparams = jax.random.split(key, 3)

    x = jax.random.normal(kx, (N, IN_C), jnp.float32)
    adj = (jax.random.uniform(kadj, (N, N)) < 0.05).astype(jnp.float32)  # j -> i mask

    params = init_gat_params(kparams, IN_C, HID_C, OUT_C, NUM_LAYERS)

    fwd = jax.jit(functools.partial(gat_forward, params=params))
    out = jax.block_until_ready(fwd(x, adj))

    assert out.shape == (N, OUT_C)
    assert bool(jnp.all(jnp.isfinite(out)))
    # Rows of log_softmax output should exponentiate-sum to ~1.
    assert bool(jnp.allclose(jnp.sum(jnp.exp(out), axis=-1), 1.0, atol=1e-3))
    # Numerical agreement with a pure-JAX reference (bf16-matched, loose tolerance).
    ref = reference_forward(x, adj, params)
    max_diff = float(jnp.max(jnp.abs(out - ref)))
    assert max_diff < 1e-1, f"max diff vs reference: {max_diff}"

    print("KERNEL_OK")
</pallas_src>

<mosaic_0001>
module attributes {stable_mosaic.version = 11 : i64} {
  func.func @gat_proj_kernel(%arg0: i32, %arg1: memref<128x128xf32, #tpu.memory_space<vmem>>, %arg2: memref<128x128xbf16, #tpu.memory_space<vmem>>, %arg3: memref<128x128xbf16, #tpu.memory_space<vmem>>, %arg4: memref<128x1xf32, #tpu.memory_space<vmem>>, %arg5: memref<128x1xf32, #tpu.memory_space<vmem>>) attributes {dimension_semantics = [#tpu.dimension_semantics<parallel>], iteration_bounds = array<i64: 2>, scalar_prefetch = 0 : i64, scratch_operands = 0 : i64, tpu.core_type = #tpu.core_type<tc>, window_params = [{transform_indices = @transform_0, window_bounds = array<i64: 128, 128>}, {pipeline_mode = #tpu.pipeline_mode<synchronous>, transform_indices = @transform_1, window_bounds = array<i64: 128, 128>}, {transform_indices = @transform_2, window_bounds = array<i64: 128, 128>}, {transform_indices = @transform_3, window_bounds = array<i64: 128, 1>}, {transform_indices = @transform_4, window_bounds = array<i64: 128, 1>}]} {
    %c0 = arith.constant 0 : index
    %c0_0 = arith.constant 0 : index
    %0 = vector.load %arg1[%c0, %c0_0] : memref<128x128xf32, #tpu.memory_space<vmem>>, vector<128x128xf32>
    %1 = arith.truncf %0 : vector<128x128xf32> to vector<128x128xbf16>
    %c0_1 = arith.constant 0 : index
    %c0_2 = arith.constant 0 : index
    %2 = vector.load %arg2[%c0_1, %c0_2] : memref<128x128xbf16, #tpu.memory_space<vmem>>, vector<128x128xbf16>
    %cst = arith.constant dense<0.000000e+00> : vector<128x128xf32>
    %3 = tpu.matmul %1, %2, %cst {dimension_numbers = #tpu.dot_dimension_numbers<[1], [0], [0], [1], [0, 0, 1, 1], [], []>} : vector<128x128xbf16>, vector<128x128xbf16>, vector<128x128xf32> -> vector<128x128xf32>
    %4 = tpu.iota {dimensions = array<i32: 1>} : vector<128x128xi32>
    %c32_i32 = arith.constant 32 : i32
    %5 = vector.broadcast %c32_i32 : i32 to vector<128x128xi32>
    %6 = arith.cmpi slt, %4, %5 : vector<128x128xi32>
    %cst_3 = arith.constant 0.000000e+00 : f32
    %7 = vector.broadcast %cst_3 : f32 to vector<128x128xf32>
    %8 = arith.select %6, %3, %7 : vector<128x128xi1>, vector<128x128xf32>
    %9 = arith.truncf %8 : vector<128x128xf32> to vector<128x128xbf16>
    %c0_4 = arith.constant 0 : index
    %c0_5 = arith.constant 0 : index
    %10 = vector.load %arg3[%c0_4, %c0_5] : memref<128x128xbf16, #tpu.memory_space<vmem>>, vector<128x128xbf16>
    tpu.vector_store %arg3[%c0_4, %c0_5], %9 {strides = array<i32>} : memref<128x128xbf16, #tpu.memory_space<vmem>>, vector<128x128xbf16>,
    %11 = vector.extract_strided_slice %3 {offsets = [0, 32], sizes = [128, 1], strides = [1, 1]} : vector<128x128xf32> to vector<128x1xf32>
    %c0_6 = arith.constant 0 : index
    %c0_7 = arith.constant 0 : index
    %12 = vector.load %arg4[%c0_6, %c0_7] : memref<128x1xf32, #tpu.memory_space<vmem>>, vector<128x1xf32>
    tpu.vector_store %arg4[%c0_6, %c0_7], %11 {strides = array<i32>} : memref<128x1xf32, #tpu.memory_space<vmem>>, vector<128x1xf32>,
    %13 = vector.extract_strided_slice %3 {offsets = [0, 33], sizes = [128, 1], strides = [1, 1]} : vector<128x128xf32> to vector<128x1xf32>
    %c0_8 = arith.constant 0 : index
    %c0_9 = arith.constant 0 : index
    %14 = vector.load %arg5[%c0_8, %c0_9] : memref<128x1xf32, #tpu.memory_space<vmem>>, vector<128x1xf32>
    tpu.vector_store %arg5[%c0_8, %c0_9], %13 {strides = array<i32>} : memref<128x1xf32, #tpu.memory_space<vmem>>, vector<128x1xf32>,
    return
  }
  func.func @transform_0(%arg0: i32) -> (i32, i32) {
    %c0_i32 = arith.constant 0 : i32
    %c0_i32_0 = arith.constant 0 : i32
    return %arg0, %c0_i32 : i32, i32
  }
  func.func @transform_1(%arg0: i32) -> (i32, i32) {
    %c0_i32 = arith.constant 0 : i32
    %c0_i32_0 = arith.constant 0 : i32
    %c0_i32_1 = arith.constant 0 : i32
    return %c0_i32, %c0_i32_0 : i32, i32
  }
  func.func @transform_2(%arg0: i32) -> (i32, i32) {
    %c0_i32 = arith.constant 0 : i32
    %c0_i32_0 = arith.constant 0 : i32
    return %arg0, %c0_i32 : i32, i32
  }
  func.func @transform_3(%arg0: i32) -> (i32, i32) {
    %c0_i32 = arith.constant 0 : i32
    %c0_i32_0 = arith.constant 0 : i32
    return %arg0, %c0_i32 : i32, i32
  }
  func.func @transform_4(%arg0: i32) -> (i32, i32) {
    %c0_i32 = arith.constant 0 : i32
    %c0_i32_0 = arith.constant 0 : i32
    return %arg0, %c0_i32 : i32, i32
  }
}

module attributes {stable_mosaic.version = 11 : i64} {
  func.func @gat_attn_kernel(%arg0: i32, %arg1: i32, %arg2: memref<128x1xf32, #tpu.memory_space<vmem>>, %arg3: memref<1x128xf32, #tpu.memory_space<vmem>>, %arg4: memref<128x128xbf16, #tpu.memory_space<vmem>>, %arg5: memref<128x128xbf16, #tpu.memory_space<vmem>>, %arg6: memref<1x128xf32, #tpu.memory_space<vmem>>, %arg7: memref<128x128xf32, #tpu.memory_space<vmem>>, %arg8: memref<128x1xf32, #tpu.memory_space<vmem>>, %arg9: memref<128x1xf32, #tpu.memory_space<vmem>>, %arg10: memref<128x128xf32, #tpu.memory_space<vmem>>) attributes {dimension_semantics = [#tpu.dimension_semantics<parallel>, #tpu.dimension_semantics<arbitrary>], iteration_bounds = array<i64: 2, 2>, scalar_prefetch = 0 : i64, scratch_operands = 3 : i64, tpu.core_type = #tpu.core_type<tc>, window_params = [{transform_indices = @transform_0, window_bounds = array<i64: 128, 1>}, {transform_indices = @transform_1, window_bounds = array<i64: 1, 128>}, {transform_indices = @transform_2, window_bounds = array<i64: 128, 128>}, {transform_indices = @transform_3, window_bounds = array<i64: 128, 128>}, {pipeline_mode = #tpu.pipeline_mode<synchronous>, transform_indices = @transform_4, window_bounds = array<i64: 1, 128>}, {transform_indices = @transform_5, window_bounds = array<i64: 128, 128>}]} {
    %c0_i32 = arith.constant 0 : i32
    %0 = arith.cmpi eq, %arg1, %c0_i32 : i32
    %1 = arith.extui %0 : i1 to i32
    %c0_i32_0 = arith.constant 0 : i32
    %2 = arith.cmpi ne, %1, %c0_i32_0 : i32
    scf.if %2 {
      %cst_24 = arith.constant -1.000000e+30 : f32
      %41 = vector.broadcast %cst_24 : f32 to vector<128x1xf32>
      %c0_25 = arith.constant 0 : index
      %c0_26 = arith.constant 0 : index
      %42 = vector.load %arg8[%c0_25, %c0_26] : memref<128x1xf32, #tpu.memory_space<vmem>>, vector<128x1xf32>
      tpu.vector_store %arg8[%c0_25, %c0_26], %41 {strides = array<i32>} : memref<128x1xf32, #tpu.memory_space<vmem>>, vector<128x1xf32>,
      %cst_27 = arith.constant 0.000000e+00 : f32
      %43 = vector.broadcast %cst_27 : f32 to vector<128x1xf32>
      %c0_28 = arith.constant 0 : index
      %c0_29 = arith.constant 0 : index
      %44 = vector.load %arg9[%c0_28, %c0_29] : memref<128x1xf32, #tpu.memory_space<vmem>>, vector<128x1xf32>
      tpu.vector_store %arg9[%c0_28, %c0_29], %43 {strides = array<i32>} : memref<128x1xf32, #tpu.memory_space<vmem>>, vector<128x1xf32>,
      %cst_30 = arith.constant 0.000000e+00 : f32
      %45 = vector.broadcast %cst_30 : f32 to vector<128x128xf32>
      %c0_31 = arith.constant 0 : index
      %c0_32 = arith.constant 0 : index
      %46 = vector.load %arg10[%c0_31, %c0_32] : memref<128x128xf32, #tpu.memory_space<vmem>>, vector<128x128xf32>
      tpu.vector_store %arg10[%c0_31, %c0_32], %45 {strides = array<i32>} : memref<128x128xf32, #tpu.memory_space<vmem>>, vector<128x128xf32>,
    } else {
    }
    %c0 = arith.constant 0 : index
    %c0_1 = arith.constant 0 : index
    %3 = vector.load %arg2[%c0, %c0_1] : memref<128x1xf32, #tpu.memory_space<vmem>>, vector<128x1xf32>
    %c0_2 = arith.constant 0 : index
    %c0_3 = arith.constant 0 : index
    %4 = vector.load %arg3[%c0_2, %c0_3] : memref<1x128xf32, #tpu.memory_space<vmem>>, vector<1x128xf32>
    %5 = vector.broadcast %3 : vector<128x1xf32> to vector<128x128xf32>
    %6 = vector.broadcast %4 : vector<1x128xf32> to vector<128x128xf32>
    %7 = arith.addf %5, %6 : vector<128x128xf32>
    %cst = arith.constant 2.000000e-01 : f32
    %8 = vector.broadcast %cst : f32 to vector<128x128xf32>
    %9 = arith.mulf %8, %7 : vector<128x128xf32>
    %10 = arith.maximumf %7, %9 : vector<128x128xf32>
    %c0_4 = arith.constant 0 : index
    %c0_5 = arith.constant 0 : index
    %11 = vector.load %arg5[%c0_4, %c0_5] : memref<128x128xbf16, #tpu.memory_space<vmem>>, vector<128x128xbf16>
    %12 = arith.extf %11 : vector<128x128xbf16> to vector<128x128xf32>
    %13 = arith.addf %10, %12 : vector<128x128xf32>
    %c0_6 = arith.constant 0 : index
    %c0_7 = arith.constant 0 : index
    %14 = vector.load %arg8[%c0_6, %c0_7] : memref<128x1xf32, #tpu.memory_space<vmem>>, vector<128x1xf32>
    %cst_8 = arith.constant dense<0xFF800000> : vector<128xf32>
    %15 = vector.multi_reduction <maximumf>, %13, %cst_8 [1] : vector<128x128xf32> to vector<128xf32>
    %16 = vector.shape_cast %15 : vector<128xf32> to vector<128x1xf32>
    %17 = arith.maximumf %14, %16 : vector<128x1xf32>
    %18 = arith.subf %14, %17 : vector<128x1xf32>
    %19 = math.exp %18 : vector<128x1xf32>
    %20 = vector.broadcast %17 : vector<128x1xf32> to vector<128x128xf32>
    %21 = arith.subf %13, %20 : vector<128x128xf32>
    %22 = math.exp %21 : vector<128x128xf32>
    %c0_9 = arith.constant 0 : index
    %c0_10 = arith.constant 0 : index
    %23 = vector.load %arg9[%c0_9, %c0_10] : memref<128x1xf32, #tpu.memory_space<vmem>>, vector<128x1xf32>
    %24 = arith.mulf %19, %23 : vector<128x1xf32>
    %cst_11 = arith.constant dense<0.000000e+00> : vector<128xf32>
    %25 = vector.multi_reduction <add>, %22, %cst_11 [1] : vector<128x128xf32> to vector<128xf32>
    %26 = vector.shape_cast %25 : vector<128xf32> to vector<128x1xf32>
    %27 = arith.addf %24, %26 : vector<128x1xf32>
    %c0_12 = arith.constant 0 : index
    %c0_13 = arith.constant 0 : index
    %28 = vector.load %arg9[%c0_12, %c0_13] : memref<128x1xf32, #tpu.memory_space<vmem>>, vector<128x1xf32>
    tpu.vector_store %arg9[%c0_12, %c0_13], %27 {strides = array<i32>} : memref<128x1xf32, #tpu.memory_space<vmem>>, vector<128x1xf32>,
    %c0_14 = arith.constant 0 : index
    %c0_15 = arith.constant 0 : index
    %29 = vector.load %arg10[%c0_14, %c0_15] : memref<128x128xf32, #tpu.memory_space<vmem>>, vector<128x128xf32>
    %30 = vector.broadcast %19 : vector<128x1xf32> to vector<128x128xf32>
    %31 = arith.mulf %30, %29 : vector<128x128xf32>
    %32 = arith.truncf %22 : vector<128x128xf32> to vector<128x128xbf16>
    %c0_16 = arith.constant 0 : index
    %c0_17 = arith.constant 0 : index
    %33 = vector.load %arg4[%c0_16, %c0_17] : memref<128x128xbf16, #tpu.memory_space<vmem>>, vector<128x128xbf16>
    %cst_18 = arith.constant dense<0.000000e+00> : vector<128x128xf32>
    %34 = tpu.matmul %32, %33, %cst_18 {dimension_numbers = #tpu.dot_dimension_numbers<[1], [0], [0], [1], [0, 0, 1, 1], [], []>} : vector<128x128xbf16>, vector<128x128xbf16>, vector<128x128xf32> -> vector<128x128xf32>
    %35 = arith.addf %31, %34 : vector<128x128xf32>
    %c0_19 = arith.constant 0 : index
    %c0_20 = arith.constant 0 : index
    %36 = vector.load %arg10[%c0_19, %c0_20] : memref<128x128xf32, #tpu.memory_space<vmem>>, vector<128x128xf32>
    tpu.vector_store %arg10[%c0_19, %c0_20], %35 {strides = array<i32>} : memref<128x128xf32, #tpu.memory_space<vmem>>, vector<128x128xf32>,
    %c0_21 = arith.constant 0 : index
    %c0_22 = arith.constant 0 : index
    %37 = vector.load %arg8[%c0_21, %c0_22] : memref<128x1xf32, #tpu.memory_space<vmem>>, vector<128x1xf32>
    tpu.vector_store %arg8[%c0_21, %c0_22], %17 {strides = array<i32>} : memref<128x1xf32, #tpu.memory_space<vmem>>, vector<128x1xf32>,
    %c1_i32 = arith.constant 1 : i32
    %38 = arith.cmpi eq, %arg1, %c1_i32 : i32
    %39 = arith.extui %38 : i1 to i32
    %c0_i32_23 = arith.constant 0 : i32
    %40 = arith.cmpi ne, %39, %c0_i32_23 : i32
    scf.if %40 {
      %c0_24 = arith.constant 0 : index
      %c0_25 = arith.constant 0 : index
      %41 = vector.load %arg9[%c0_24, %c0_25] : memref<128x1xf32, #tpu.memory_space<vmem>>, vector<128x1xf32>
      %cst_26 = arith.constant 1.000000e-30 : f32
      %42 = vector.broadcast %cst_26 : f32 to vector<128x1xf32>
      %43 = arith.maximumf %41, %42 : vector<128x1xf32>
      %44 = tpu.reciprocal %43 {approx = true} : vector<128x1xf32> -> vector<128x1xf32>
      %c0_27 = arith.constant 0 : index
      %c0_28 = arith.constant 0 : index
      %45 = vector.load %arg10[%c0_27, %c0_28] : memref<128x128xf32, #tpu.memory_space<vmem>>, vector<128x128xf32>
      %46 = vector.broadcast %44 : vector<128x1xf32> to vector<128x128xf32>
      %47 = arith.mulf %45, %46 : vector<128x128xf32>
      %c0_29 = arith.constant 0 : index
      %c0_30 = arith.constant 0 : index
      %48 = vector.load %arg6[%c0_29, %c0_30] : memref<1x128xf32, #tpu.memory_space<vmem>>, vector<1x128xf32>
      %49 = vector.broadcast %48 : vector<1x128xf32> to vector<128x128xf32>
      %50 = arith.addf %47, %49 : vector<128x128xf32>
      %cst_31 = arith.constant 0.000000e+00 : f32
      %51 = vector.broadcast %cst_31 : f32 to vector<128x128xf32>
      %52 = arith.maximumf %50, %51 : vector<128x128xf32>
      %c0_32 = arith.constant 0 : index
      %c0_33 = arith.constant 0 : index
      %53 = vector.load %arg7[%c0_32, %c0_33] : memref<128x128xf32, #tpu.memory_space<vmem>>, vector<128x128xf32>
      tpu.vector_store %arg7[%c0_32, %c0_33], %52 {strides = array<i32>} : memref<128x128xf32, #tpu.memory_space<vmem>>, vector<128x128xf32>,
    } else {
    }
    return
  }
  func.func @transform_0(%arg0: i32, %arg1: i32) -> (i32, i32) {
    %c0_i32 = arith.constant 0 : i32
    %c0_i32_0 = arith.constant 0 : i32
    return %arg0, %c0_i32 : i32, i32
  }
  func.func @transform_1(%arg0: i32, %arg1: i32) -> (i32, i32) {
    %c0_i32 = arith.constant 0 : i32
    %c0_i32_0 = arith.constant 0 : i32
    return %c0_i32, %arg1 : i32, i32
  }
  func.func @transform_2(%arg0: i32, %arg1: i32) -> (i32, i32) {
    %c0_i32 = arith.constant 0 : i32
    %c0_i32_0 = arith.constant 0 : i32
    return %arg1, %c0_i32 : i32, i32
  }
  func.func @transform_3(%arg0: i32, %arg1: i32) -> (i32, i32) {
    %c0_i32 = arith.constant 0 : i32
    return %arg0, %arg1 : i32, i32
  }
  func.func @transform_4(%arg0: i32, %arg1: i32) -> (i32, i32) {
    %c0_i32 = arith.constant 0 : i32
    %c0_i32_0 = arith.constant 0 : i32
    %c0_i32_1 = arith.constant 0 : i32
    return %c0_i32, %c0_i32_0 : i32, i32
  }
  func.func @transform_5(%arg0: i32, %arg1: i32) -> (i32, i32) {
    %c0_i32 = arith.constant 0 : i32
    %c0_i32_0 = arith.constant 0 : i32
    return %arg0, %c0_i32 : i32, i32
  }
}

module attributes {stable_mosaic.version = 11 : i64} {
  func.func @gat_attn_kernel(%arg0: i32, %arg1: i32, %arg2: memref<128x1xf32, #tpu.memory_space<vmem>>, %arg3: memref<1x128xf32, #tpu.memory_space<vmem>>, %arg4: memref<128x128xbf16, #tpu.memory_space<vmem>>, %arg5: memref<128x128xbf16, #tpu.memory_space<vmem>>, %arg6: memref<1x128xf32, #tpu.memory_space<vmem>>, %arg7: memref<128x128xf32, #tpu.memory_space<vmem>>, %arg8: memref<128x1xf32, #tpu.memory_space<vmem>>, %arg9: memref<128x1xf32, #tpu.memory_space<vmem>>, %arg10: memref<128x128xf32, #tpu.memory_space<vmem>>) attributes {dimension_semantics = [#tpu.dimension_semantics<parallel>, #tpu.dimension_semantics<arbitrary>], iteration_bounds = array<i64: 2, 2>, scalar_prefetch = 0 : i64, scratch_operands = 3 : i64, tpu.core_type = #tpu.core_type<tc>, window_params = [{transform_indices = @transform_0, window_bounds = array<i64: 128, 1>}, {transform_indices = @transform_1, window_bounds = array<i64: 1, 128>}, {transform_indices = @transform_2, window_bounds = array<i64: 128, 128>}, {transform_indices = @transform_3, window_bounds = array<i64: 128, 128>}, {pipeline_mode = #tpu.pipeline_mode<synchronous>, transform_indices = @transform_4, window_bounds = array<i64: 1, 128>}, {transform_indices = @transform_5, window_bounds = array<i64: 128, 128>}]} {
    %c0_i32 = arith.constant 0 : i32
    %0 = arith.cmpi eq, %arg1, %c0_i32 : i32
    %1 = arith.extui %0 : i1 to i32
    %c0_i32_0 = arith.constant 0 : i32
    %2 = arith.cmpi ne, %1, %c0_i32_0 : i32
    scf.if %2 {
      %cst_24 = arith.constant -1.000000e+30 : f32
      %41 = vector.broadcast %cst_24 : f32 to vector<128x1xf32>
      %c0_25 = arith.constant 0 : index
      %c0_26 = arith.constant 0 : index
      %42 = vector.load %arg8[%c0_25, %c0_26] : memref<128x1xf32, #tpu.memory_space<vmem>>, vector<128x1xf32>
      tpu.vector_store %arg8[%c0_25, %c0_26], %41 {strides = array<i32>} : memref<128x1xf32, #tpu.memory_space<vmem>>, vector<128x1xf32>,
      %cst_27 = arith.constant 0.000000e+00 : f32
      %43 = vector.broadcast %cst_27 : f32 to vector<128x1xf32>
      %c0_28 = arith.constant 0 : index
      %c0_29 = arith.constant 0 : index
      %44 = vector.load %arg9[%c0_28, %c0_29] : memref<128x1xf32, #tpu.memory_space<vmem>>, vector<128x1xf32>
      tpu.vector_store %arg9[%c0_28, %c0_29], %43 {strides = array<i32>} : memref<128x1xf32, #tpu.memory_space<vmem>>, vector<128x1xf32>,
      %cst_30 = arith.constant 0.000000e+00 : f32
      %45 = vector.broadcast %cst_30 : f32 to vector<128x128xf32>
      %c0_31 = arith.constant 0 : index
      %c0_32 = arith.constant 0 : index
      %46 = vector.load %arg10[%c0_31, %c0_32] : memref<128x128xf32, #tpu.memory_space<vmem>>, vector<128x128xf32>
      tpu.vector_store %arg10[%c0_31, %c0_32], %45 {strides = array<i32>} : memref<128x128xf32, #tpu.memory_space<vmem>>, vector<128x128xf32>,
    } else {
    }
    %c0 = arith.constant 0 : index
    %c0_1 = arith.constant 0 : index
    %3 = vector.load %arg2[%c0, %c0_1] : memref<128x1xf32, #tpu.memory_space<vmem>>, vector<128x1xf32>
    %c0_2 = arith.constant 0 : index
    %c0_3 = arith.constant 0 : index
    %4 = vector.load %arg3[%c0_2, %c0_3] : memref<1x128xf32, #tpu.memory_space<vmem>>, vector<1x128xf32>
    %5 = vector.broadcast %3 : vector<128x1xf32> to vector<128x128xf32>
    %6 = vector.broadcast %4 : vector<1x128xf32> to vector<128x128xf32>
    %7 = arith.addf %5, %6 : vector<128x128xf32>
    %cst = arith.constant 2.000000e-01 : f32
    %8 = vector.broadcast %cst : f32 to vector<128x128xf32>
    %9 = arith.mulf %8, %7 : vector<128x128xf32>
    %10 = arith.maximumf %7, %9 : vector<128x128xf32>
    %c0_4 = arith.constant 0 : index
    %c0_5 = arith.constant 0 : index
    %11 = vector.load %arg5[%c0_4, %c0_5] : memref<128x128xbf16, #tpu.memory_space<vmem>>, vector<128x128xbf16>
    %12 = arith.extf %11 : vector<128x128xbf16> to vector<128x128xf32>
    %13 = arith.addf %10, %12 : vector<128x128xf32>
    %c0_6 = arith.constant 0 : index
    %c0_7 = arith.constant 0 : index
    %14 = vector.load %arg8[%c0_6, %c0_7] : memref<128x1xf32, #tpu.memory_space<vmem>>, vector<128x1xf32>
    %cst_8 = arith.constant dense<0xFF800000> : vector<128xf32>
    %15 = vector.multi_reduction <maximumf>, %13, %cst_8 [1] : vector<128x128xf32> to vector<128xf32>
    %16 = vector.shape_cast %15 : vector<128xf32> to vector<128x1xf32>
    %17 = arith.maximumf %14, %16 : vector<128x1xf32>
    %18 = arith.subf %14, %17 : vector<128x1xf32>
    %19 = math.exp %18 : vector<128x1xf32>
    %20 = vector.broadcast %17 : vector<128x1xf32> to vector<128x128xf32>
    %21 = arith.subf %13, %20 : vector<128x128xf32>
    %22 = math.exp %21 : vector<128x128xf32>
    %c0_9 = arith.constant 0 : index
    %c0_10 = arith.constant 0 : index
    %23 = vector.load %arg9[%c0_9, %c0_10] : memref<128x1xf32, #tpu.memory_space<vmem>>, vector<128x1xf32>
    %24 = arith.mulf %19, %23 : vector<128x1xf32>
    %cst_11 = arith.constant dense<0.000000e+00> : vector<128xf32>
    %25 = vector.multi_reduction <add>, %22, %cst_11 [1] : vector<128x128xf32> to vector<128xf32>
    %26 = vector.shape_cast %25 : vector<128xf32> to vector<128x1xf32>
    %27 = arith.addf %24, %26 : vector<128x1xf32>
    %c0_12 = arith.constant 0 : index
    %c0_13 = arith.constant 0 : index
    %28 = vector.load %arg9[%c0_12, %c0_13] : memref<128x1xf32, #tpu.memory_space<vmem>>, vector<128x1xf32>
    tpu.vector_store %arg9[%c0_12, %c0_13], %27 {strides = array<i32>} : memref<128x1xf32, #tpu.memory_space<vmem>>, vector<128x1xf32>,
    %c0_14 = arith.constant 0 : index
    %c0_15 = arith.constant 0 : index
    %29 = vector.load %arg10[%c0_14, %c0_15] : memref<128x128xf32, #tpu.memory_space<vmem>>, vector<128x128xf32>
    %30 = vector.broadcast %19 : vector<128x1xf32> to vector<128x128xf32>
    %31 = arith.mulf %30, %29 : vector<128x128xf32>
    %32 = arith.truncf %22 : vector<128x128xf32> to vector<128x128xbf16>
    %c0_16 = arith.constant 0 : index
    %c0_17 = arith.constant 0 : index
    %33 = vector.load %arg4[%c0_16, %c0_17] : memref<128x128xbf16, #tpu.memory_space<vmem>>, vector<128x128xbf16>
    %cst_18 = arith.constant dense<0.000000e+00> : vector<128x128xf32>
    %34 = tpu.matmul %32, %33, %cst_18 {dimension_numbers = #tpu.dot_dimension_numbers<[1], [0], [0], [1], [0, 0, 1, 1], [], []>} : vector<128x128xbf16>, vector<128x128xbf16>, vector<128x128xf32> -> vector<128x128xf32>
    %35 = arith.addf %31, %34 : vector<128x128xf32>
    %c0_19 = arith.constant 0 : index
    %c0_20 = arith.constant 0 : index
    %36 = vector.load %arg10[%c0_19, %c0_20] : memref<128x128xf32, #tpu.memory_space<vmem>>, vector<128x128xf32>
    tpu.vector_store %arg10[%c0_19, %c0_20], %35 {strides = array<i32>} : memref<128x128xf32, #tpu.memory_space<vmem>>, vector<128x128xf32>,
    %c0_21 = arith.constant 0 : index
    %c0_22 = arith.constant 0 : index
    %37 = vector.load %arg8[%c0_21, %c0_22] : memref<128x1xf32, #tpu.memory_space<vmem>>, vector<128x1xf32>
    tpu.vector_store %arg8[%c0_21, %c0_22], %17 {strides = array<i32>} : memref<128x1xf32, #tpu.memory_space<vmem>>, vector<128x1xf32>,
    %c1_i32 = arith.constant 1 : i32
    %38 = arith.cmpi eq, %arg1, %c1_i32 : i32
    %39 = arith.extui %38 : i1 to i32
    %c0_i32_23 = arith.constant 0 : i32
    %40 = arith.cmpi ne, %39, %c0_i32_23 : i32
    scf.if %40 {
      %c0_24 = arith.constant 0 : index
      %c0_25 = arith.constant 0 : index
      %41 = vector.load %arg9[%c0_24, %c0_25] : memref<128x1xf32, #tpu.memory_space<vmem>>, vector<128x1xf32>
      %cst_26 = arith.constant 1.000000e-30 : f32
      %42 = vector.broadcast %cst_26 : f32 to vector<128x1xf32>
      %43 = arith.maximumf %41, %42 : vector<128x1xf32>
      %44 = tpu.reciprocal %43 {approx = true} : vector<128x1xf32> -> vector<128x1xf32>
      %c0_27 = arith.constant 0 : index
      %c0_28 = arith.constant 0 : index
      %45 = vector.load %arg10[%c0_27, %c0_28] : memref<128x128xf32, #tpu.memory_space<vmem>>, vector<128x128xf32>
      %46 = vector.broadcast %44 : vector<128x1xf32> to vector<128x128xf32>
      %47 = arith.mulf %45, %46 : vector<128x128xf32>
      %c0_29 = arith.constant 0 : index
      %c0_30 = arith.constant 0 : index
      %48 = vector.load %arg6[%c0_29, %c0_30] : memref<1x128xf32, #tpu.memory_space<vmem>>, vector<1x128xf32>
      %49 = vector.broadcast %48 : vector<1x128xf32> to vector<128x128xf32>
      %50 = arith.addf %47, %49 : vector<128x128xf32>
      %51 = tpu.iota {dimensions = array<i32: 1>} : vector<128x128xi32>
      %c8_i32 = arith.constant 8 : i32
      %52 = vector.broadcast %c8_i32 : i32 to vector<128x128xi32>
      %53 = arith.cmpi slt, %51, %52 : vector<128x128xi32>
      %cst_31 = arith.constant -1.000000e+30 : f32
      %54 = vector.broadcast %cst_31 : f32 to vector<128x128xf32>
      %55 = arith.select %53, %50, %54 : vector<128x128xi1>, vector<128x128xf32>
      %cst_32 = arith.constant dense<0xFF800000> : vector<128xf32>
      %56 = vector.multi_reduction <maximumf>, %55, %cst_32 [1] : vector<128x128xf32> to vector<128xf32>
      %57 = vector.shape_cast %56 : vector<128xf32> to vector<128x1xf32>
      %58 = vector.broadcast %57 : vector<128x1xf32> to vector<128x128xf32>
      %59 = arith.subf %55, %58 : vector<128x128xf32>
      %60 = math.exp %59 : vector<128x128xf32>
      %cst_33 = arith.constant dense<0.000000e+00> : vector<128xf32>
      %61 = vector.multi_reduction <add>, %60, %cst_33 [1] : vector<128x128xf32> to vector<128xf32>
      %62 = vector.shape_cast %61 : vector<128xf32> to vector<128x1xf32>
      %63 = math.log %62 : vector<128x1xf32>
      %64 = vector.broadcast %63 : vector<128x1xf32> to vector<128x128xf32>
      %65 = arith.subf %59, %64 : vector<128x128xf32>
      %c0_34 = arith.constant 0 : index
      %c0_35 = arith.constant 0 : index
      %66 = vector.load %arg7[%c0_34, %c0_35] : memref<128x128xf32, #tpu.memory_space<vmem>>, vector<128x128xf32>
      tpu.vector_store %arg7[%c0_34, %c0_35], %65 {strides = array<i32>} : memref<128x128xf32, #tpu.memory_space<vmem>>, vector<128x128xf32>,
    } else {
    }
    return
  }
  func.func @transform_0(%arg0: i32, %arg1: i32) -> (i32, i32) {
    %c0_i32 = arith.constant 0 : i32
    %c0_i32_0 = arith.constant 0 : i32
    return %arg0, %c0_i32 : i32, i32
  }
  func.func @transform_1(%arg0: i32, %arg1: i32) -> (i32, i32) {
    %c0_i32 = arith.constant 0 : i32
    %c0_i32_0 = arith.constant 0 : i32
    return %c0_i32, %arg1 : i32, i32
  }
  func.func @transform_2(%arg0: i32, %arg1: i32) -> (i32, i32) {
    %c0_i32 = arith.constant 0 : i32
    %c0_i32_0 = arith.constant 0 : i32
    return %arg1, %c0_i32 : i32, i32
  }
  func.func @transform_3(%arg0: i32, %arg1: i32) -> (i32, i32) {
    %c0_i32 = arith.constant 0 : i32
    return %arg0, %arg1 : i32, i32
  }
  func.func @transform_4(%arg0: i32, %arg1: i32) -> (i32, i32) {
    %c0_i32 = arith.constant 0 : i32
    %c0_i32_0 = arith.constant 0 : i32
    %c0_i32_1 = arith.constant 0 : i32
    return %c0_i32, %c0_i32_0 : i32, i32
  }
  func.func @transform_5(%arg0: i32, %arg1: i32) -> (i32, i32) {
    %c0_i32 = arith.constant 0 : i32
    %c0_i32_0 = arith.constant 0 : i32
    return %arg0, %c0_i32 : i32, i32
  }
}

module attributes {stable_mosaic.version = 11 : i64} {
  func.func @gat_proj_kernel(%arg0: i32, %arg1: memref<128x128xf32, #tpu.memory_space<vmem>>, %arg2: memref<128x128xbf16, #tpu.memory_space<vmem>>, %arg3: memref<128x128xbf16, #tpu.memory_space<vmem>>, %arg4: memref<128x1xf32, #tpu.memory_space<vmem>>, %arg5: memref<128x1xf32, #tpu.memory_space<vmem>>) attributes {dimension_semantics = [#tpu.dimension_semantics<parallel>], iteration_bounds = array<i64: 2>, scalar_prefetch = 0 : i64, scratch_operands = 0 : i64, tpu.core_type = #tpu.core_type<tc>, window_params = [{transform_indices = @transform_0, window_bounds = array<i64: 128, 128>}, {pipeline_mode = #tpu.pipeline_mode<synchronous>, transform_indices = @transform_1, window_bounds = array<i64: 128, 128>}, {transform_indices = @transform_2, window_bounds = array<i64: 128, 128>}, {transform_indices = @transform_3, window_bounds = array<i64: 128, 1>}, {transform_indices = @transform_4, window_bounds = array<i64: 128, 1>}]} {
    %c0 = arith.constant 0 : index
    %c0_0 = arith.constant 0 : index
    %0 = vector.load %arg1[%c0, %c0_0] : memref<128x128xf32, #tpu.memory_space<vmem>>, vector<128x128xf32>
    %1 = arith.truncf %0 : vector<128x128xf32> to vector<128x128xbf16>
    %c0_1 = arith.constant 0 : index
    %c0_2 = arith.constant 0 : index
    %2 = vector.load %arg2[%c0_1, %c0_2] : memref<128x128xbf16, #tpu.memory_space<vmem>>, vector<128x128xbf16>
    %cst = arith.constant dense<0.000000e+00> : vector<128x128xf32>
    %3 = tpu.matmul %1, %2, %cst {dimension_numbers = #tpu.dot_dimension_numbers<[1], [0], [0], [1], [0, 0, 1, 1], [], []>} : vector<128x128xbf16>, vector<128x128xbf16>, vector<128x128xf32> -> vector<128x128xf32>
    %4 = tpu.iota {dimensions = array<i32: 1>} : vector<128x128xi32>
    %c8_i32 = arith.constant 8 : i32
    %5 = vector.broadcast %c8_i32 : i32 to vector<128x128xi32>
    %6 = arith.cmpi slt, %4, %5 : vector<128x128xi32>
    %cst_3 = arith.constant 0.000000e+00 : f32
    %7 = vector.broadcast %cst_3 : f32 to vector<128x128xf32>
    %8 = arith.select %6, %3, %7 : vector<128x128xi1>, vector<128x128xf32>
    %9 = arith.truncf %8 : vector<128x128xf32> to vector<128x128xbf16>
    %c0_4 = arith.constant 0 : index
    %c0_5 = arith.constant 0 : index
    %10 = vector.load %arg3[%c0_4, %c0_5] : memref<128x128xbf16, #tpu.memory_space<vmem>>, vector<128x128xbf16>
    tpu.vector_store %arg3[%c0_4, %c0_5], %9 {strides = array<i32>} : memref<128x128xbf16, #tpu.memory_space<vmem>>, vector<128x128xbf16>,
    %11 = vector.extract_strided_slice %3 {offsets = [0, 8], sizes = [128, 1], strides = [1, 1]} : vector<128x128xf32> to vector<128x1xf32>
    %c0_6 = arith.constant 0 : index
    %c0_7 = arith.constant 0 : index
    %12 = vector.load %arg4[%c0_6, %c0_7] : memref<128x1xf32, #tpu.memory_space<vmem>>, vector<128x1xf32>
    tpu.vector_store %arg4[%c0_6, %c0_7], %11 {strides = array<i32>} : memref<128x1xf32, #tpu.memory_space<vmem>>, vector<128x1xf32>,
    %13 = vector.extract_strided_slice %3 {offsets = [0, 9], sizes = [128, 1], strides = [1, 1]} : vector<128x128xf32> to vector<128x1xf32>
    %c0_8 = arith.constant 0 : index
    %c0_9 = arith.constant 0 : index
    %14 = vector.load %arg5[%c0_8, %c0_9] : memref<128x1xf32, #tpu.memory_space<vmem>>, vector<128x1xf32>
    tpu.vector_store %arg5[%c0_8, %c0_9], %13 {strides = array<i32>} : memref<128x1xf32, #tpu.memory_space<vmem>>, vector<128x1xf32>,
    return
  }
  func.func @transform_0(%arg0: i32) -> (i32, i32) {
    %c0_i32 = arith.constant 0 : i32
    %c0_i32_0 = arith.constant 0 : i32
    return %arg0, %c0_i32 : i32, i32
  }
  func.func @transform_1(%arg0: i32) -> (i32, i32) {
    %c0_i32 = arith.constant 0 : i32
    %c0_i32_0 = arith.constant 0 : i32
    %c0_i32_1 = arith.constant 0 : i32
    return %c0_i32, %c0_i32_0 : i32, i32
  }
  func.func @transform_2(%arg0: i32) -> (i32, i32) {
    %c0_i32 = arith.constant 0 : i32
    %c0_i32_0 = arith.constant 0 : i32
    return %arg0, %c0_i32 : i32, i32
  }
  func.func @transform_3(%arg0: i32) -> (i32, i32) {
    %c0_i32 = arith.constant 0 : i32
    %c0_i32_0 = arith.constant 0 : i32
    return %arg0, %c0_i32 : i32, i32
  }
  func.func @transform_4(%arg0: i32) -> (i32, i32) {
    %c0_i32 = arith.constant 0 : i32
    %c0_i32_0 = arith.constant 0 : i32
    return %arg0, %c0_i32 : i32, i32
  }
}

</mosaic_0001>

<llo_original>
// kernel: gat_forward.6
$region0: #{gat_forward.6}
  #allocation0 [shape = 'u32[]', space=smem, size = 0x4, offset = 0x4, fixed_abs, tag = 'smem constant byte address 0x4 - core index']
  #allocation1 [shape = 'u32[72,128]{1,0:T(1,128)}', space=vmem, size = 0x9000, scoped, tag = 'internal scratch']
  %s0 = inlined_call_operand.vmem [shape: f32[256,128], index: 0, kind: input, shape index: {}]
  %s1 = inlined_call_operand.vmem [shape: bf16[128,128], index: 1, kind: input, shape index: {}]
  %s2 = inlined_call_operand.vmem [shape: bf16[256,128], index: 2, kind: output, shape index: {0}]
  %s3 = inlined_call_operand.vmem [shape: f32[256,1], index: 3, kind: output, shape index: {1}]
  %s4 = inlined_call_operand.vmem [shape: f32[256,1], index: 4, kind: output, shape index: {2}]
  %5 = xla_tuple %s2, %s3, %s4
  %s6 = sld [smem:[#allocation0]]
  $region57: #{gat_forward.6} parent=0
    _
  %s8 = ssub.s32 1, %s6
  %s9 = scalar_select 0, %s8, %s6
  loop: start=0, step=1, limit=4
  $region2: #{gat_forward.6} parent=0 // loop_pre_header
    _
  $region3: #{gat_forward.6} parent=0 // loop_header
    %s11 = sphi 0, %s15
    %p12 = scmp.ge.s32.totalorder %s11, 4
    %s21 = sphi 0, %s23
    %s24 = sphi 0, %s21
    %s25 = sphi 0, %s24
    %s41 = sphi 0, %s25
    %s45 = sphi 0, %s45
    %s47 = sphi 0, %s45
    %s48 = sphi 0, %s47
    %s62 = sphi 0, %s48
    %s68 = sphi 0, %s70
    %s71 = sphi 0, %s68
    %s72 = sphi 0, %s71
    %s88 = sphi 0, %s72
    %s94 = sphi 0, %s96
    %s97 = sphi 0, %s94
    %s98 = sphi 0, %s97
    %s114 = sphi 0, %s98
    %s120 = sphi 0, %s122
    %s123 = sphi 0, %s120
    %s124 = sphi 0, %s123
    %s140 = sphi 0, %s124
  $region4: #{gat_forward.6} parent=0 // loop_header_branch
    %14 = sbr.rel (%p12) target = $region8
  $region5: #{gat_forward.6} parent=0 // loop_body
    %s16 = ssub.s32 %s11, 1
    %s17 = ssub.s32 %s11, 2
    %s18 = sadd.s32 %s11, 1
    %s19 = ssub.s32 %s11, %s18
    %p20 = scmp.eq.s32.totalorder %s19, 0
    %s22 = sadd.s32 %s21, 1
    %s23 = scalar_select %p20, %s21, %s22
    %p26 = pneg %p20
    %p27 = scmp.eq.s32.totalorder %s11, 1
    %p28 = por %p26, %p27
    %p29 = scmp.ne.s32.totalorder %s21, %s24
    %p30 = scmp.eq.s32.totalorder %s11, 0
    %p31 = por %p29, %p30
    %p32 = scmp.ne.s32.totalorder %s21, %s24
    %p33 = scmp.eq.s32.totalorder %s16, 1
    %p34 = por %p32, %p33
    %p35 = scmp.ne.s32.totalorder %s24, %s25
    %p36 = scmp.eq.s32.totalorder %s16, 0
    %p37 = por %p35, %p36
    %p38 = scmp.ne.s32.totalorder %s24, %s25
    %p39 = scmp.eq.s32.totalorder %s17, 1
    %p40 = por %p38, %p39
    %p42 = scmp.ne.s32.totalorder %s25, %s41
    %p43 = scmp.eq.s32.totalorder %s17, 0
    %p44 = por %p42, %p43
    %s46 = sadd.s32 %s45, 1
    %p49 = scmp.eq.s32.totalorder %s11, 1
    %p50 = scmp.ne.s32.totalorder %s45, %s47
    %p51 = scmp.eq.s32.totalorder %s11, 0
    %p52 = por %p50, %p51
    %p53 = scmp.ne.s32.totalorder %s45, %s47
    %p54 = scmp.eq.s32.totalorder %s16, 1
    %p55 = por %p53, %p54
    %p56 = scmp.ne.s32.totalorder %s47, %s48
    %p57 = scmp.eq.s32.totalorder %s16, 0
    %p58 = por %p56, %p57
    %p59 = scmp.ne.s32.totalorder %s47, %s48
    %p60 = scmp.eq.s32.totalorder %s17, 1
    %p61 = por %p59, %p60
    %p63 = scmp.ne.s32.totalorder %s48, %s62
    %p64 = scmp.eq.s32.totalorder %s17, 0
    %p65 = por %p63, %p64
    %s66 = ssub.s32 %s11, %s18
    %p67 = scmp.eq.s32.totalorder %s66, 0
    %s69 = sadd.s32 %s68, 1
    %s70 = scalar_select %p67, %s68, %s69
    %p73 = pneg %p67
    %p74 = scmp.eq.s32.totalorder %s11, 1
    %p75 = por %p73, %p74
    %p76 = scmp.ne.s32.totalorder %s68, %s71
    %p77 = scmp.eq.s32.totalorder %s11, 0
    %p78 = por %p76, %p77
    %p79 = scmp.ne.s32.totalorder %s68, %s71
    %p80 = scmp.eq.s32.totalorder %s16, 1
    %p81 = por %p79, %p80
    %p82 = scmp.ne.s32.totalorder %s71, %s72
    %p83 = scmp.eq.s32.totalorder %s16, 0
    %p84 = por %p82, %p83
    %p85 = scmp.ne.s32.totalorder %s71, %s72
    %p86 = scmp.eq.s32.totalorder %s17, 1
    %p87 = por %p85, %p86
    %p89 = scmp.ne.s32.totalorder %s72, %s88
    %p90 = scmp.eq.s32.totalorder %s17, 0
    %p91 = por %p89, %p90
    %s92 = ssub.s32 %s11, %s18
    %p93 = scmp.eq.s32.totalorder %s92, 0
    %s95 = sadd.s32 %s94, 1
    %s96 = scalar_select %p93, %s94, %s95
    %p99 = pneg %p93
    %p100 = scmp.eq.s32.totalorder %s11, 1
    %p101 = por %p99, %p100
    %p102 = scmp.ne.s32.totalorder %s94, %s97
    %p103 = scmp.eq.s32.totalorder %s11, 0
    %p104 = por %p102, %p103
    %p105 = scmp.ne.s32.totalorder %s94, %s97
    %p106 = scmp.eq.s32.totalorder %s16, 1
    %p107 = por %p105, %p106
    %p108 = scmp.ne.s32.totalorder %s97, %s98
    %p109 = scmp.eq.s32.totalorder %s16, 0
    %p110 = por %p108, %p109
    %p111 = scmp.ne.s32.totalorder %s97, %s98
    %p112 = scmp.eq.s32.totalorder %s17, 1
    %p113 = por %p111, %p112
    %p115 = scmp.ne.s32.totalorder %s98, %s114
    %p116 = scmp.eq.s32.totalorder %s17, 0
    %p117 = por %p115, %p116
    %s118 = ssub.s32 %s11, %s18
    %p119 = scmp.eq.s32.totalorder %s118, 0
    %s121 = sadd.s32 %s120, 1
    %s122 = scalar_select %p119, %s120, %s121
    %p125 = pneg %p119
    %p126 = scmp.eq.s32.totalorder %s11, 1
    %p127 = por %p125, %p126
    %p128 = scmp.ne.s32.totalorder %s120, %s123
    %p129 = scmp.eq.s32.totalorder %s11, 0
    %p130 = por %p128, %p129
    %p131 = scmp.ne.s32.totalorder %s120, %s123
    %p132 = scmp.eq.s32.totalorder %s16, 1
    %p133 = por %p131, %p132
    %p134 = scmp.ne.s32.totalorder %s123, %s124
    %p135 = scmp.eq.s32.totalorder %s16, 0
    %p136 = por %p134, %p135
    %p137 = scmp.ne.s32.totalorder %s123, %s124
    %p138 = scmp.eq.s32.totalorder %s17, 1
    %p139 = por %p137, %p138
    %p141 = scmp.ne.s32.totalorder %s124, %s140
    %p142 = scmp.eq.s32.totalorder %s17, 0
    %p143 = por %p141, %p142
    %p144 = scmp.le.s32.totalorder 1, %s11
    %p145 = scmp.lt.s32.totalorder %s11, 3
    %p146 = pnand %p144, %p145
    %p147 = pneg %p146
    // Predicated region
    $region9: #{gat_forward.6} parent=5 // pred_check
      _
    $region10: #{gat_forward.6} parent=5 // pred_check_branch
      %149 = sbr.rel (%p146) target = $region12
    $region11: #{gat_forward.6} parent=5 // pred_region
      %s150 = ssub.s32 %s11, 1
      // Predicated region
      $region13: #{gat_forward.6} parent=11 // pred_check
        %p151 = pneg %p58
      $region14: #{gat_forward.6} parent=11 // pred_check_branch
        %153 = sbr.rel (%p151) target = $region16
      $region15: #{gat_forward.6} parent=11 // pred_region
        _
      $region16: #{gat_forward.6} parent=11 // pred_fallthru
        _
    $region12: #{gat_forward.6} parent=5 // pred_fallthru
      _
    %p154 = scmp.lt.s32.totalorder %s11, 2
    // Predicated region
    $region17: #{gat_forward.6} parent=5 // pred_check
      %p155 = pneg %p154
    $region18: #{gat_forward.6} parent=5 // pred_check_branch
      %157 = sbr.rel (%p155) target = $region20
    $region19: #{gat_forward.6} parent=5 // pred_region
      // Predicated region
      $region21: #{gat_forward.6} parent=19 // pred_check
        %p158 = pneg %p31
      $region22: #{gat_forward.6} parent=19 // pred_check_branch
        %160 = sbr.rel (%p158) target = $region24
      $region23: #{gat_forward.6} parent=19 // pred_region
        %s161 = smul.u32 16, %s11
        %p162 = scmp.lt.s32.totalorder %s161, 31
        %s163 = scalar_select %p162, %s161, 31
        %s164 = smul.addr %s163, 8
        %s165 = scalar_lea.vmem %s0, %s164
        %s166 = smul.u32 16, %s11
      $region24: #{gat_forward.6} parent=19 // pred_fallthru
        _
    $region20: #{gat_forward.6} parent=5 // pred_fallthru
      _
    %p167 = scmp.le.s32.totalorder 1, %s11
    %p168 = scmp.lt.s32.totalorder %s11, 3
    %p169 = pnand %p167, %p168
    %p170 = pneg %p169
    // Predicated region
    $region25: #{gat_forward.6} parent=5 // pred_check
      _
    $region26: #{gat_forward.6} parent=5 // pred_check_branch
      %172 = sbr.rel (%p169) target = $region28
    $region27: #{gat_forward.6} parent=5 // pred_region
      %s173 = ssub.s32 %s11, 1
      %s174 = smul.u32 16, %s16
      %p175 = scmp.lt.s32.totalorder %s174, 31
      %s176 = scalar_select %p175, %s174, 31
      %s177 = smul.addr %s176, 8
      %s178 = scalar_lea.vmem %s0, %s177
      %p179 = pneg %p37
      %p180 = pneg %p34
      %p181 = pneg %p58
      %p182 = pneg %p55
      %p183 = pneg %p84
      %p184 = pneg %p81
      %s185 = smul.u32 16, %s16
      %p186 = scmp.lt.s32.totalorder %s185, 31
      %s187 = scalar_select %p186, %s185, 31
      %s188 = smul.addr %s187, 4
      %s189 = scalar_lea.vmem %s2, %s188
      %p190 = pneg %p110
      %p191 = pneg %p107
      %s192 = smul.u32 16, %s16
      %p193 = scmp.lt.s32.totalorder %s192, 31
      %s194 = scalar_select %p193, %s192, 31
      %s195 = smul.addr %s194, 8
      %s196 = scalar_lea.vmem %s3, %s195
      %p197 = pneg %p136
      %p198 = pneg %p133
      %s199 = smul.u32 16, %s16
      %p200 = scmp.lt.s32.totalorder %s199, 31
      %s201 = scalar_select %p200, %s199, 31
      %s202 = smul.addr %s201, 8
      %s203 = scalar_lea.vmem %s4, %s202
      %s204 = smul.u32 16, %s16
      %p205 = scmp.lt.s32.totalorder %s204, 31
      %s206 = scalar_select %p205, %s204, 31
      %s207 = smul.addr %s206, 8
      %s208 = scalar_lea.vmem %s0, %s207
      %s209 = smul.u32 16, %s16
      %s210 = smul.u32 16, %s16
      %p211 = scmp.lt.s32.totalorder %s210, 31
      %s212 = scalar_select %p211, %s210, 31
      %s213 = smul.addr %s212, 4
      %s214 = scalar_lea.vmem %s2, %s213
      %s215 = smul.u32 16, %s16
      %s216 = smul.u32 16, %s16
      %p217 = scmp.lt.s32.totalorder %s216, 31
      %s218 = scalar_select %p217, %s216, 31
      %s219 = smul.addr %s218, 8
      %s220 = scalar_lea.vmem %s3, %s219
      %s221 = smul.u32 16, %s16
      %s222 = smul.u32 16, %s16
      %p223 = scmp.lt.s32.totalorder %s222, 31
      %s224 = scalar_select %p223, %s222, 31
      %s225 = smul.addr %s224, 8
      %s226 = scalar_lea.vmem %s4, %s225
      %s227 = smul.u32 16, %s16
      %v228 = vld [vmem:[%s208] sm:$0xff]
      %v229 = vld [vmem:[%s208 + $0x8] sm:$0xff]
      %v230 = vld [vmem:[%s208 + $0x10] sm:$0xff]
      %v231 = vld [vmem:[%s208 + $0x18] sm:$0xff]
      %v232 = vld [vmem:[%s208 + $0x20] sm:$0xff]
      %v233 = vld [vmem:[%s208 + $0x28] sm:$0xff]
      %v234 = vld [vmem:[%s208 + $0x30] sm:$0xff]
      %v235 = vld [vmem:[%s208 + $0x38] sm:$0xff]
      %v236 = vld [vmem:[%s208 + $0x40] sm:$0xff]
      %v237 = vld [vmem:[%s208 + $0x48] sm:$0xff]
      %v238 = vld [vmem:[%s208 + $0x50] sm:$0xff]
      %v239 = vld [vmem:[%s208 + $0x58] sm:$0xff]
      %v240 = vld [vmem:[%s208 + $0x60] sm:$0xff]
      %v241 = vld [vmem:[%s208 + $0x68] sm:$0xff]
      %v242 = vld [vmem:[%s208 + $0x70] sm:$0xff]
      %v243 = vld [vmem:[%s208 + $0x78] sm:$0xff]
      %v244 = vpack.c.bf16 %v229, %v228
      %v245 = vpack.c.bf16 %v231, %v230
      %v246 = vpack.c.bf16 %v233, %v232
      %v247 = vpack.c.bf16 %v235, %v234
      %v248 = vpack.c.bf16 %v237, %v236
      %v249 = vpack.c.bf16 %v239, %v238
      %v250 = vpack.c.bf16 %v241, %v240
      %v251 = vpack.c.bf16 %v243, %v242
      %v252 = vld [vmem:[%s1] sm:$0xf]
      %v253 = vld [vmem:[%s1 + $0x4] sm:$0xf]
      %v254 = vld [vmem:[%s1 + $0x8] sm:$0xf]
      %v255 = vld [vmem:[%s1 + $0xc] sm:$0xf]
      %v256 = vld [vmem:[%s1 + $0x10] sm:$0xf]
      %v257 = vld [vmem:[%s1 + $0x14] sm:$0xf]
      %v258 = vld [vmem:[%s1 + $0x18] sm:$0xf]
      %v259 = vld [vmem:[%s1 + $0x1c] sm:$0xf]
      %v260 = vld [vmem:[%s1 + $0x20] sm:$0xf]
      %v261 = vld [vmem:[%s1 + $0x24] sm:$0xf]
      %v262 = vld [vmem:[%s1 + $0x28] sm:$0xf]
      %v263 = vld [vmem:[%s1 + $0x2c] sm:$0xf]
      %v264 = vld [vmem:[%s1 + $0x30] sm:$0xf]
      %v265 = vld [vmem:[%s1 + $0x34] sm:$0xf]
      %v266 = vld [vmem:[%s1 + $0x38] sm:$0xf]
      %v267 = vld [vmem:[%s1 + $0x3c] sm:$0xf]
      %v284 = vunpack.c.l.b16 %v252
      %v285 = vunpack.c.l.b16 %v253
      %v286 = vunpack.c.l.b16 %v254
      %v287 = vunpack.c.l.b16 %v255
      %v288 = vunpack.c.l.b16 %v256
      %v289 = vunpack.c.l.b16 %v257
      %v290 = vunpack.c.l.b16 %v258
      %v291 = vunpack.c.l.b16 %v259
      %v292 = vunpack.c.l.b16 %v260
      %v293 = vunpack.c.l.b16 %v261
      %v294 = vunpack.c.l.b16 %v262
      %v295 = vunpack.c.l.b16 %v263
      %v296 = vunpack.c.l.b16 %v264
      %v297 = vunpack.c.l.b16 %v265
      %v298 = vunpack.c.l.b16 %v266
      %v299 = vunpack.c.l.b16 %v267
      %v300 = vpack.c.b16 %v285, %v284
      %v301 = vpack.c.b16 %v287, %v286
      %v302 = vpack.c.b16 %v289, %v288
      %v303 = vpack.c.b16 %v291, %v290
      %v304 = vpack.c.b16 %v293, %v292
      %v305 = vpack.c.b16 %v295, %v294
      %v306 = vpack.c.b16 %v297, %v296
      %v307 = vpack.c.b16 %v299, %v298
      %316 = vmatpush.bf16.msra.mxu0 %v307
      %317 = vmatpush.bf16.msra.mxu0 %v306
      %318 = vmatpush.bf16.msra.mxu0 %v305
      %319 = vmatpush.bf16.msra.mxu0 %v304
      %320 = vmatpush.bf16.msra.mxu0 %v303
      %321 = vmatpush.bf16.msra.mxu0 %v302
      %322 = vmatpush.bf16.msra.mxu0 %v301
      %323 = vmatpush.bf16.msra.mxu0 %v300
      %324 = vmatmul.bf16.gmra.mxu0 %v244
      %v325 = vpop.f32.mrf.mxu0
      %v326 = vadd.f32 0.0, %v325
      %v327 = vpop.f32.mrf.mxu0
      %v328 = vadd.f32 0.0, %v327
      %329 = vmatmul.bf16.gmra.mxu0 %v245
      %v330 = vpop.f32.mrf.mxu0
      %v331 = vadd.f32 0.0, %v330
      %v332 = vpop.f32.mrf.mxu0
      %v333 = vadd.f32 0.0, %v332
      %334 = vmatmul.bf16.gmra.mxu0 %v246
      %v335 = vpop.f32.mrf.mxu0
      %v336 = vadd.f32 0.0, %v335
      %v337 = vpop.f32.mrf.mxu0
      %v338 = vadd.f32 0.0, %v337
      %339 = vmatmul.bf16.gmra.mxu0 %v247
      %v340 = vpop.f32.mrf.mxu0
      %v341 = vadd.f32 0.0, %v340
      %v342 = vpop.f32.mrf.mxu0
      %v343 = vadd.f32 0.0, %v342
      %344 = vmatmul.bf16.gmra.mxu0 %v248
      %v345 = vpop.f32.mrf.mxu0
      %v346 = vadd.f32 0.0, %v345
      %v347 = vpop.f32.mrf.mxu0
      %v348 = vadd.f32 0.0, %v347
      %349 = vmatmul.bf16.gmra.mxu0 %v249
      %v350 = vpop.f32.mrf.mxu0
      %v351 = vadd.f32 0.0, %v350
      %v352 = vpop.f32.mrf.mxu0
      %v353 = vadd.f32 0.0, %v352
      %354 = vmatmul.bf16.gmra.mxu0 %v250
      %v355 = vpop.f32.mrf.mxu0
      %v356 = vadd.f32 0.0, %v355
      %v357 = vpop.f32.mrf.mxu0
      %v358 = vadd.f32 0.0, %v357
      %359 = vmatmul.bf16.gmra.mxu0 %v251
      %v360 = vpop.f32.mrf.mxu0
      %v361 = vadd.f32 0.0, %v360
      %v362 = vpop.f32.mrf.mxu0
      %v363 = vadd.f32 0.0, %v362
      %364 = vdwg.mxu0
      %v365 = vlaneseq
      %v366 = vand.u32 %v365, 127
      %vm367 = vcmp.lt.s32.totalorder %v366, 32
      %v368 = vsel %vm367, %v326, 0.0
      %v369 = vsel %vm367, %v328, 0.0
      %v370 = vsel %vm367, %v331, 0.0
      %v371 = vsel %vm367, %v333, 0.0
      %v372 = vsel %vm367, %v336, 0.0
      %v373 = vsel %vm367, %v338, 0.0
      %v374 = vsel %vm367, %v341, 0.0
      %v375 = vsel %vm367, %v343, 0.0
      %v376 = vsel %vm367, %v346, 0.0
      %v377 = vsel %vm367, %v348, 0.0
      %v378 = vsel %vm367, %v351, 0.0
      %v379 = vsel %vm367, %v353, 0.0
      %v380 = vsel %vm367, %v356, 0.0
      %v381 = vsel %vm367, %v358, 0.0
      %v382 = vsel %vm367, %v361, 0.0
      %v383 = vsel %vm367, %v363, 0.0
      %v384 = vpack.c.bf16 %v368, %v368
      %v385 = vpack.c.bf16 %v369, %v369
      %v386 = vpack.c.bf16 %v370, %v370
      %v387 = vpack.c.bf16 %v371, %v371
      %v388 = vpack.c.bf16 %v372, %v372
      %v389 = vpack.c.bf16 %v373, %v373
      %v390 = vpack.c.bf16 %v374, %v374
      %v391 = vpack.c.bf16 %v375, %v375
      %v392 = vpack.c.bf16 %v376, %v376
      %v393 = vpack.c.bf16 %v377, %v377
      %v394 = vpack.c.bf16 %v378, %v378
      %v395 = vpack.c.bf16 %v379, %v379
      %v396 = vpack.c.bf16 %v380, %v380
      %v397 = vpack.c.bf16 %v381, %v381
      %v398 = vpack.c.bf16 %v382, %v382
      %v399 = vpack.c.bf16 %v383, %v383
      %400 = vst [vmem:[%s214] sm:$0xf] %v384
      %401 = vst [vmem:[%s214 + $0x4] sm:$0xf] %v385
      %402 = vst [vmem:[%s214 + $0x8] sm:$0xf] %v386
      %403 = vst [vmem:[%s214 + $0xc] sm:$0xf] %v387
      %404 = vst [vmem:[%s214 + $0x10] sm:$0xf] %v388
      %405 = vst [vmem:[%s214 + $0x14] sm:$0xf] %v389
      %406 = vst [vmem:[%s214 + $0x18] sm:$0xf] %v390
      %407 = vst [vmem:[%s214 + $0x1c] sm:$0xf] %v391
      %408 = vst [vmem:[%s214 + $0x20] sm:$0xf] %v392
      %409 = vst [vmem:[%s214 + $0x24] sm:$0xf] %v393
      %410 = vst [vmem:[%s214 + $0x28] sm:$0xf] %v394
      %411 = vst [vmem:[%s214 + $0x2c] sm:$0xf] %v395
      %412 = vst [vmem:[%s214 + $0x30] sm:$0xf] %v396
      %413 = vst [vmem:[%s214 + $0x34] sm:$0xf] %v397
      %414 = vst [vmem:[%s214 + $0x38] sm:$0xf] %v398
      %415 = vst [vmem:[%s214 + $0x3c] sm:$0xf] %v399
      %432 = vrot.lane.b32.xlu0 %v326, 96
      %v433 = vpop.permute.xlu0 %432
      %434 = vrot.lane.b32.xlu0 %v328, 96
      %v435 = vpop.permute.xlu0 %434
      %436 = vrot.lane.b32.xlu0 %v331, 96
      %v437 = vpop.permute.xlu0 %436
      %438 = vrot.lane.b32.xlu0 %v333, 96
      %v439 = vpop.permute.xlu0 %438
      %440 = vrot.lane.b32.xlu0 %v336, 96
      %v441 = vpop.permute.xlu0 %440
      %442 = vrot.lane.b32.xlu0 %v338, 96
      %v443 = vpop.permute.xlu0 %442
      %444 = vrot.lane.b32.xlu0 %v341, 96
      %v445 = vpop.permute.xlu0 %444
      %446 = vrot.lane.b32.xlu0 %v343, 96
      %v447 = vpop.permute.xlu0 %446
      %448 = vrot.lane.b32.xlu0 %v346, 96
      %v449 = vpop.permute.xlu0 %448
      %450 = vrot.lane.b32.xlu0 %v348, 96
      %v451 = vpop.permute.xlu0 %450
      %452 = vrot.lane.b32.xlu0 %v351, 96
      %v453 = vpop.permute.xlu0 %452
      %454 = vrot.lane.b32.xlu0 %v353, 96
      %v455 = vpop.permute.xlu0 %454
      %456 = vrot.lane.b32.xlu0 %v356, 96
      %v457 = vpop.permute.xlu0 %456
      %458 = vrot.lane.b32.xlu0 %v358, 96
      %v459 = vpop.permute.xlu0 %458
      %460 = vrot.lane.b32.xlu0 %v361, 96
      %v461 = vpop.permute.xlu0 %460
      %462 = vrot.lane.b32.xlu0 %v363, 96
      %v463 = vpop.permute.xlu0 %462
      %vm480 = vcmask 7168
      %481 = vst.msk [vmem:[%s220] sm:$0xff] %vm480, %v433
      %482 = vst.msk [vmem:[%s220 + $0x8] sm:$0xff] %vm480, %v435
      %483 = vst.msk [vmem:[%s220 + $0x10] sm:$0xff] %vm480, %v437
      %484 = vst.msk [vmem:[%s220 + $0x18] sm:$0xff] %vm480, %v439
      %485 = vst.msk [vmem:[%s220 + $0x20] sm:$0xff] %vm480, %v441
      %486 = vst.msk [vmem:[%s220 + $0x28] sm:$0xff] %vm480, %v443
      %487 = vst.msk [vmem:[%s220 + $0x30] sm:$0xff] %vm480, %v445
      %488 = vst.msk [vmem:[%s220 + $0x38] sm:$0xff] %vm480, %v447
      %489 = vst.msk [vmem:[%s220 + $0x40] sm:$0xff] %vm480, %v449
      %490 = vst.msk [vmem:[%s220 + $0x48] sm:$0xff] %vm480, %v451
      %491 = vst.msk [vmem:[%s220 + $0x50] sm:$0xff] %vm480, %v453
      %492 = vst.msk [vmem:[%s220 + $0x58] sm:$0xff] %vm480, %v455
      %493 = vst.msk [vmem:[%s220 + $0x60] sm:$0xff] %vm480, %v457
      %494 = vst.msk [vmem:[%s220 + $0x68] sm:$0xff] %vm480, %v459
      %495 = vst.msk [vmem:[%s220 + $0x70] sm:$0xff] %vm480, %v461
      %496 = vst.msk [vmem:[%s220 + $0x78] sm:$0xff] %vm480, %v463
      %497 = vrot.lane.b32.xlu0 %v326, 95
      %v498 = vpop.permute.xlu0 %497
      %499 = vrot.lane.b32.xlu0 %v328, 95
      %v500 = vpop.permute.xlu0 %499
      %501 = vrot.lane.b32.xlu0 %v331, 95
      %v502 = vpop.permute.xlu0 %501
      %503 = vrot.lane.b32.xlu0 %v333, 95
      %v504 = vpop.permute.xlu0 %503
      %505 = vrot.lane.b32.xlu0 %v336, 95
      %v506 = vpop.permute.xlu0 %505
      %507 = vrot.lane.b32.xlu0 %v338, 95
      %v508 = vpop.permute.xlu0 %507
      %509 = vrot.lane.b32.xlu0 %v341, 95
      %v510 = vpop.permute.xlu0 %509
      %511 = vrot.lane.b32.xlu0 %v343, 95
      %v512 = vpop.permute.xlu0 %511
      %513 = vrot.lane.b32.xlu0 %v346, 95
      %v514 = vpop.permute.xlu0 %513
      %515 = vrot.lane.b32.xlu0 %v348, 95
      %v516 = vpop.permute.xlu0 %515
      %517 = vrot.lane.b32.xlu0 %v351, 95
      %v518 = vpop.permute.xlu0 %517
      %519 = vrot.lane.b32.xlu0 %v353, 95
      %v520 = vpop.permute.xlu0 %519
      %521 = vrot.lane.b32.xlu0 %v356, 95
      %v522 = vpop.permute.xlu0 %521
      %523 = vrot.lane.b32.xlu0 %v358, 95
      %v524 = vpop.permute.xlu0 %523
      %525 = vrot.lane.b32.xlu0 %v361, 95
      %v526 = vpop.permute.xlu0 %525
      %527 = vrot.lane.b32.xlu0 %v363, 95
      %v528 = vpop.permute.xlu0 %527
      %545 = vst.msk [vmem:[%s226] sm:$0xff] %vm480, %v498
      %546 = vst.msk [vmem:[%s226 + $0x8] sm:$0xff] %vm480, %v500
      %547 = vst.msk [vmem:[%s226 + $0x10] sm:$0xff] %vm480, %v502
      %548 = vst.msk [vmem:[%s226 + $0x18] sm:$0xff] %vm480, %v504
      %549 = vst.msk [vmem:[%s226 + $0x20] sm:$0xff] %vm480, %v506
      %550 = vst.msk [vmem:[%s226 + $0x28] sm:$0xff] %vm480, %v508
      %551 = vst.msk [vmem:[%s226 + $0x30] sm:$0xff] %vm480, %v510
      %552 = vst.msk [vmem:[%s226 + $0x38] sm:$0xff] %vm480, %v512
      %553 = vst.msk [vmem:[%s226 + $0x40] sm:$0xff] %vm480, %v514
      %554 = vst.msk [vmem:[%s226 + $0x48] sm:$0xff] %vm480, %v516
      %555 = vst.msk [vmem:[%s226 + $0x50] sm:$0xff] %vm480, %v518
      %556 = vst.msk [vmem:[%s226 + $0x58] sm:$0xff] %vm480, %v520
      %557 = vst.msk [vmem:[%s226 + $0x60] sm:$0xff] %vm480, %v522
      %558 = vst.msk [vmem:[%s226 + $0x68] sm:$0xff] %vm480, %v524
      %559 = vst.msk [vmem:[%s226 + $0x70] sm:$0xff] %vm480, %v526
      %560 = vst.msk [vmem:[%s226 + $0x78] sm:$0xff] %vm480, %v528
      %s561 = smul.u32 16, %s16
      %p562 = scmp.lt.s32.totalorder %s561, 31
      %s563 = scalar_select %p562, %s561, 31
      %s564 = smul.addr %s563, 4
      %s565 = scalar_lea.vmem %s2, %s564
      %s566 = smul.u32 16, %s16
      %p567 = scmp.lt.s32.totalorder %s566, 31
      %s568 = scalar_select %p567, %s566, 31
      %s569 = smul.addr %s568, 8
      %s570 = scalar_lea.vmem %s3, %s569
      %s571 = smul.u32 16, %s16
      %p572 = scmp.lt.s32.totalorder %s571, 31
      %s573 = scalar_select %p572, %s571, 31
      %s574 = smul.addr %s573, 8
      %s575 = scalar_lea.vmem %s4, %s574
      // Predicated region
      $region29: #{gat_forward.6} parent=27 // pred_check
        %p576 = pneg %p81
      $region30: #{gat_forward.6} parent=27 // pred_check_branch
        %578 = sbr.rel (%p576) target = $region32
      $region31: #{gat_forward.6} parent=27 // pred_region
        %s579 = smul.u32 16, %s16
      $region32: #{gat_forward.6} parent=27 // pred_fallthru
        _
      // Predicated region
      $region33: #{gat_forward.6} parent=27 // pred_check
        %p580 = pneg %p107
      $region34: #{gat_forward.6} parent=27 // pred_check_branch
        %582 = sbr.rel (%p580) target = $region36
      $region35: #{gat_forward.6} parent=27 // pred_region
        %s583 = smul.u32 16, %s16
      $region36: #{gat_forward.6} parent=27 // pred_fallthru
        _
      // Predicated region
      $region37: #{gat_forward.6} parent=27 // pred_check
        %p584 = pneg %p133
      $region38: #{gat_forward.6} parent=27 // pred_check_branch
        %586 = sbr.rel (%p584) target = $region40
      $region39: #{gat_forward.6} parent=27 // pred_region
        %s587 = smul.u32 16, %s16
      $region40: #{gat_forward.6} parent=27 // pred_fallthru
        _
    $region28: #{gat_forward.6} parent=5 // pred_fallthru
      _
    %p588 = scmp.le.s32.totalorder 2, %s11
    // Predicated region
    $region41: #{gat_forward.6} parent=5 // pred_check
      %p589 = pneg %p588
    $region42: #{gat_forward.6} parent=5 // pred_check_branch
      %591 = sbr.rel (%p589) target = $region44
    $region43: #{gat_forward.6} parent=5 // pred_region
      %s592 = ssub.s32 %s11, 2
      // Predicated region
      $region45: #{gat_forward.6} parent=43 // pred_check
        %p593 = pneg %p87
      $region46: #{gat_forward.6} parent=43 // pred_check_branch
        %595 = sbr.rel (%p593) target = $region48
      $region47: #{gat_forward.6} parent=43 // pred_region
        %s596 = smul.u32 16, %s17
        %p597 = scmp.lt.s32.totalorder %s596, 31
        %s598 = scalar_select %p597, %s596, 31
        %s599 = smul.addr %s598, 4
        %s600 = scalar_lea.vmem %s2, %s599
      $region48: #{gat_forward.6} parent=43 // pred_fallthru
        _
      // Predicated region
      $region49: #{gat_forward.6} parent=43 // pred_check
        %p601 = pneg %p113
      $region50: #{gat_forward.6} parent=43 // pred_check_branch
        %603 = sbr.rel (%p601) target = $region52
      $region51: #{gat_forward.6} parent=43 // pred_region
        %s604 = smul.u32 16, %s17
        %p605 = scmp.lt.s32.totalorder %s604, 31
        %s606 = scalar_select %p605, %s604, 31
        %s607 = smul.addr %s606, 8
        %s608 = scalar_lea.vmem %s3, %s607
      $region52: #{gat_forward.6} parent=43 // pred_fallthru
        _
      // Predicated region
      $region53: #{gat_forward.6} parent=43 // pred_check
        %p609 = pneg %p139
      $region54: #{gat_forward.6} parent=43 // pred_check_branch
        %611 = sbr.rel (%p609) target = $region56
      $region55: #{gat_forward.6} parent=43 // pred_region
        %s612 = smul.u32 16, %s17
        %p613 = scmp.lt.s32.totalorder %s612, 31
        %s614 = scalar_select %p613, %s612, 31
        %s615 = smul.addr %s614, 8
        %s616 = scalar_lea.vmem %s4, %s615
      $region56: #{gat_forward.6} parent=43 // pred_fallthru
        _
    $region44: #{gat_forward.6} parent=5 // pred_fallthru
      _
  $region6: #{gat_forward.6} parent=0 // loop_footer
    %s15 = sadd.s32 1, %s11
  $region7: #{gat_forward.6} parent=0 // loop_footer_branch
    %10 = sbr.rel target = $region3
  $region8: #{gat_forward.6} parent=0 // loop_exit
    _

// kernel: gat_forward.10
$region0: #{gat_forward.10}
  #allocation0 [shape = 'u32[]', space=smem, size = 0x4, offset = 0x4, fixed_abs, tag = 'smem constant byte address 0x4 - core index']
  #allocation1 [shape = 'u32[72,128]{1,0:T(1,128)}', space=vmem, size = 0x9000, scoped, tag = 'internal scratch']
  %s0 = inlined_call_operand.vmem [shape: f32[256,128], index: 0, kind: input, shape index: {}]
  %s1 = inlined_call_operand.vmem [shape: bf16[128,128], index: 1, kind: input, shape index: {}]
  %s2 = inlined_call_operand.vmem [shape: bf16[256,128], index: 2, kind: output, shape index: {0}]
  %s3 = inlined_call_operand.vmem [shape: f32[256,1], index: 3, kind: output, shape index: {1}]
  %s4 = inlined_call_operand.vmem [shape: f32[256,1], index: 4, kind: output, shape index: {2}]
  %5 = xla_tuple %s2, %s3, %s4
  %s6 = sld [smem:[#allocation0]]
  $region57: #{gat_forward.10} parent=0
    _
  %s8 = ssub.s32 1, %s6
  %s9 = scalar_select 0, %s8, %s6
  loop: start=0, step=1, limit=4
  $region2: #{gat_forward.10} parent=0 // loop_pre_header
    _
  $region3: #{gat_forward.10} parent=0 // loop_header
    %s11 = sphi 0, %s15
    %p12 = scmp.ge.s32.totalorder %s11, 4
    %s21 = sphi 0, %s23
    %s24 = sphi 0, %s21
    %s25 = sphi 0, %s24
    %s41 = sphi 0, %s25
    %s45 = sphi 0, %s45
    %s47 = sphi 0, %s45
    %s48 = sphi 0, %s47
    %s62 = sphi 0, %s48
    %s68 = sphi 0, %s70
    %s71 = sphi 0, %s68
    %s72 = sphi 0, %s71
    %s88 = sphi 0, %s72
    %s94 = sphi 0, %s96
    %s97 = sphi 0, %s94
    %s98 = sphi 0, %s97
    %s114 = sphi 0, %s98
    %s120 = sphi 0, %s122
    %s123 = sphi 0, %s120
    %s124 = sphi 0, %s123
    %s140 = sphi 0, %s124
  $region4: #{gat_forward.10} parent=0 // loop_header_branch
    %14 = sbr.rel (%p12) target = $region8
  $region5: #{gat_forward.10} parent=0 // loop_body
    %s16 = ssub.s32 %s11, 1
    %s17 = ssub.s32 %s11, 2
    %s18 = sadd.s32 %s11, 1
    %s19 = ssub.s32 %s11, %s18
    %p20 = scmp.eq.s32.totalorder %s19, 0
    %s22 = sadd.s32 %s21, 1
    %s23 = scalar_select %p20, %s21, %s22
    %p26 = pneg %p20
    %p27 = scmp.eq.s32.totalorder %s11, 1
    %p28 = por %p26, %p27
    %p29 = scmp.ne.s32.totalorder %s21, %s24
    %p30 = scmp.eq.s32.totalorder %s11, 0
    %p31 = por %p29, %p30
    %p32 = scmp.ne.s32.totalorder %s21, %s24
    %p33 = scmp.eq.s32.totalorder %s16, 1
    %p34 = por %p32, %p33
    %p35 = scmp.ne.s32.totalorder %s24, %s25
    %p36 = scmp.eq.s32.totalorder %s16, 0
    %p37 = por %p35, %p36
    %p38 = scmp.ne.s32.totalorder %s24, %s25
    %p39 = scmp.eq.s32.totalorder %s17, 1
    %p40 = por %p38, %p39
    %p42 = scmp.ne.s32.totalorder %s25, %s41
    %p43 = scmp.eq.s32.totalorder %s17, 0
    %p44 = por %p42, %p43
    %s46 = sadd.s32 %s45, 1
    %p49 = scmp.eq.s32.totalorder %s11, 1
    %p50 = scmp.ne.s32.totalorder %s45, %s47
    %p51 = scmp.eq.s32.totalorder %s11, 0
    %p52 = por %p50, %p51
    %p53 = scmp.ne.s32.totalorder %s45, %s47
    %p54 = scmp.eq.s32.totalorder %s16, 1
    %p55 = por %p53, %p54
    %p56 = scmp.ne.s32.totalorder %s47, %s48
    %p57 = scmp.eq.s32.totalorder %s16, 0
    %p58 = por %p56, %p57
    %p59 = scmp.ne.s32.totalorder %s47, %s48
    %p60 = scmp.eq.s32.totalorder %s17, 1
    %p61 = por %p59, %p60
    %p63 = scmp.ne.s32.totalorder %s48, %s62
    %p64 = scmp.eq.s32.totalorder %s17, 0
    %p65 = por %p63, %p64
    %s66 = ssub.s32 %s11, %s18
    %p67 = scmp.eq.s32.totalorder %s66, 0
    %s69 = sadd.s32 %s68, 1
    %s70 = scalar_select %p67, %s68, %s69
    %p73 = pneg %p67
    %p74 = scmp.eq.s32.totalorder %s11, 1
    %p75 = por %p73, %p74
    %p76 = scmp.ne.s32.totalorder %s68, %s71
    %p77 = scmp.eq.s32.totalorder %s11, 0
    %p78 = por %p76, %p77
    %p79 = scmp.ne.s32.totalorder %s68, %s71
    %p80 = scmp.eq.s32.totalorder %s16, 1
    %p81 = por %p79, %p80
    %p82 = scmp.ne.s32.totalorder %s71, %s72
    %p83 = scmp.eq.s32.totalorder %s16, 0
    %p84 = por %p82, %p83
    %p85 = scmp.ne.s32.totalorder %s71, %s72
    %p86 = scmp.eq.s32.totalorder %s17, 1
    %p87 = por %p85, %p86
    %p89 = scmp.ne.s32.totalorder %s72, %s88
    %p90 = scmp.eq.s32.totalorder %s17, 0
    %p91 = por %p89, %p90
    %s92 = ssub.s32 %s11, %s18
    %p93 = scmp.eq.s32.totalorder %s92, 0
    %s95 = sadd.s32 %s94, 1
    %s96 = scalar_select %p93, %s94, %s95
    %p99 = pneg %p93
    %p100 = scmp.eq.s32.totalorder %s11, 1
    %p101 = por %p99, %p100
    %p102 = scmp.ne.s32.totalorder %s94, %s97
    %p103 = scmp.eq.s32.totalorder %s11, 0
    %p104 = por %p102, %p103
    %p105 = scmp.ne.s32.totalorder %s94, %s97
    %p106 = scmp.eq.s32.totalorder %s16, 1
    %p107 = por %p105, %p106
    %p108 = scmp.ne.s32.totalorder %s97, %s98
    %p109 = scmp.eq.s32.totalorder %s16, 0
    %p110 = por %p108, %p109
    %p111 = scmp.ne.s32.totalorder %s97, %s98
    %p112 = scmp.eq.s32.totalorder %s17, 1
    %p113 = por %p111, %p112
    %p115 = scmp.ne.s32.totalorder %s98, %s114
    %p116 = scmp.eq.s32.totalorder %s17, 0
    %p117 = por %p115, %p116
    %s118 = ssub.s32 %s11, %s18
    %p119 = scmp.eq.s32.totalorder %s118, 0
    %s121 = sadd.s32 %s120, 1
    %s122 = scalar_select %p119, %s120, %s121
    %p125 = pneg %p119
    %p126 = scmp.eq.s32.totalorder %s11, 1
    %p127 = por %p125, %p126
    %p128 = scmp.ne.s32.totalorder %s120, %s123
    %p129 = scmp.eq.s32.totalorder %s11, 0
    %p130 = por %p128, %p129
    %p131 = scmp.ne.s32.totalorder %s120, %s123
    %p132 = scmp.eq.s32.totalorder %s16, 1
    %p133 = por %p131, %p132
    %p134 = scmp.ne.s32.totalorder %s123, %s124
    %p135 = scmp.eq.s32.totalorder %s16, 0
    %p136 = por %p134, %p135
    %p137 = scmp.ne.s32.totalorder %s123, %s124
    %p138 = scmp.eq.s32.totalorder %s17, 1
    %p139 = por %p137, %p138
    %p141 = scmp.ne.s32.totalorder %s124, %s140
    %p142 = scmp.eq.s32.totalorder %s17, 0
    %p143 = por %p141, %p142
    %p144 = scmp.le.s32.totalorder 1, %s11
    %p145 = scmp.lt.s32.totalorder %s11, 3
    %p146 = pnand %p144, %p145
    %p147 = pneg %p146
    // Predicated region
    $region9: #{gat_forward.10} parent=5 // pred_check
      _
    $region10: #{gat_forward.10} parent=5 // pred_check_branch
      %149 = sbr.rel (%p146) target = $region12
    $region11: #{gat_forward.10} parent=5 // pred_region
      %s150 = ssub.s32 %s11, 1
      // Predicated region
      $region13: #{gat_forward.10} parent=11 // pred_check
        %p151 = pneg %p58
      $region14: #{gat_forward.10} parent=11 // pred_check_branch
        %153 = sbr.rel (%p151) target = $region16
      $region15: #{gat_forward.10} parent=11 // pred_region
        _
      $region16: #{gat_forward.10} parent=11 // pred_fallthru
        _
    $region12: #{gat_forward.10} parent=5 // pred_fallthru
      _
    %p154 = scmp.lt.s32.totalorder %s11, 2
    // Predicated region
    $region17: #{gat_forward.10} parent=5 // pred_check
      %p155 = pneg %p154
    $region18: #{gat_forward.10} parent=5 // pred_check_branch
      %157 = sbr.rel (%p155) target = $region20
    $region19: #{gat_forward.10} parent=5 // pred_region
      // Predicated region
      $region21: #{gat_forward.10} parent=19 // pred_check
        %p158 = pneg %p31
      $region22: #{gat_forward.10} parent=19 // pred_check_branch
        %160 = sbr.rel (%p158) target = $region24
      $region23: #{gat_forward.10} parent=19 // pred_region
        %s161 = smul.u32 16, %s11
        %p162 = scmp.lt.s32.totalorder %s161, 31
        %s163 = scalar_select %p162, %s161, 31
        %s164 = smul.addr %s163, 8
        %s165 = scalar_lea.vmem %s0, %s164
        %s166 = smul.u32 16, %s11
      $region24: #{gat_forward.10} parent=19 // pred_fallthru
        _
    $region20: #{gat_forward.10} parent=5 // pred_fallthru
      _
    %p167 = scmp.le.s32.totalorder 1, %s11
    %p168 = scmp.lt.s32.totalorder %s11, 3
    %p169 = pnand %p167, %p168
    %p170 = pneg %p169
    // Predicated region
    $region25: #{gat_forward.10} parent=5 // pred_check
      _
    $region26: #{gat_forward.10} parent=5 // pred_check_branch
      %172 = sbr.rel (%p169) target = $region28
    $region27: #{gat_forward.10} parent=5 // pred_region
      %s173 = ssub.s32 %s11, 1
      %s174 = smul.u32 16, %s16
      %p175 = scmp.lt.s32.totalorder %s174, 31
      %s176 = scalar_select %p175, %s174, 31
      %s177 = smul.addr %s176, 8
      %s178 = scalar_lea.vmem %s0, %s177
      %p179 = pneg %p37
      %p180 = pneg %p34
      %p181 = pneg %p58
      %p182 = pneg %p55
      %p183 = pneg %p84
      %p184 = pneg %p81
      %s185 = smul.u32 16, %s16
      %p186 = scmp.lt.s32.totalorder %s185, 31
      %s187 = scalar_select %p186, %s185, 31
      %s188 = smul.addr %s187, 4
      %s189 = scalar_lea.vmem %s2, %s188
      %p190 = pneg %p110
      %p191 = pneg %p107
      %s192 = smul.u32 16, %s16
      %p193 = scmp.lt.s32.totalorder %s192, 31
      %s194 = scalar_select %p193, %s192, 31
      %s195 = smul.addr %s194, 8
      %s196 = scalar_lea.vmem %s3, %s195
      %p197 = pneg %p136
      %p198 = pneg %p133
      %s199 = smul.u32 16, %s16
      %p200 = scmp.lt.s32.totalorder %s199, 31
      %s201 = scalar_select %p200, %s199, 31
      %s202 = smul.addr %s201, 8
      %s203 = scalar_lea.vmem %s4, %s202
      %s204 = smul.u32 16, %s16
      %p205 = scmp.lt.s32.totalorder %s204, 31
      %s206 = scalar_select %p205, %s204, 31
      %s207 = smul.addr %s206, 8
      %s208 = scalar_lea.vmem %s0, %s207
      %s209 = smul.u32 16, %s16
      %s210 = smul.u32 16, %s16
      %p211 = scmp.lt.s32.totalorder %s210, 31
      %s212 = scalar_select %p211, %s210, 31
      %s213 = smul.addr %s212, 4
      %s214 = scalar_lea.vmem %s2, %s213
      %s215 = smul.u32 16, %s16
      %s216 = smul.u32 16, %s16
      %p217 = scmp.lt.s32.totalorder %s216, 31
      %s218 = scalar_select %p217, %s216, 31
      %s219 = smul.addr %s218, 8
      %s220 = scalar_lea.vmem %s3, %s219
      %s221 = smul.u32 16, %s16
      %s222 = smul.u32 16, %s16
      %p223 = scmp.lt.s32.totalorder %s222, 31
      %s224 = scalar_select %p223, %s222, 31
      %s225 = smul.addr %s224, 8
      %s226 = scalar_lea.vmem %s4, %s225
      %s227 = smul.u32 16, %s16
      %v228 = vld [vmem:[%s208] sm:$0xff]
      %v229 = vld [vmem:[%s208 + $0x8] sm:$0xff]
      %v230 = vld [vmem:[%s208 + $0x10] sm:$0xff]
      %v231 = vld [vmem:[%s208 + $0x18] sm:$0xff]
      %v232 = vld [vmem:[%s208 + $0x20] sm:$0xff]
      %v233 = vld [vmem:[%s208 + $0x28] sm:$0xff]
      %v234 = vld [vmem:[%s208 + $0x30] sm:$0xff]
      %v235 = vld [vmem:[%s208 + $0x38] sm:$0xff]
      %v236 = vld [vmem:[%s208 + $0x40] sm:$0xff]
      %v237 = vld [vmem:[%s208 + $0x48] sm:$0xff]
      %v238 = vld [vmem:[%s208 + $0x50] sm:$0xff]
      %v239 = vld [vmem:[%s208 + $0x58] sm:$0xff]
      %v240 = vld [vmem:[%s208 + $0x60] sm:$0xff]
      %v241 = vld [vmem:[%s208 + $0x68] sm:$0xff]
      %v242 = vld [vmem:[%s208 + $0x70] sm:$0xff]
      %v243 = vld [vmem:[%s208 + $0x78] sm:$0xff]
      %v244 = vpack.c.bf16 %v229, %v228
      %v245 = vpack.c.bf16 %v231, %v230
      %v246 = vpack.c.bf16 %v233, %v232
      %v247 = vpack.c.bf16 %v235, %v234
      %v248 = vpack.c.bf16 %v237, %v236
      %v249 = vpack.c.bf16 %v239, %v238
      %v250 = vpack.c.bf16 %v241, %v240
      %v251 = vpack.c.bf16 %v243, %v242
      %v252 = vld [vmem:[%s1] sm:$0xf]
      %v253 = vld [vmem:[%s1 + $0x4] sm:$0xf]
      %v254 = vld [vmem:[%s1 + $0x8] sm:$0xf]
      %v255 = vld [vmem:[%s1 + $0xc] sm:$0xf]
      %v256 = vld [vmem:[%s1 + $0x10] sm:$0xf]
      %v257 = vld [vmem:[%s1 + $0x14] sm:$0xf]
      %v258 = vld [vmem:[%s1 + $0x18] sm:$0xf]
      %v259 = vld [vmem:[%s1 + $0x1c] sm:$0xf]
      %v260 = vld [vmem:[%s1 + $0x20] sm:$0xf]
      %v261 = vld [vmem:[%s1 + $0x24] sm:$0xf]
      %v262 = vld [vmem:[%s1 + $0x28] sm:$0xf]
      %v263 = vld [vmem:[%s1 + $0x2c] sm:$0xf]
      %v264 = vld [vmem:[%s1 + $0x30] sm:$0xf]
      %v265 = vld [vmem:[%s1 + $0x34] sm:$0xf]
      %v266 = vld [vmem:[%s1 + $0x38] sm:$0xf]
      %v267 = vld [vmem:[%s1 + $0x3c] sm:$0xf]
      %v284 = vunpack.c.l.b16 %v252
      %v285 = vunpack.c.l.b16 %v253
      %v286 = vunpack.c.l.b16 %v254
      %v287 = vunpack.c.l.b16 %v255
      %v288 = vunpack.c.l.b16 %v256
      %v289 = vunpack.c.l.b16 %v257
      %v290 = vunpack.c.l.b16 %v258
      %v291 = vunpack.c.l.b16 %v259
      %v292 = vunpack.c.l.b16 %v260
      %v293 = vunpack.c.l.b16 %v261
      %v294 = vunpack.c.l.b16 %v262
      %v295 = vunpack.c.l.b16 %v263
      %v296 = vunpack.c.l.b16 %v264
      %v297 = vunpack.c.l.b16 %v265
      %v298 = vunpack.c.l.b16 %v266
      %v299 = vunpack.c.l.b16 %v267
      %v300 = vpack.c.b16 %v285, %v284
      %v301 = vpack.c.b16 %v287, %v286
      %v302 = vpack.c.b16 %v289, %v288
      %v303 = vpack.c.b16 %v291, %v290
      %v304 = vpack.c.b16 %v293, %v292
      %v305 = vpack.c.b16 %v295, %v294
      %v306 = vpack.c.b16 %v297, %v296
      %v307 = vpack.c.b16 %v299, %v298
      %316 = vmatpush.bf16.msra.mxu0 %v307
      %317 = vmatpush.bf16.msra.mxu0 %v306
      %318 = vmatpush.bf16.msra.mxu0 %v305
      %319 = vmatpush.bf16.msra.mxu0 %v304
      %320 = vmatpush.bf16.msra.mxu0 %v303
      %321 = vmatpush.bf16.msra.mxu0 %v302
      %322 = vmatpush.bf16.msra.mxu0 %v301
      %323 = vmatpush.bf16.msra.mxu0 %v300
      %324 = vmatmul.bf16.gmra.mxu0 %v244
      %v325 = vpop.f32.mrf.mxu0
      %v326 = vadd.f32 0.0, %v325
      %v327 = vpop.f32.mrf.mxu0
      %v328 = vadd.f32 0.0, %v327
      %329 = vmatmul.bf16.gmra.mxu0 %v245
      %v330 = vpop.f32.mrf.mxu0
      %v331 = vadd.f32 0.0, %v330
      %v332 = vpop.f32.mrf.mxu0
      %v333 = vadd.f32 0.0, %v332
      %334 = vmatmul.bf16.gmra.mxu0 %v246
      %v335 = vpop.f32.mrf.mxu0
      %v336 = vadd.f32 0.0, %v335
      %v337 = vpop.f32.mrf.mxu0
      %v338 = vadd.f32 0.0, %v337
      %339 = vmatmul.bf16.gmra.mxu0 %v247
      %v340 = vpop.f32.mrf.mxu0
      %v341 = vadd.f32 0.0, %v340
      %v342 = vpop.f32.mrf.mxu0
      %v343 = vadd.f32 0.0, %v342
      %344 = vmatmul.bf16.gmra.mxu0 %v248
      %v345 = vpop.f32.mrf.mxu0
      %v346 = vadd.f32 0.0, %v345
      %v347 = vpop.f32.mrf.mxu0
      %v348 = vadd.f32 0.0, %v347
      %349 = vmatmul.bf16.gmra.mxu0 %v249
      %v350 = vpop.f32.mrf.mxu0
      %v351 = vadd.f32 0.0, %v350
      %v352 = vpop.f32.mrf.mxu0
      %v353 = vadd.f32 0.0, %v352
      %354 = vmatmul.bf16.gmra.mxu0 %v250
      %v355 = vpop.f32.mrf.mxu0
      %v356 = vadd.f32 0.0, %v355
      %v357 = vpop.f32.mrf.mxu0
      %v358 = vadd.f32 0.0, %v357
      %359 = vmatmul.bf16.gmra.mxu0 %v251
      %v360 = vpop.f32.mrf.mxu0
      %v361 = vadd.f32 0.0, %v360
      %v362 = vpop.f32.mrf.mxu0
      %v363 = vadd.f32 0.0, %v362
      %364 = vdwg.mxu0
      %v365 = vlaneseq
      %v366 = vand.u32 %v365, 127
      %vm367 = vcmp.lt.s32.totalorder %v366, 8
      %v368 = vsel %vm367, %v326, 0.0
      %v369 = vsel %vm367, %v328, 0.0
      %v370 = vsel %vm367, %v331, 0.0
      %v371 = vsel %vm367, %v333, 0.0
      %v372 = vsel %vm367, %v336, 0.0
      %v373 = vsel %vm367, %v338, 0.0
      %v374 = vsel %vm367, %v341, 0.0
      %v375 = vsel %vm367, %v343, 0.0
      %v376 = vsel %vm367, %v346, 0.0
      %v377 = vsel %vm367, %v348, 0.0
      %v378 = vsel %vm367, %v351, 0.0
      %v379 = vsel %vm367, %v353, 0.0
      %v380 = vsel %vm367, %v356, 0.0
      %v381 = vsel %vm367, %v358, 0.0
      %v382 = vsel %vm367, %v361, 0.0
      %v383 = vsel %vm367, %v363, 0.0
      %v384 = vpack.c.bf16 %v368, %v368
      %v385 = vpack.c.bf16 %v369, %v369
      %v386 = vpack.c.bf16 %v370, %v370
      %v387 = vpack.c.bf16 %v371, %v371
      %v388 = vpack.c.bf16 %v372, %v372
      %v389 = vpack.c.bf16 %v373, %v373
      %v390 = vpack.c.bf16 %v374, %v374
      %v391 = vpack.c.bf16 %v375, %v375
      %v392 = vpack.c.bf16 %v376, %v376
      %v393 = vpack.c.bf16 %v377, %v377
      %v394 = vpack.c.bf16 %v378, %v378
      %v395 = vpack.c.bf16 %v379, %v379
      %v396 = vpack.c.bf16 %v380, %v380
      %v397 = vpack.c.bf16 %v381, %v381
      %v398 = vpack.c.bf16 %v382, %v382
      %v399 = vpack.c.bf16 %v383, %v383
      %400 = vst [vmem:[%s214] sm:$0xf] %v384
      %401 = vst [vmem:[%s214 + $0x4] sm:$0xf] %v385
      %402 = vst [vmem:[%s214 + $0x8] sm:$0xf] %v386
      %403 = vst [vmem:[%s214 + $0xc] sm:$0xf] %v387
      %404 = vst [vmem:[%s214 + $0x10] sm:$0xf] %v388
      %405 = vst [vmem:[%s214 + $0x14] sm:$0xf] %v389
      %406 = vst [vmem:[%s214 + $0x18] sm:$0xf] %v390
      %407 = vst [vmem:[%s214 + $0x1c] sm:$0xf] %v391
      %408 = vst [vmem:[%s214 + $0x20] sm:$0xf] %v392
      %409 = vst [vmem:[%s214 + $0x24] sm:$0xf] %v393
      %410 = vst [vmem:[%s214 + $0x28] sm:$0xf] %v394
      %411 = vst [vmem:[%s214 + $0x2c] sm:$0xf] %v395
      %412 = vst [vmem:[%s214 + $0x30] sm:$0xf] %v396
      %413 = vst [vmem:[%s214 + $0x34] sm:$0xf] %v397
      %414 = vst [vmem:[%s214 + $0x38] sm:$0xf] %v398
      %415 = vst [vmem:[%s214 + $0x3c] sm:$0xf] %v399
      %432 = vrot.lane.b32.xlu0 %v326, 120
      %v433 = vpop.permute.xlu0 %432
      %434 = vrot.lane.b32.xlu0 %v328, 120
      %v435 = vpop.permute.xlu0 %434
      %436 = vrot.lane.b32.xlu0 %v331, 120
      %v437 = vpop.permute.xlu0 %436
      %438 = vrot.lane.b32.xlu0 %v333, 120
      %v439 = vpop.permute.xlu0 %438
      %440 = vrot.lane.b32.xlu0 %v336, 120
      %v441 = vpop.permute.xlu0 %440
      %442 = vrot.lane.b32.xlu0 %v338, 120
      %v443 = vpop.permute.xlu0 %442
      %444 = vrot.lane.b32.xlu0 %v341, 120
      %v445 = vpop.permute.xlu0 %444
      %446 = vrot.lane.b32.xlu0 %v343, 120
      %v447 = vpop.permute.xlu0 %446
      %448 = vrot.lane.b32.xlu0 %v346, 120
      %v449 = vpop.permute.xlu0 %448
      %450 = vrot.lane.b32.xlu0 %v348, 120
      %v451 = vpop.permute.xlu0 %450
      %452 = vrot.lane.b32.xlu0 %v351, 120
      %v453 = vpop.permute.xlu0 %452
      %454 = vrot.lane.b32.xlu0 %v353, 120
      %v455 = vpop.permute.xlu0 %454
      %456 = vrot.lane.b32.xlu0 %v356, 120
      %v457 = vpop.permute.xlu0 %456
      %458 = vrot.lane.b32.xlu0 %v358, 120
      %v459 = vpop.permute.xlu0 %458
      %460 = vrot.lane.b32.xlu0 %v361, 120
      %v461 = vpop.permute.xlu0 %460
      %462 = vrot.lane.b32.xlu0 %v363, 120
      %v463 = vpop.permute.xlu0 %462
      %vm480 = vcmask 7168
      %481 = vst.msk [vmem:[%s220] sm:$0xff] %vm480, %v433
      %482 = vst.msk [vmem:[%s220 + $0x8] sm:$0xff] %vm480, %v435
      %483 = vst.msk [vmem:[%s220 + $0x10] sm:$0xff] %vm480, %v437
      %484 = vst.msk [vmem:[%s220 + $0x18] sm:$0xff] %vm480, %v439
      %485 = vst.msk [vmem:[%s220 + $0x20] sm:$0xff] %vm480, %v441
      %486 = vst.msk [vmem:[%s220 + $0x28] sm:$0xff] %vm480, %v443
      %487 = vst.msk [vmem:[%s220 + $0x30] sm:$0xff] %vm480, %v445
      %488 = vst.msk [vmem:[%s220 + $0x38] sm:$0xff] %vm480, %v447
      %489 = vst.msk [vmem:[%s220 + $0x40] sm:$0xff] %vm480, %v449
      %490 = vst.msk [vmem:[%s220 + $0x48] sm:$0xff] %vm480, %v451
      %491 = vst.msk [vmem:[%s220 + $0x50] sm:$0xff] %vm480, %v453
      %492 = vst.msk [vmem:[%s220 + $0x58] sm:$0xff] %vm480, %v455
      %493 = vst.msk [vmem:[%s220 + $0x60] sm:$0xff] %vm480, %v457
      %494 = vst.msk [vmem:[%s220 + $0x68] sm:$0xff] %vm480, %v459
      %495 = vst.msk [vmem:[%s220 + $0x70] sm:$0xff] %vm480, %v461
      %496 = vst.msk [vmem:[%s220 + $0x78] sm:$0xff] %vm480, %v463
      %497 = vrot.lane.b32.xlu0 %v326, 119
      %v498 = vpop.permute.xlu0 %497
      %499 = vrot.lane.b32.xlu0 %v328, 119
      %v500 = vpop.permute.xlu0 %499
      %501 = vrot.lane.b32.xlu0 %v331, 119
      %v502 = vpop.permute.xlu0 %501
      %503 = vrot.lane.b32.xlu0 %v333, 119
      %v504 = vpop.permute.xlu0 %503
      %505 = vrot.lane.b32.xlu0 %v336, 119
      %v506 = vpop.permute.xlu0 %505
      %507 = vrot.lane.b32.xlu0 %v338, 119
      %v508 = vpop.permute.xlu0 %507
      %509 = vrot.lane.b32.xlu0 %v341, 119
      %v510 = vpop.permute.xlu0 %509
      %511 = vrot.lane.b32.xlu0 %v343, 119
      %v512 = vpop.permute.xlu0 %511
      %513 = vrot.lane.b32.xlu0 %v346, 119
      %v514 = vpop.permute.xlu0 %513
      %515 = vrot.lane.b32.xlu0 %v348, 119
      %v516 = vpop.permute.xlu0 %515
      %517 = vrot.lane.b32.xlu0 %v351, 119
      %v518 = vpop.permute.xlu0 %517
      %519 = vrot.lane.b32.xlu0 %v353, 119
      %v520 = vpop.permute.xlu0 %519
      %521 = vrot.lane.b32.xlu0 %v356, 119
      %v522 = vpop.permute.xlu0 %521
      %523 = vrot.lane.b32.xlu0 %v358, 119
      %v524 = vpop.permute.xlu0 %523
      %525 = vrot.lane.b32.xlu0 %v361, 119
      %v526 = vpop.permute.xlu0 %525
      %527 = vrot.lane.b32.xlu0 %v363, 119
      %v528 = vpop.permute.xlu0 %527
      %545 = vst.msk [vmem:[%s226] sm:$0xff] %vm480, %v498
      %546 = vst.msk [vmem:[%s226 + $0x8] sm:$0xff] %vm480, %v500
      %547 = vst.msk [vmem:[%s226 + $0x10] sm:$0xff] %vm480, %v502
      %548 = vst.msk [vmem:[%s226 + $0x18] sm:$0xff] %vm480, %v504
      %549 = vst.msk [vmem:[%s226 + $0x20] sm:$0xff] %vm480, %v506
      %550 = vst.msk [vmem:[%s226 + $0x28] sm:$0xff] %vm480, %v508
      %551 = vst.msk [vmem:[%s226 + $0x30] sm:$0xff] %vm480, %v510
      %552 = vst.msk [vmem:[%s226 + $0x38] sm:$0xff] %vm480, %v512
      %553 = vst.msk [vmem:[%s226 + $0x40] sm:$0xff] %vm480, %v514
      %554 = vst.msk [vmem:[%s226 + $0x48] sm:$0xff] %vm480, %v516
      %555 = vst.msk [vmem:[%s226 + $0x50] sm:$0xff] %vm480, %v518
      %556 = vst.msk [vmem:[%s226 + $0x58] sm:$0xff] %vm480, %v520
      %557 = vst.msk [vmem:[%s226 + $0x60] sm:$0xff] %vm480, %v522
      %558 = vst.msk [vmem:[%s226 + $0x68] sm:$0xff] %vm480, %v524
      %559 = vst.msk [vmem:[%s226 + $0x70] sm:$0xff] %vm480, %v526
      %560 = vst.msk [vmem:[%s226 + $0x78] sm:$0xff] %vm480, %v528
      %s561 = smul.u32 16, %s16
      %p562 = scmp.lt.s32.totalorder %s561, 31
      %s563 = scalar_select %p562, %s561, 31
      %s564 = smul.addr %s563, 4
      %s565 = scalar_lea.vmem %s2, %s564
      %s566 = smul.u32 16, %s16
      %p567 = scmp.lt.s32.totalorder %s566, 31
      %s568 = scalar_select %p567, %s566, 31
      %s569 = smul.addr %s568, 8
      %s570 = scalar_lea.vmem %s3, %s569
      %s571 = smul.u32 16, %s16
      %p572 = scmp.lt.s32.totalorder %s571, 31
      %s573 = scalar_select %p572, %s571, 31
      %s574 = smul.addr %s573, 8
      %s575 = scalar_lea.vmem %s4, %s574
      // Predicated region
      $region29: #{gat_forward.10} parent=27 // pred_check
        %p576 = pneg %p81
      $region30: #{gat_forward.10} parent=27 // pred_check_branch
        %578 = sbr.rel (%p576) target = $region32
      $region31: #{gat_forward.10} parent=27 // pred_region
        %s579 = smul.u32 16, %s16
      $region32: #{gat_forward.10} parent=27 // pred_fallthru
        _
      // Predicated region
      $region33: #{gat_forward.10} parent=27 // pred_check
        %p580 = pneg %p107
      $region34: #{gat_forward.10} parent=27 // pred_check_branch
        %582 = sbr.rel (%p580) target = $region36
      $region35: #{gat_forward.10} parent=27 // pred_region
        %s583 = smul.u32 16, %s16
      $region36: #{gat_forward.10} parent=27 // pred_fallthru
        _
      // Predicated region
      $region37: #{gat_forward.10} parent=27 // pred_check
        %p584 = pneg %p133
      $region38: #{gat_forward.10} parent=27 // pred_check_branch
        %586 = sbr.rel (%p584) target = $region40
      $region39: #{gat_forward.10} parent=27 // pred_region
        %s587 = smul.u32 16, %s16
      $region40: #{gat_forward.10} parent=27 // pred_fallthru
        _
    $region28: #{gat_forward.10} parent=5 // pred_fallthru
      _
    %p588 = scmp.le.s32.totalorder 2, %s11
    // Predicated region
    $region41: #{gat_forward.10} parent=5 // pred_check
      %p589 = pneg %p588
    $region42: #{gat_forward.10} parent=5 // pred_check_branch
      %591 = sbr.rel (%p589) target = $region44
    $region43: #{gat_forward.10} parent=5 // pred_region
      %s592 = ssub.s32 %s11, 2
      // Predicated region
      $region45: #{gat_forward.10} parent=43 // pred_check
        %p593 = pneg %p87
      $region46: #{gat_forward.10} parent=43 // pred_check_branch
        %595 = sbr.rel (%p593) target = $region48
      $region47: #{gat_forward.10} parent=43 // pred_region
        %s596 = smul.u32 16, %s17
        %p597 = scmp.lt.s32.totalorder %s596, 31
        %s598 = scalar_select %p597, %s596, 31
        %s599 = smul.addr %s598, 4
        %s600 = scalar_lea.vmem %s2, %s599
      $region48: #{gat_forward.10} parent=43 // pred_fallthru
        _
      // Predicated region
      $region49: #{gat_forward.10} parent=43 // pred_check
        %p601 = pneg %p113
      $region50: #{gat_forward.10} parent=43 // pred_check_branch
        %603 = sbr.rel (%p601) target = $region52
      $region51: #{gat_forward.10} parent=43 // pred_region
        %s604 = smul.u32 16, %s17
        %p605 = scmp.lt.s32.totalorder %s604, 31
        %s606 = scalar_select %p605, %s604, 31
        %s607 = smul.addr %s606, 8
        %s608 = scalar_lea.vmem %s3, %s607
      $region52: #{gat_forward.10} parent=43 // pred_fallthru
        _
      // Predicated region
      $region53: #{gat_forward.10} parent=43 // pred_check
        %p609 = pneg %p139
      $region54: #{gat_forward.10} parent=43 // pred_check_branch
        %611 = sbr.rel (%p609) target = $region56
      $region55: #{gat_forward.10} parent=43 // pred_region
        %s612 = smul.u32 16, %s17
        %p613 = scmp.lt.s32.totalorder %s612, 31
        %s614 = scalar_select %p613, %s612, 31
        %s615 = smul.addr %s614, 8
        %s616 = scalar_lea.vmem %s4, %s615
      $region56: #{gat_forward.10} parent=43 // pred_fallthru
        _
    $region44: #{gat_forward.10} parent=5 // pred_fallthru
      _
  $region6: #{gat_forward.10} parent=0 // loop_footer
    %s15 = sadd.s32 1, %s11
  $region7: #{gat_forward.10} parent=0 // loop_footer_branch
    %10 = sbr.rel target = $region3
  $region8: #{gat_forward.10} parent=0 // loop_exit
    _

// kernel: gat_forward.7
$region0: #{gat_forward.7}
  #allocation0 [shape = 'u32[]', space=smem, size = 0x4, offset = 0x4, fixed_abs, tag = 'smem constant byte address 0x4 - core index']
  #allocation1 [shape = 'u32[72,128]{1,0:T(1,128)}', space=vmem, size = 0x9000, scoped, tag = 'internal scratch']
  #allocation2 [shape = 'f32[128,1]{1,0:T(8,128)}', space=vmem, size = 0x10000, scoped, tag = 'scratch operand']
  #allocation3 [shape = 'f32[128,1]{1,0:T(8,128)}', space=vmem, size = 0x10000, scoped, tag = 'scratch operand']
  #allocation4 [shape = 'f32[128,128]{1,0:T(8,128)}', space=vmem, size = 0x10000, scoped, tag = 'scratch operand']
  %s0 = inlined_call_operand.vmem [shape: f32[256,1], index: 0, kind: input, shape index: {}]
  %s1 = inlined_call_operand.vmem [shape: f32[1,256], index: 1, kind: input, shape index: {}]
  %s2 = inlined_call_operand.vmem [shape: bf16[256,128], index: 2, kind: input, shape index: {}]
  %s3 = inlined_call_operand.vmem [shape: bf16[256,256], index: 3, kind: input, shape index: {}]
  %s4 = inlined_call_operand.vmem [shape: f32[1,128], index: 4, kind: input, shape index: {}]
  %s5 = inlined_call_operand.vmem [shape: f32[256,128], index: 5, kind: output, shape index: {}]
  %s6 = sld [smem:[#allocation0]]
  $region102: #{gat_forward.7} parent=0
    _
  %s8 = ssub.s32 1, %s6
  %s9 = scalar_select 0, %s8, %s6
  $region1: #{gat_forward.7} parent=0
    #allocation5 [shape = 'u8[65536]{0}', space=vmem, size = 0x10000, scoped, tag = 'input window, operand 3']
    loop: start=0, step=1, limit=6
    $region2: #{gat_forward.7} parent=1 // loop_pre_header
      _
    $region3: #{gat_forward.7} parent=1 // loop_header
      %s11 = sphi 0, %s15
      %p12 = scmp.ge.s32.totalorder %s11, 6
      %s18 = sphi 0, %s30
      %s19 = sphi 0, %s26
      %s20 = sphi 0, %s18
      %s21 = sphi 0, %s19
      %s22 = sphi 0, %s20
      %s23 = sphi 0, %s21
      %s33 = sphi 0, %s35
      %s36 = sphi 0, %s33
      %s37 = sphi 0, %s36
      %s53 = sphi 0, %s37
      %s59 = sphi 0, %s61
      %s62 = sphi 0, %s59
      %s63 = sphi 0, %s62
      %s79 = sphi 0, %s63
      %s85 = sphi 0, %s87
      %s88 = sphi 0, %s85
      %s89 = sphi 0, %s88
      %s105 = sphi 0, %s89
      %s113 = sphi 0, %s115
      %s116 = sphi 0, %s113
      %s117 = sphi 0, %s116
      %s133 = sphi 0, %s117
      %s137 = sphi 0, %s137
      %s139 = sphi 0, %s137
      %s140 = sphi 0, %s139
      %s154 = sphi 0, %s140
      %s160 = sphi 0, %s162
      %s163 = sphi 0, %s160
      %s164 = sphi 0, %s163
      %s180 = sphi 0, %s164
    $region4: #{gat_forward.7} parent=1 // loop_header_branch
      %14 = sbr.rel (%p12) target = $region8
    $region5: #{gat_forward.7} parent=1 // loop_body
      %s16 = ssub.s32 %s11, 1
      %s17 = ssub.s32 %s11, 2
      %s24 = sadd.s32 1, %s19
      %p25 = scmp.ge.s32.totalorder %s24, 2
      %s26 = scalar_select %p25, 0, %s24
      %s27 = sadd.s32 1, %s18
      %s28 = scalar_select %p25, %s27, %s18
      %p29 = scmp.ge.s32.totalorder %s28, 2
      %s30 = scalar_select %p29, 0, %s28
      %s31 = ssub.s32 %s18, %s30
      %p32 = scmp.eq.s32.totalorder %s31, 0
      %s34 = sadd.s32 %s33, 1
      %s35 = scalar_select %p32, %s33, %s34
      %p38 = pneg %p32
      %p39 = scmp.eq.s32.totalorder %s11, 3
      %p40 = por %p38, %p39
      %p41 = scmp.ne.s32.totalorder %s33, %s36
      %p42 = scmp.eq.s32.totalorder %s11, 0
      %p43 = por %p41, %p42
      %p44 = scmp.ne.s32.totalorder %s33, %s36
      %p45 = scmp.eq.s32.totalorder %s16, 3
      %p46 = por %p44, %p45
      %p47 = scmp.ne.s32.totalorder %s36, %s37
      %p48 = scmp.eq.s32.totalorder %s16, 0
      %p49 = por %p47, %p48
      %p50 = scmp.ne.s32.totalorder %s36, %s37
      %p51 = scmp.eq.s32.totalorder %s17, 3
      %p52 = por %p50, %p51
      %p54 = scmp.ne.s32.totalorder %s37, %s53
      %p55 = scmp.eq.s32.totalorder %s17, 0
      %p56 = por %p54, %p55
      %s57 = ssub.s32 %s19, %s26
      %p58 = scmp.eq.s32.totalorder %s57, 0
      %s60 = sadd.s32 %s59, 1
      %s61 = scalar_select %p58, %s59, %s60
      %p64 = pneg %p58
      %p65 = scmp.eq.s32.totalorder %s11, 3
      %p66 = por %p64, %p65
      %p67 = scmp.ne.s32.totalorder %s59, %s62
      %p68 = scmp.eq.s32.totalorder %s11, 0
      %p69 = por %p67, %p68
      %p70 = scmp.ne.s32.totalorder %s59, %s62
      %p71 = scmp.eq.s32.totalorder %s16, 3
      %p72 = por %p70, %p71
      %p73 = scmp.ne.s32.totalorder %s62, %s63
      %p74 = scmp.eq.s32.totalorder %s16, 0
      %p75 = por %p73, %p74
      %p76 = scmp.ne.s32.totalorder %s62, %s63
      %p77 = scmp.eq.s32.totalorder %s17, 3
      %p78 = por %p76, %p77
      %p80 = scmp.ne.s32.totalorder %s63, %s79
      %p81 = scmp.eq.s32.totalorder %s17, 0
      %p82 = por %p80, %p81
      %s83 = ssub.s32 %s19, %s26
      %p84 = scmp.eq.s32.totalorder %s83, 0
      %s86 = sadd.s32 %s85, 1
      %s87 = scalar_select %p84, %s85, %s86
      %p90 = pneg %p84
      %p91 = scmp.eq.s32.totalorder %s11, 3
      %p92 = por %p90, %p91
      %p93 = scmp.ne.s32.totalorder %s85, %s88
      %p94 = scmp.eq.s32.totalorder %s11, 0
      %p95 = por %p93, %p94
      %p96 = scmp.ne.s32.totalorder %s85, %s88
      %p97 = scmp.eq.s32.totalorder %s16, 3
      %p98 = por %p96, %p97
      %p99 = scmp.ne.s32.totalorder %s88, %s89
      %p100 = scmp.eq.s32.totalorder %s16, 0
      %p101 = por %p99, %p100
      %p102 = scmp.ne.s32.totalorder %s88, %s89
      %p103 = scmp.eq.s32.totalorder %s17, 3
      %p104 = por %p102, %p103
      %p106 = scmp.ne.s32.totalorder %s89, %s105
      %p107 = scmp.eq.s32.totalorder %s17, 0
      %p108 = por %p106, %p107
      %s109 = ssub.s32 %s18, %s30
      %s110 = ssub.s32 %s19, %s26
      %s111 = sor.u32 %s109, %s110
      %p112 = scmp.eq.s32.totalorder %s111, 0
      %s114 = sadd.s32 %s113, 1
      %s115 = scalar_select %p112, %s113, %s114
      %p118 = pneg %p112
      %p119 = scmp.eq.s32.totalorder %s11, 3
      %p120 = por %p118, %p119
      %p121 = scmp.ne.s32.totalorder %s113, %s116
      %p122 = scmp.eq.s32.totalorder %s11, 0
      %p123 = por %p121, %p122
      %p124 = scmp.ne.s32.totalorder %s113, %s116
      %p125 = scmp.eq.s32.totalorder %s16, 3
      %p126 = por %p124, %p125
      %p127 = scmp.ne.s32.totalorder %s116, %s117
      %p128 = scmp.eq.s32.totalorder %s16, 0
      %p129 = por %p127, %p128
      %p130 = scmp.ne.s32.totalorder %s116, %s117
      %p131 = scmp.eq.s32.totalorder %s17, 3
      %p132 = por %p130, %p131
      %p134 = scmp.ne.s32.totalorder %s117, %s133
      %p135 = scmp.eq.s32.totalorder %s17, 0
      %p136 = por %p134, %p135
      %s138 = sadd.s32 %s137, 1
      %p141 = scmp.eq.s32.totalorder %s11, 3
      %p142 = scmp.ne.s32.totalorder %s137, %s139
      %p143 = scmp.eq.s32.totalorder %s11, 0
      %p144 = por %p142, %p143
      %p145 = scmp.ne.s32.totalorder %s137, %s139
      %p146 = scmp.eq.s32.totalorder %s16, 3
      %p147 = por %p145, %p146
      %p148 = scmp.ne.s32.totalorder %s139, %s140
      %p149 = scmp.eq.s32.totalorder %s16, 0
      %p150 = por %p148, %p149
      %p151 = scmp.ne.s32.totalorder %s139, %s140
      %p152 = scmp.eq.s32.totalorder %s17, 3
      %p153 = por %p151, %p152
      %p155 = scmp.ne.s32.totalorder %s140, %s154
      %p156 = scmp.eq.s32.totalorder %s17, 0
      %p157 = por %p155, %p156
      %s158 = ssub.s32 %s18, %s30
      %p159 = scmp.eq.s32.totalorder %s158, 0
      %s161 = sadd.s32 %s160, 1
      %s162 = scalar_select %p159, %s160, %s161
      %p165 = pneg %p159
      %p166 = scmp.eq.s32.totalorder %s11, 3
      %p167 = por %p165, %p166
      %p168 = scmp.ne.s32.totalorder %s160, %s163
      %p169 = scmp.eq.s32.totalorder %s11, 0
      %p170 = por %p168, %p169
      %p171 = scmp.ne.s32.totalorder %s160, %s163
      %p172 = scmp.eq.s32.totalorder %s16, 3
      %p173 = por %p171, %p172
      %p174 = scmp.ne.s32.totalorder %s163, %s164
      %p175 = scmp.eq.s32.totalorder %s16, 0
      %p176 = por %p174, %p175
      %p177 = scmp.ne.s32.totalorder %s163, %s164
      %p178 = scmp.eq.s32.totalorder %s17, 3
      %p179 = por %p177, %p178
      %p181 = scmp.ne.s32.totalorder %s164, %s180
      %p182 = scmp.eq.s32.totalorder %s17, 0
      %p183 = por %p181, %p182
      %p184 = scmp.le.s32.totalorder 1, %s11
      %p185 = scmp.lt.s32.totalorder %s11, 5
      %p186 = pnand %p184, %p185
      %p187 = pneg %p186
      // Predicated region
      $region9: #{gat_forward.7} parent=5 // pred_check
        _
      $region10: #{gat_forward.7} parent=5 // pred_check_branch
        %189 = sbr.rel (%p186) target = $region12
      $region11: #{gat_forward.7} parent=5 // pred_region
        %s190 = ssub.s32 %s11, 1
        // Predicated region
        $region13: #{gat_forward.7} parent=11 // pred_check
          %p191 = pneg %p150
        $region14: #{gat_forward.7} parent=11 // pred_check_branch
          %193 = sbr.rel (%p191) target = $region16
        $region15: #{gat_forward.7} parent=11 // pred_region
          _
        $region16: #{gat_forward.7} parent=11 // pred_fallthru
          _
      $region12: #{gat_forward.7} parent=5 // pred_fallthru
        _
      %p194 = scmp.lt.s32.totalorder %s11, 4
      // Predicated region
      $region17: #{gat_forward.7} parent=5 // pred_check
        %p195 = pneg %p194
      $region18: #{gat_forward.7} parent=5 // pred_check_branch
        %197 = sbr.rel (%p195) target = $region20
      $region19: #{gat_forward.7} parent=5 // pred_region
        // Predicated region
        $region21: #{gat_forward.7} parent=19 // pred_check
          %p198 = pneg %p43
        $region22: #{gat_forward.7} parent=19 // pred_check_branch
          %200 = sbr.rel (%p198) target = $region24
        $region23: #{gat_forward.7} parent=19 // pred_region
          %s201 = smul.u32 16, %s18
          %p202 = scmp.lt.s32.totalorder %s201, 31
          %s203 = scalar_select %p202, %s201, 31
          %s204 = smul.addr %s203, 8
          %s205 = scalar_lea.vmem %s0, %s204
          %s206 = smul.u32 16, %s18
        $region24: #{gat_forward.7} parent=19 // pred_fallthru
          _
        // Predicated region
        $region25: #{gat_forward.7} parent=19 // pred_check
          %p207 = pneg %p69
        $region26: #{gat_forward.7} parent=19 // pred_check_branch
          %209 = sbr.rel (%p207) target = $region28
        $region27: #{gat_forward.7} parent=19 // pred_region
          %p210 = scmp.lt.s32.totalorder %s19, 1
          %s211 = scalar_select %p210, %s19, 1
          %s212 = scalar_lea.vmem %s1, %s211
        $region28: #{gat_forward.7} parent=19 // pred_fallthru
          _
        // Predicated region
        $region29: #{gat_forward.7} parent=19 // pred_check
          %p213 = pneg %p95
        $region30: #{gat_forward.7} parent=19 // pred_check_branch
          %215 = sbr.rel (%p213) target = $region32
        $region31: #{gat_forward.7} parent=19 // pred_region
          %s216 = smul.u32 16, %s19
          %p217 = scmp.lt.s32.totalorder %s216, 31
          %s218 = scalar_select %p217, %s216, 31
          %s219 = smul.addr %s218, 4
          %s220 = scalar_lea.vmem %s2, %s219
          %s221 = smul.u32 16, %s19
        $region32: #{gat_forward.7} parent=19 // pred_fallthru
          _
        // Predicated region
        $region33: #{gat_forward.7} parent=19 // pred_check
          %p222 = pneg %p123
        $region34: #{gat_forward.7} parent=19 // pred_check_branch
          %224 = sbr.rel (%p222) target = $region36
        $region35: #{gat_forward.7} parent=19 // pred_region
          %s225 = sand.u32 %s113, 1
          %s226 = sand.u32 %s113, 1
          %s227 = smul.addr %s226, 64
          %s228 = scalar_lea.vmem [#allocation5], %s227
          %s229 = smul.u32 16, %s18
          %s230 = smul.addr %s229, 2
          %s231 = sadd.s32 %s19, %s230
          %s232 = smul.addr %s231, 4
          %s233 = scalar_lea.vmem %s3, %s232
          // Predicated region
          $region37: #{gat_forward.7} parent=35 // pred_check
            _
          $region38: #{gat_forward.7} parent=35 // pred_check_branch
            %235 = sbr.rel (0) target = $region40
          $region39: #{gat_forward.7} parent=35 // pred_region
            // Predicated region
            $region41: #{gat_forward.7} parent=39 // pred_check
              _
            $region42: #{gat_forward.7} parent=39 // pred_check_branch
              %237 = sbr.rel target = $region44
            $region43: #{gat_forward.7} parent=39 // pred_region
              // Predicated region
              $region56: #{gat_forward.7} parent=43 // pred_check
                _
              $region57: #{gat_forward.7} parent=43 // pred_check_branch
                %283 = sbr.rel (0) target = $region59
              $region58: #{gat_forward.7} parent=43 // pred_region
                loop: start=0, step=1, limit=1
                $region60: #{gat_forward.7} parent=58 // loop_pre_header
                  _
                $region61: #{gat_forward.7} parent=58 // loop_header
                  %s285 = sphi 0, %s289
                  %p286 = scmp.ge.s32.totalorder %s285, 1
                  %s290 = sphi %s233, %s233
                  %s291 = sphi %s228, %s228
                $region62: #{gat_forward.7} parent=58 // loop_header_branch
                  %288 = sbr.rel (%p286) target = $region66
                $region63: #{gat_forward.7} parent=58 // loop_body
                  _
                $region64: #{gat_forward.7} parent=58 // loop_footer
                  %s289 = sadd.s32 1, %s285
                $region65: #{gat_forward.7} parent=58 // loop_footer_branch
                  %284 = sbr.rel target = $region61
                $region66: #{gat_forward.7} parent=58 // loop_exit
                  _
                %s293 = ssub.s32 16, 1
                loop: start=0, step=1, limit=1
                $region67: #{gat_forward.7} parent=58 // loop_pre_header
                  _
                $region68: #{gat_forward.7} parent=58 // loop_header
                  %s295 = sphi 0, %s299
                  %p296 = scmp.ge.s32.totalorder %s295, 1
                  %s300 = sphi %s233, %s233
                  %s301 = sphi %s228, %s228
                $region69: #{gat_forward.7} parent=58 // loop_header_branch
                  %298 = sbr.rel (%p296) target = $region73
                $region70: #{gat_forward.7} parent=58 // loop_body
                  %v302 = vld [vmem:[%s300] sm:%s293]
                  %303 = vst [vmem:[%s301] sm:%s293] %v302
                  %v304 = vld [vmem:[%s300 + $0x8] sm:%s293]
                  %305 = vst [vmem:[%s301 + $0x4] sm:%s293] %v304
                  %v306 = vld [vmem:[%s300 + $0x10] sm:%s293]
                  %307 = vst [vmem:[%s301 + $0x8] sm:%s293] %v306
                  %v308 = vld [vmem:[%s300 + $0x18] sm:%s293]
                  %309 = vst [vmem:[%s301 + $0xc] sm:%s293] %v308
                  %v310 = vld [vmem:[%s300 + $0x20] sm:%s293]
                  %311 = vst [vmem:[%s301 + $0x10] sm:%s293] %v310
                  %v312 = vld [vmem:[%s300 + $0x28] sm:%s293]
                  %313 = vst [vmem:[%s301 + $0x14] sm:%s293] %v312
                  %v314 = vld [vmem:[%s300 + $0x30] sm:%s293]
                  %315 = vst [vmem:[%s301 + $0x18] sm:%s293] %v314
                  %v316 = vld [vmem:[%s300 + $0x38] sm:%s293]
                  %317 = vst [vmem:[%s301 + $0x1c] sm:%s293] %v316
                  %v318 = vld [vmem:[%s300 + $0x40] sm:%s293]
                  %319 = vst [vmem:[%s301 + $0x20] sm:%s293] %v318
                  %v320 = vld [vmem:[%s300 + $0x48] sm:%s293]
                  %321 = vst [vmem:[%s301 + $0x24] sm:%s293] %v320
                  %v322 = vld [vmem:[%s300 + $0x50] sm:%s293]
                  %323 = vst [vmem:[%s301 + $0x28] sm:%s293] %v322
                  %v324 = vld [vmem:[%s300 + $0x58] sm:%s293]
                  %325 = vst [vmem:[%s301 + $0x2c] sm:%s293] %v324
                  %v326 = vld [vmem:[%s300 + $0x60] sm:%s293]
                  %327 = vst [vmem:[%s301 + $0x30] sm:%s293] %v326
                  %v328 = vld [vmem:[%s300 + $0x68] sm:%s293]
                  %329 = vst [vmem:[%s301 + $0x34] sm:%s293] %v328
                  %v330 = vld [vmem:[%s300 + $0x70] sm:%s293]
                  %331 = vst [vmem:[%s301 + $0x38] sm:%s293] %v330
                  %v332 = vld [vmem:[%s300 + $0x78] sm:%s293]
                  %333 = vst [vmem:[%s301 + $0x3c] sm:%s293] %v332
                $region71: #{gat_forward.7} parent=58 // loop_footer
                  %s299 = sadd.s32 1, %s295
                $region72: #{gat_forward.7} parent=58 // loop_footer_branch
                  %294 = sbr.rel target = $region68
                $region73: #{gat_forward.7} parent=58 // loop_exit
                  _
              $region59: #{gat_forward.7} parent=43 // pred_fallthru
                _
            $region44: #{gat_forward.7} parent=39 // pred_fallthru
              _
            // Predicated region
            $region45: #{gat_forward.7} parent=39 // pred_check
              _
            $region46: #{gat_forward.7} parent=39 // pred_check_branch
              %239 = sbr.rel (0) target = $region48
            $region47: #{gat_forward.7} parent=39 // pred_region
              %s241 = ssub.s32 16, 1
              loop: start=0, step=1, limit=1
              $region49: #{gat_forward.7} parent=47 // loop_pre_header
                _
              $region50: #{gat_forward.7} parent=47 // loop_header
                %s243 = sphi 0, %s247
                %p244 = scmp.ge.s32.totalorder %s243, 1
                %s248 = sphi %s233, %s233
                %s249 = sphi %s228, %s228
              $region51: #{gat_forward.7} parent=47 // loop_header_branch
                %246 = sbr.rel (%p244) target = $region55
              $region52: #{gat_forward.7} parent=47 // loop_body
                %v250 = vld [vmem:[%s248] sm:%s241]
                %251 = vst [vmem:[%s249] sm:%s241] %v250
                %v252 = vld [vmem:[%s248 + $0x8] sm:%s241]
                %253 = vst [vmem:[%s249 + $0x4] sm:%s241] %v252
                %v254 = vld [vmem:[%s248 + $0x10] sm:%s241]
                %255 = vst [vmem:[%s249 + $0x8] sm:%s241] %v254
                %v256 = vld [vmem:[%s248 + $0x18] sm:%s241]
                %257 = vst [vmem:[%s249 + $0xc] sm:%s241] %v256
                %v258 = vld [vmem:[%s248 + $0x20] sm:%s241]
                %259 = vst [vmem:[%s249 + $0x10] sm:%s241] %v258
                %v260 = vld [vmem:[%s248 + $0x28] sm:%s241]
                %261 = vst [vmem:[%s249 + $0x14] sm:%s241] %v260
                %v262 = vld [vmem:[%s248 + $0x30] sm:%s241]
                %263 = vst [vmem:[%s249 + $0x18] sm:%s241] %v262
                %v264 = vld [vmem:[%s248 + $0x38] sm:%s241]
                %265 = vst [vmem:[%s249 + $0x1c] sm:%s241] %v264
                %v266 = vld [vmem:[%s248 + $0x40] sm:%s241]
                %267 = vst [vmem:[%s249 + $0x20] sm:%s241] %v266
                %v268 = vld [vmem:[%s248 + $0x48] sm:%s241]
                %269 = vst [vmem:[%s249 + $0x24] sm:%s241] %v268
                %v270 = vld [vmem:[%s248 + $0x50] sm:%s241]
                %271 = vst [vmem:[%s249 + $0x28] sm:%s241] %v270
                %v272 = vld [vmem:[%s248 + $0x58] sm:%s241]
                %273 = vst [vmem:[%s249 + $0x2c] sm:%s241] %v272
                %v274 = vld [vmem:[%s248 + $0x60] sm:%s241]
                %275 = vst [vmem:[%s249 + $0x30] sm:%s241] %v274
                %v276 = vld [vmem:[%s248 + $0x68] sm:%s241]
                %277 = vst [vmem:[%s249 + $0x34] sm:%s241] %v276
                %v278 = vld [vmem:[%s248 + $0x70] sm:%s241]
                %279 = vst [vmem:[%s249 + $0x38] sm:%s241] %v278
                %v280 = vld [vmem:[%s248 + $0x78] sm:%s241]
                %281 = vst [vmem:[%s249 + $0x3c] sm:%s241] %v280
              $region53: #{gat_forward.7} parent=47 // loop_footer
                %s247 = sadd.s32 1, %s243
              $region54: #{gat_forward.7} parent=47 // loop_footer_branch
                %242 = sbr.rel target = $region50
              $region55: #{gat_forward.7} parent=47 // loop_exit
                _
            $region48: #{gat_forward.7} parent=39 // pred_fallthru
              _
          $region40: #{gat_forward.7} parent=35 // pred_fallthru
            _
          %334 = vnop
        $region36: #{gat_forward.7} parent=19 // pred_fallthru
          _
      $region20: #{gat_forward.7} parent=5 // pred_fallthru
        _
      %p335 = scmp.le.s32.totalorder 1, %s11
      %p336 = scmp.lt.s32.totalorder %s11, 5
      %p337 = pnand %p335, %p336
      %p338 = pneg %p337
      // Predicated region
      $region74: #{gat_forward.7} parent=5 // pred_check
        _
      $region75: #{gat_forward.7} parent=5 // pred_check_branch
        %340 = sbr.rel (%p337) target = $region77
      $region76: #{gat_forward.7} parent=5 // pred_region
        %s341 = ssub.s32 %s11, 1
        %s342 = sand.u32 %s116, 1
        %s343 = sand.u32 %s116, 1
        %s344 = smul.addr %s343, 64
        %s345 = scalar_lea.vmem [#allocation5], %s344
        // Predicated region
        $region78: #{gat_forward.7} parent=76 // pred_check
          %p346 = pneg %p129
        $region79: #{gat_forward.7} parent=76 // pred_check_branch
          %348 = sbr.rel (%p346) target = $region81
        $region80: #{gat_forward.7} parent=76 // pred_region
          _
        $region81: #{gat_forward.7} parent=76 // pred_fallthru
          _
        %s349 = smul.u32 16, %s20
        %p350 = scmp.lt.s32.totalorder %s349, 31
        %s351 = scalar_select %p350, %s349, 31
        %s352 = smul.addr %s351, 8
        %s353 = scalar_lea.vmem %s0, %s352
        %p354 = pneg %p49
        %p355 = pneg %p46
        %p356 = scmp.lt.s32.totalorder %s21, 1
        %s357 = scalar_select %p356, %s21, 1
        %s358 = scalar_lea.vmem %s1, %s357
        %p359 = pneg %p75
        %p360 = pneg %p72
        %s361 = smul.u32 16, %s21
        %p362 = scmp.lt.s32.totalorder %s361, 31
        %s363 = scalar_select %p362, %s361, 31
        %s364 = smul.addr %s363, 4
        %s365 = scalar_lea.vmem %s2, %s364
        %p366 = pneg %p101
        %p367 = pneg %p98
        %s368 = sand.u32 %s116, 1
        %s369 = sand.u32 %s116, 1
        %s370 = smul.addr %s369, 64
        %s371 = scalar_lea.vmem [#allocation5], %s370
        %p372 = pneg %p129
        %p373 = pneg %p126
        %p374 = pneg %p150
        %p375 = pneg %p147
        %p376 = pneg %p176
        %p377 = pneg %p173
        %s378 = smul.u32 16, %s20
        %p379 = scmp.lt.s32.totalorder %s378, 31
        %s380 = scalar_select %p379, %s378, 31
        %s381 = smul.addr %s380, 8
        %s382 = scalar_lea.vmem %s5, %s381
        %s383 = smul.u32 16, %s20
        %p384 = scmp.lt.s32.totalorder %s383, 31
        %s385 = scalar_select %p384, %s383, 31
        %s386 = smul.addr %s385, 8
        %s387 = scalar_lea.vmem %s0, %s386
        %s388 = smul.u32 16, %s20
        %p389 = scmp.lt.s32.totalorder %s21, 1
        %s390 = scalar_select %p389, %s21, 1
        %s391 = scalar_lea.vmem %s1, %s390
        %s392 = smul.u32 16, %s21
        %p393 = scmp.lt.s32.totalorder %s392, 31
        %s394 = scalar_select %p393, %s392, 31
        %s395 = smul.addr %s394, 4
        %s396 = scalar_lea.vmem %s2, %s395
        %s397 = smul.u32 16, %s21
        %s398 = smul.u32 16, %s20
        %s399 = smul.u32 16, %s20
        %p400 = scmp.lt.s32.totalorder %s399, 31
        %s401 = scalar_select %p400, %s399, 31
        %s402 = smul.addr %s401, 8
        %s403 = scalar_lea.vmem %s5, %s402
        %s404 = smul.u32 16, %s20
        %p405 = scmp.eq.s32.totalorder %s21, 0
        // Predicated region
        $region82: #{gat_forward.7} parent=76 // pred_check
          %p406 = pneg %p405
        $region83: #{gat_forward.7} parent=76 // pred_check_branch
          %408 = sbr.rel (%p406) target = $region85
        $region84: #{gat_forward.7} parent=76 // pred_region
          %vm409 = vcmask 7168
          %410 = vst.msk [vmem:[#allocation2] sm:$0xff] %vm409, -1e+30
          %411 = vst.msk [vmem:[#allocation2 + $0x8] sm:$0xff] %vm409, -1e+30
          %412 = vst.msk [vmem:[#allocation2 + $0x10] sm:$0xff] %vm409, -1e+30
          %413 = vst.msk [vmem:[#allocation2 + $0x18] sm:$0xff] %vm409, -1e+30
          %414 = vst.msk [vmem:[#allocation2 + $0x20] sm:$0xff] %vm409, -1e+30
          %415 = vst.msk [vmem:[#allocation2 + $0x28] sm:$0xff] %vm409, -1e+30
          %416 = vst.msk [vmem:[#allocation2 + $0x30] sm:$0xff] %vm409, -1e+30
          %417 = vst.msk [vmem:[#allocation2 + $0x38] sm:$0xff] %vm409, -1e+30
          %418 = vst.msk [vmem:[#allocation2 + $0x40] sm:$0xff] %vm409, -1e+30
          %419 = vst.msk [vmem:[#allocation2 + $0x48] sm:$0xff] %vm409, -1e+30
          %420 = vst.msk [vmem:[#allocation2 + $0x50] sm:$0xff] %vm409, -1e+30
          %421 = vst.msk [vmem:[#allocation2 + $0x58] sm:$0xff] %vm409, -1e+30
          %422 = vst.msk [vmem:[#allocation2 + $0x60] sm:$0xff] %vm409, -1e+30
          %423 = vst.msk [vmem:[#allocation2 + $0x68] sm:$0xff] %vm409, -1e+30
          %424 = vst.msk [vmem:[#allocation2 + $0x70] sm:$0xff] %vm409, -1e+30
          %425 = vst.msk [vmem:[#allocation2 + $0x78] sm:$0xff] %vm409, -1e+30
          %426 = vst.msk [vmem:[#allocation3] sm:$0xff] %vm409, 0.0
          %427 = vst.msk [vmem:[#allocation3 + $0x8] sm:$0xff] %vm409, 0.0
          %428 = vst.msk [vmem:[#allocation3 + $0x10] sm:$0xff] %vm409, 0.0
          %429 = vst.msk [vmem:[#allocation3 + $0x18] sm:$0xff] %vm409, 0.0
          %430 = vst.msk [vmem:[#allocation3 + $0x20] sm:$0xff] %vm409, 0.0
          %431 = vst.msk [vmem:[#allocation3 + $0x28] sm:$0xff] %vm409, 0.0
          %432 = vst.msk [vmem:[#allocation3 + $0x30] sm:$0xff] %vm409, 0.0
          %433 = vst.msk [vmem:[#allocation3 + $0x38] sm:$0xff] %vm409, 0.0
          %434 = vst.msk [vmem:[#allocation3 + $0x40] sm:$0xff] %vm409, 0.0
          %435 = vst.msk [vmem:[#allocation3 + $0x48] sm:$0xff] %vm409, 0.0
          %436 = vst.msk [vmem:[#allocation3 + $0x50] sm:$0xff] %vm409, 0.0
          %437 = vst.msk [vmem:[#allocation3 + $0x58] sm:$0xff] %vm409, 0.0
          %438 = vst.msk [vmem:[#allocation3 + $0x60] sm:$0xff] %vm409, 0.0
          %439 = vst.msk [vmem:[#allocation3 + $0x68] sm:$0xff] %vm409, 0.0
          %440 = vst.msk [vmem:[#allocation3 + $0x70] sm:$0xff] %vm409, 0.0
          %441 = vst.msk [vmem:[#allocation3 + $0x78] sm:$0xff] %vm409, 0.0
          %442 = vst [vmem:[#allocation4] sm:$0xff] 0.0
          %443 = vst [vmem:[#allocation4 + $0x8] sm:$0xff] 0.0
          %444 = vst [vmem:[#allocation4 + $0x10] sm:$0xff] 0.0
          %445 = vst [vmem:[#allocation4 + $0x18] sm:$0xff] 0.0
          %446 = vst [vmem:[#allocation4 + $0x20] sm:$0xff] 0.0
          %447 = vst [vmem:[#allocation4 + $0x28] sm:$0xff] 0.0
          %448 = vst [vmem:[#allocation4 + $0x30] sm:$0xff] 0.0
          %449 = vst [vmem:[#allocation4 + $0x38] sm:$0xff] 0.0
          %450 = vst [vmem:[#allocation4 + $0x40] sm:$0xff] 0.0
          %451 = vst [vmem:[#allocation4 + $0x48] sm:$0xff] 0.0
          %452 = vst [vmem:[#allocation4 + $0x50] sm:$0xff] 0.0
          %453 = vst [vmem:[#allocation4 + $0x58] sm:$0xff] 0.0
          %454 = vst [vmem:[#allocation4 + $0x60] sm:$0xff] 0.0
          %455 = vst [vmem:[#allocation4 + $0x68] sm:$0xff] 0.0
          %456 = vst [vmem:[#allocation4 + $0x70] sm:$0xff] 0.0
          %457 = vst [vmem:[#allocation4 + $0x78] sm:$0xff] 0.0
        $region85: #{gat_forward.7} parent=76 // pred_fallthru
          _
        %v458 = vld [vmem:[%s387] sm:$0xff]
        %v459 = vld [vmem:[%s387 + $0x8] sm:$0xff]
        %v460 = vld [vmem:[%s387 + $0x10] sm:$0xff]
        %v461 = vld [vmem:[%s387 + $0x18] sm:$0xff]
        %v462 = vld [vmem:[%s387 + $0x20] sm:$0xff]
        %v463 = vld [vmem:[%s387 + $0x28] sm:$0xff]
        %v464 = vld [vmem:[%s387 + $0x30] sm:$0xff]
        %v465 = vld [vmem:[%s387 + $0x38] sm:$0xff]
        %v466 = vld [vmem:[%s387 + $0x40] sm:$0xff]
        %v467 = vld [vmem:[%s387 + $0x48] sm:$0xff]
        %v468 = vld [vmem:[%s387 + $0x50] sm:$0xff]
        %v469 = vld [vmem:[%s387 + $0x58] sm:$0xff]
        %v470 = vld [vmem:[%s387 + $0x60] sm:$0xff]
        %v471 = vld [vmem:[%s387 + $0x68] sm:$0xff]
        %v472 = vld [vmem:[%s387 + $0x70] sm:$0xff]
        %v473 = vld [vmem:[%s387 + $0x78] sm:$0xff]
        %v474 = vld [vmem:[%s391] sm:$0x1]
        %476 = vset.pattern.permute.xlu0 0
        %477 = vperm.xlu0 %476, %v458
        %v478 = vpop.permute.xlu0 %477
        %481 = vset.pattern.permute.xlu0 0
        %482 = vperm.xlu0 %481, %v459
        %v483 = vpop.permute.xlu0 %482
        %486 = vset.pattern.permute.xlu0 0
        %487 = vperm.xlu0 %486, %v460
        %v488 = vpop.permute.xlu0 %487
        %491 = vset.pattern.permute.xlu0 0
        %492 = vperm.xlu0 %491, %v461
        %v493 = vpop.permute.xlu0 %492
        %496 = vset.pattern.permute.xlu0 0
        %497 = vperm.xlu0 %496, %v462
        %v498 = vpop.permute.xlu0 %497
        %501 = vset.pattern.permute.xlu0 0
        %502 = vperm.xlu0 %501, %v463
        %v503 = vpop.permute.xlu0 %502
        %506 = vset.pattern.permute.xlu0 0
        %507 = vperm.xlu0 %506, %v464
        %v508 = vpop.permute.xlu0 %507
        %511 = vset.pattern.permute.xlu0 0
        %512 = vperm.xlu0 %511, %v465
        %v513 = vpop.permute.xlu0 %512
        %516 = vset.pattern.permute.xlu0 0
        %517 = vperm.xlu0 %516, %v466
        %v518 = vpop.permute.xlu0 %517
        %521 = vset.pattern.permute.xlu0 0
        %522 = vperm.xlu0 %521, %v467
        %v523 = vpop.permute.xlu0 %522
        %526 = vset.pattern.permute.xlu0 0
        %527 = vperm.xlu0 %526, %v468
        %v528 = vpop.permute.xlu0 %527
        %531 = vset.pattern.permute.xlu0 0
        %532 = vperm.xlu0 %531, %v469
        %v533 = vpop.permute.xlu0 %532
        %536 = vset.pattern.permute.xlu0 0
        %537 = vperm.xlu0 %536, %v470
        %v538 = vpop.permute.xlu0 %537
        %541 = vset.pattern.permute.xlu0 0
        %542 = vperm.xlu0 %541, %v471
        %v543 = vpop.permute.xlu0 %542
        %546 = vset.pattern.permute.xlu0 0
        %547 = vperm.xlu0 %546, %v472
        %v548 = vpop.permute.xlu0 %547
        %551 = vset.pattern.permute.xlu0 0
        %552 = vperm.xlu0 %551, %v473
        %v553 = vpop.permute.xlu0 %552
        %v556 = vperm.slane %v474, 0
        %v558 = vadd.f32 %v478, %v556
        %v559 = vadd.f32 %v483, %v556
        %v560 = vadd.f32 %v488, %v556
        %v561 = vadd.f32 %v493, %v556
        %v562 = vadd.f32 %v498, %v556
        %v563 = vadd.f32 %v503, %v556
        %v564 = vadd.f32 %v508, %v556
        %v565 = vadd.f32 %v513, %v556
        %v566 = vadd.f32 %v518, %v556
        %v567 = vadd.f32 %v523, %v556
        %v568 = vadd.f32 %v528, %v556
        %v569 = vadd.f32 %v533, %v556
        %v570 = vadd.f32 %v538, %v556
        %v571 = vadd.f32 %v543, %v556
        %v572 = vadd.f32 %v548, %v556
        %v573 = vadd.f32 %v553, %v556
        %v574 = vmul.f32 %v558, 0.2
        %v575 = vmul.f32 %v559, 0.2
        %v576 = vmul.f32 %v560, 0.2
        %v577 = vmul.f32 %v561, 0.2
        %v578 = vmul.f32 %v562, 0.2
        %v579 = vmul.f32 %v563, 0.2
        %v580 = vmul.f32 %v564, 0.2
        %v581 = vmul.f32 %v565, 0.2
        %v582 = vmul.f32 %v566, 0.2
        %v583 = vmul.f32 %v567, 0.2
        %v584 = vmul.f32 %v568, 0.2
        %v585 = vmul.f32 %v569, 0.2
        %v586 = vmul.f32 %v570, 0.2
        %v587 = vmul.f32 %v571, 0.2
        %v588 = vmul.f32 %v572, 0.2
        %v589 = vmul.f32 %v573, 0.2
        %v590 = vmax.f32 %v558, %v574
        %v591 = vmax.f32 %v559, %v575
        %v592 = vmax.f32 %v560, %v576
        %v593 = vmax.f32 %v561, %v577
        %v594 = vmax.f32 %v562, %v578
        %v595 = vmax.f32 %v563, %v579
        %v596 = vmax.f32 %v564, %v580
        %v597 = vmax.f32 %v565, %v581
        %v598 = vmax.f32 %v566, %v582
        %v599 = vmax.f32 %v567, %v583
        %v600 = vmax.f32 %v568, %v584
        %v601 = vmax.f32 %v569, %v585
        %v602 = vmax.f32 %v570, %v586
        %v603 = vmax.f32 %v571, %v587
        %v604 = vmax.f32 %v572, %v588
        %v605 = vmax.f32 %v573, %v589
        %v606 = vld [vmem:[%s345] sm:$0xf]
        %v607 = vld [vmem:[%s345 + $0x4] sm:$0xf]
        %v608 = vld [vmem:[%s345 + $0x8] sm:$0xf]
        %v609 = vld [vmem:[%s345 + $0xc] sm:$0xf]
        %v610 = vld [vmem:[%s345 + $0x10] sm:$0xf]
        %v611 = vld [vmem:[%s345 + $0x14] sm:$0xf]
        %v612 = vld [vmem:[%s345 + $0x18] sm:$0xf]
        %v613 = vld [vmem:[%s345 + $0x1c] sm:$0xf]
        %v614 = vld [vmem:[%s345 + $0x20] sm:$0xf]
        %v615 = vld [vmem:[%s345 + $0x24] sm:$0xf]
        %v616 = vld [vmem:[%s345 + $0x28] sm:$0xf]
        %v617 = vld [vmem:[%s345 + $0x2c] sm:$0xf]
        %v618 = vld [vmem:[%s345 + $0x30] sm:$0xf]
        %v619 = vld [vmem:[%s345 + $0x34] sm:$0xf]
        %v620 = vld [vmem:[%s345 + $0x38] sm:$0xf]
        %v621 = vld [vmem:[%s345 + $0x3c] sm:$0xf]
        %v622 = vunpack.c.l.bf16 %v606
        %v623 = vunpack.c.l.bf16 %v607
        %v624 = vunpack.c.l.bf16 %v608
        %v625 = vunpack.c.l.bf16 %v609
        %v626 = vunpack.c.l.bf16 %v610
        %v627 = vunpack.c.l.bf16 %v611
        %v628 = vunpack.c.l.bf16 %v612
        %v629 = vunpack.c.l.bf16 %v613
        %v630 = vunpack.c.l.bf16 %v614
        %v631 = vunpack.c.l.bf16 %v615
        %v632 = vunpack.c.l.bf16 %v616
        %v633 = vunpack.c.l.bf16 %v617
        %v634 = vunpack.c.l.bf16 %v618
        %v635 = vunpack.c.l.bf16 %v619
        %v636 = vunpack.c.l.bf16 %v620
        %v637 = vunpack.c.l.bf16 %v621
        %v638 = vadd.f32 %v590, %v622
        %v639 = vadd.f32 %v591, %v623
        %v640 = vadd.f32 %v592, %v624
        %v641 = vadd.f32 %v593, %v625
        %v642 = vadd.f32 %v594, %v626
        %v643 = vadd.f32 %v595, %v627
        %v644 = vadd.f32 %v596, %v628
        %v645 = vadd.f32 %v597, %v629
        %v646 = vadd.f32 %v598, %v630
        %v647 = vadd.f32 %v599, %v631
        %v648 = vadd.f32 %v600, %v632
        %v649 = vadd.f32 %v601, %v633
        %v650 = vadd.f32 %v602, %v634
        %v651 = vadd.f32 %v603, %v635
        %v652 = vadd.f32 %v604, %v636
        %v653 = vadd.f32 %v605, %v637
        %v654 = vld [vmem:[#allocation2] sm:$0xff]
        %v655 = vld [vmem:[#allocation2 + $0x8] sm:$0xff]
        %v656 = vld [vmem:[#allocation2 + $0x10] sm:$0xff]
        %v657 = vld [vmem:[#allocation2 + $0x18] sm:$0xff]
        %v658 = vld [vmem:[#allocation2 + $0x20] sm:$0xff]
        %v659 = vld [vmem:[#allocation2 + $0x28] sm:$0xff]
        %v660 = vld [vmem:[#allocation2 + $0x30] sm:$0xff]
        %v661 = vld [vmem:[#allocation2 + $0x38] sm:$0xff]
        %v662 = vld [vmem:[#allocation2 + $0x40] sm:$0xff]
        %v663 = vld [vmem:[#allocation2 + $0x48] sm:$0xff]
        %v664 = vld [vmem:[#allocation2 + $0x50] sm:$0xff]
        %v665 = vld [vmem:[#allocation2 + $0x58] sm:$0xff]
        %v666 = vld [vmem:[#allocation2 + $0x60] sm:$0xff]
        %v667 = vld [vmem:[#allocation2 + $0x68] sm:$0xff]
        %v668 = vld [vmem:[#allocation2 + $0x70] sm:$0xff]
        %v669 = vld [vmem:[#allocation2 + $0x78] sm:$0xff]
        %670 = vmax.xlane.f32.xlu0 %v638
        %v671 = vpop.xlane.xlu0 %670
        %672 = vmax.xlane.f32.xlu0 %v639
        %v673 = vpop.xlane.xlu0 %672
        %674 = vmax.xlane.f32.xlu0 %v640
        %v675 = vpop.xlane.xlu0 %674
        %676 = vmax.xlane.f32.xlu0 %v641
        %v677 = vpop.xlane.xlu0 %676
        %678 = vmax.xlane.f32.xlu0 %v642
        %v679 = vpop.xlane.xlu0 %678
        %680 = vmax.xlane.f32.xlu0 %v643
        %v681 = vpop.xlane.xlu0 %680
        %682 = vmax.xlane.f32.xlu0 %v644
        %v683 = vpop.xlane.xlu0 %682
        %684 = vmax.xlane.f32.xlu0 %v645
        %v685 = vpop.xlane.xlu0 %684
        %686 = vmax.xlane.f32.xlu0 %v646
        %v687 = vpop.xlane.xlu0 %686
        %688 = vmax.xlane.f32.xlu0 %v647
        %v689 = vpop.xlane.xlu0 %688
        %690 = vmax.xlane.f32.xlu0 %v648
        %v691 = vpop.xlane.xlu0 %690
        %692 = vmax.xlane.f32.xlu0 %v649
        %v693 = vpop.xlane.xlu0 %692
        %694 = vmax.xlane.f32.xlu0 %v650
        %v695 = vpop.xlane.xlu0 %694
        %696 = vmax.xlane.f32.xlu0 %v651
        %v697 = vpop.xlane.xlu0 %696
        %698 = vmax.xlane.f32.xlu0 %v652
        %v699 = vpop.xlane.xlu0 %698
        %700 = vmax.xlane.f32.xlu0 %v653
        %v701 = vpop.xlane.xlu0 %700
        %v702 = vmax.f32 %v654, %v671
        %v703 = vmax.f32 %v655, %v673
        %v704 = vmax.f32 %v656, %v675
        %v705 = vmax.f32 %v657, %v677
        %v706 = vmax.f32 %v658, %v679
        %v707 = vmax.f32 %v659, %v681
        %v708 = vmax.f32 %v660, %v683
        %v709 = vmax.f32 %v661, %v685
        %v710 = vmax.f32 %v662, %v687
        %v711 = vmax.f32 %v663, %v689
        %v712 = vmax.f32 %v664, %v691
        %v713 = vmax.f32 %v665, %v693
        %v714 = vmax.f32 %v666, %v695
        %v715 = vmax.f32 %v667, %v697
        %v716 = vmax.f32 %v668, %v699
        %v717 = vmax.f32 %v669, %v701
        %v718 = vsub.f32 %v654, %v702
        %v719 = vsub.f32 %v655, %v703
        %v720 = vsub.f32 %v656, %v704
        %v721 = vsub.f32 %v657, %v705
        %v722 = vsub.f32 %v658, %v706
        %v723 = vsub.f32 %v659, %v707
        %v724 = vsub.f32 %v660, %v708
        %v725 = vsub.f32 %v661, %v709
        %v726 = vsub.f32 %v662, %v710
        %v727 = vsub.f32 %v663, %v711
        %v728 = vsub.f32 %v664, %v712
        %v729 = vsub.f32 %v665, %v713
        %v730 = vsub.f32 %v666, %v714
        %v731 = vsub.f32 %v667, %v715
        %v732 = vsub.f32 %v668, %v716
        %v733 = vsub.f32 %v669, %v717
        %v734 = vmul.f32 %v718, 1.442695
        %v735 = vpow.pop %v734
        %v736 = vmul.f32 %v719, 1.442695
        %v737 = vpow.pop %v736
        %v738 = vmul.f32 %v720, 1.442695
        %v739 = vpow.pop %v738
        %v740 = vmul.f32 %v721, 1.442695
        %v741 = vpow.pop %v740
        %v742 = vmul.f32 %v722, 1.442695
        %v743 = vpow.pop %v742
        %v744 = vmul.f32 %v723, 1.442695
        %v745 = vpow.pop %v744
        %v746 = vmul.f32 %v724, 1.442695
        %v747 = vpow.pop %v746
        %v748 = vmul.f32 %v725, 1.442695
        %v749 = vpow.pop %v748
        %v750 = vmul.f32 %v726, 1.442695
        %v751 = vpow.pop %v750
        %v752 = vmul.f32 %v727, 1.442695
        %v753 = vpow.pop %v752
        %v754 = vmul.f32 %v728, 1.442695
        %v755 = vpow.pop %v754
        %v756 = vmul.f32 %v729, 1.442695
        %v757 = vpow.pop %v756
        %v758 = vmul.f32 %v730, 1.442695
        %v759 = vpow.pop %v758
        %v760 = vmul.f32 %v731, 1.442695
        %v761 = vpow.pop %v760
        %v762 = vmul.f32 %v732, 1.442695
        %v763 = vpow.pop %v762
        %v764 = vmul.f32 %v733, 1.442695
        %v765 = vpow.pop %v764
        %767 = vset.pattern.permute.xlu0 0
        %768 = vperm.xlu0 %767, %v702
        %v769 = vpop.permute.xlu0 %768
        %772 = vset.pattern.permute.xlu0 0
        %773 = vperm.xlu0 %772, %v703
        %v774 = vpop.permute.xlu0 %773
        %777 = vset.pattern.permute.xlu0 0
        %778 = vperm.xlu0 %777, %v704
        %v779 = vpop.permute.xlu0 %778
        %782 = vset.pattern.permute.xlu0 0
        %783 = vperm.xlu0 %782, %v705
        %v784 = vpop.permute.xlu0 %783
        %787 = vset.pattern.permute.xlu0 0
        %788 = vperm.xlu0 %787, %v706
        %v789 = vpop.permute.xlu0 %788
        %792 = vset.pattern.permute.xlu0 0
        %793 = vperm.xlu0 %792, %v707
        %v794 = vpop.permute.xlu0 %793
        %797 = vset.pattern.permute.xlu0 0
        %798 = vperm.xlu0 %797, %v708
        %v799 = vpop.permute.xlu0 %798
        %802 = vset.pattern.permute.xlu0 0
        %803 = vperm.xlu0 %802, %v709
        %v804 = vpop.permute.xlu0 %803
        %807 = vset.pattern.permute.xlu0 0
        %808 = vperm.xlu0 %807, %v710
        %v809 = vpop.permute.xlu0 %808
        %812 = vset.pattern.permute.xlu0 0
        %813 = vperm.xlu0 %812, %v711
        %v814 = vpop.permute.xlu0 %813
        %817 = vset.pattern.permute.xlu0 0
        %818 = vperm.xlu0 %817, %v712
        %v819 = vpop.permute.xlu0 %818
        %822 = vset.pattern.permute.xlu0 0
        %823 = vperm.xlu0 %822, %v713
        %v824 = vpop.permute.xlu0 %823
        %827 = vset.pattern.permute.xlu0 0
        %828 = vperm.xlu0 %827, %v714
        %v829 = vpop.permute.xlu0 %828
        %832 = vset.pattern.permute.xlu0 0
        %833 = vperm.xlu0 %832, %v715
        %v834 = vpop.permute.xlu0 %833
        %837 = vset.pattern.permute.xlu0 0
        %838 = vperm.xlu0 %837, %v716
        %v839 = vpop.permute.xlu0 %838
        %842 = vset.pattern.permute.xlu0 0
        %843 = vperm.xlu0 %842, %v717
        %v844 = vpop.permute.xlu0 %843
        %v846 = vsub.f32 %v638, %v769
        %v847 = vsub.f32 %v639, %v774
        %v848 = vsub.f32 %v640, %v779
        %v849 = vsub.f32 %v641, %v784
        %v850 = vsub.f32 %v642, %v789
        %v851 = vsub.f32 %v643, %v794
        %v852 = vsub.f32 %v644, %v799
        %v853 = vsub.f32 %v645, %v804
        %v854 = vsub.f32 %v646, %v809
        %v855 = vsub.f32 %v647, %v814
        %v856 = vsub.f32 %v648, %v819
        %v857 = vsub.f32 %v649, %v824
        %v858 = vsub.f32 %v650, %v829
        %v859 = vsub.f32 %v651, %v834
        %v860 = vsub.f32 %v652, %v839
        %v861 = vsub.f32 %v653, %v844
        %v862 = vmul.f32 %v846, 1.442695
        %v863 = vpow.pop %v862
        %v864 = vmul.f32 %v847, 1.442695
        %v865 = vpow.pop %v864
        %v866 = vmul.f32 %v848, 1.442695
        %v867 = vpow.pop %v866
        %v868 = vmul.f32 %v849, 1.442695
        %v869 = vpow.pop %v868
        %v870 = vmul.f32 %v850, 1.442695
        %v871 = vpow.pop %v870
        %v872 = vmul.f32 %v851, 1.442695
        %v873 = vpow.pop %v872
        %v874 = vmul.f32 %v852, 1.442695
        %v875 = vpow.pop %v874
        %v876 = vmul.f32 %v853, 1.442695
        %v877 = vpow.pop %v876
        %v878 = vmul.f32 %v854, 1.442695
        %v879 = vpow.pop %v878
        %v880 = vmul.f32 %v855, 1.442695
        %v881 = vpow.pop %v880
        %v882 = vmul.f32 %v856, 1.442695
        %v883 = vpow.pop %v882
        %v884 = vmul.f32 %v857, 1.442695
        %v885 = vpow.pop %v884
        %v886 = vmul.f32 %v858, 1.442695
        %v887 = vpow.pop %v886
        %v888 = vmul.f32 %v859, 1.442695
        %v889 = vpow.pop %v888
        %v890 = vmul.f32 %v860, 1.442695
        %v891 = vpow.pop %v890
        %v892 = vmul.f32 %v861, 1.442695
        %v893 = vpow.pop %v892
        %v894 = vld [vmem:[#allocation3] sm:$0xff]
        %v895 = vld [vmem:[#allocation3 + $0x8] sm:$0xff]
        %v896 = vld [vmem:[#allocation3 + $0x10] sm:$0xff]
        %v897 = vld [vmem:[#allocation3 + $0x18] sm:$0xff]
        %v898 = vld [vmem:[#allocation3 + $0x20] sm:$0xff]
        %v899 = vld [vmem:[#allocation3 + $0x28] sm:$0xff]
        %v900 = vld [vmem:[#allocation3 + $0x30] sm:$0xff]
        %v901 = vld [vmem:[#allocation3 + $0x38] sm:$0xff]
        %v902 = vld [vmem:[#allocation3 + $0x40] sm:$0xff]
        %v903 = vld [vmem:[#allocation3 + $0x48] sm:$0xff]
        %v904 = vld [vmem:[#allocation3 + $0x50] sm:$0xff]
        %v905 = vld [vmem:[#allocation3 + $0x58] sm:$0xff]
        %v906 = vld [vmem:[#allocation3 + $0x60] sm:$0xff]
        %v907 = vld [vmem:[#allocation3 + $0x68] sm:$0xff]
        %v908 = vld [vmem:[#allocation3 + $0x70] sm:$0xff]
        %v909 = vld [vmem:[#allocation3 + $0x78] sm:$0xff]
        %v910 = vmul.f32 %v735, %v894
        %v911 = vmul.f32 %v737, %v895
        %v912 = vmul.f32 %v739, %v896
        %v913 = vmul.f32 %v741, %v897
        %v914 = vmul.f32 %v743, %v898
        %v915 = vmul.f32 %v745, %v899
        %v916 = vmul.f32 %v747, %v900
        %v917 = vmul.f32 %v749, %v901
        %v918 = vmul.f32 %v751, %v902
        %v919 = vmul.f32 %v753, %v903
        %v920 = vmul.f32 %v755, %v904
        %v921 = vmul.f32 %v757, %v905
        %v922 = vmul.f32 %v759, %v906
        %v923 = vmul.f32 %v761, %v907
        %v924 = vmul.f32 %v763, %v908
        %v925 = vmul.f32 %v765, %v909
        %926 = vadd.xlane.f32.xlu0 %v863
        %v927 = vpop.xlane.xlu0 %926
        %928 = vadd.xlane.f32.xlu0 %v865
        %v929 = vpop.xlane.xlu0 %928
        %930 = vadd.xlane.f32.xlu0 %v867
        %v931 = vpop.xlane.xlu0 %930
        %932 = vadd.xlane.f32.xlu0 %v869
        %v933 = vpop.xlane.xlu0 %932
        %934 = vadd.xlane.f32.xlu0 %v871
        %v935 = vpop.xlane.xlu0 %934
        %936 = vadd.xlane.f32.xlu0 %v873
        %v937 = vpop.xlane.xlu0 %936
        %938 = vadd.xlane.f32.xlu0 %v875
        %v939 = vpop.xlane.xlu0 %938
        %940 = vadd.xlane.f32.xlu0 %v877
        %v941 = vpop.xlane.xlu0 %940
        %942 = vadd.xlane.f32.xlu0 %v879
        %v943 = vpop.xlane.xlu0 %942
        %944 = vadd.xlane.f32.xlu0 %v881
        %v945 = vpop.xlane.xlu0 %944
        %946 = vadd.xlane.f32.xlu0 %v883
        %v947 = vpop.xlane.xlu0 %946
        %948 = vadd.xlane.f32.xlu0 %v885
        %v949 = vpop.xlane.xlu0 %948
        %950 = vadd.xlane.f32.xlu0 %v887
        %v951 = vpop.xlane.xlu0 %950
        %952 = vadd.xlane.f32.xlu0 %v889
        %v953 = vpop.xlane.xlu0 %952
        %954 = vadd.xlane.f32.xlu0 %v891
        %v955 = vpop.xlane.xlu0 %954
        %956 = vadd.xlane.f32.xlu0 %v893
        %v957 = vpop.xlane.xlu0 %956
        %v958 = vadd.f32 %v910, %v927
        %v959 = vadd.f32 %v911, %v929
        %v960 = vadd.f32 %v912, %v931
        %v961 = vadd.f32 %v913, %v933
        %v962 = vadd.f32 %v914, %v935
        %v963 = vadd.f32 %v915, %v937
        %v964 = vadd.f32 %v916, %v939
        %v965 = vadd.f32 %v917, %v941
        %v966 = vadd.f32 %v918, %v943
        %v967 = vadd.f32 %v919, %v945
        %v968 = vadd.f32 %v920, %v947
        %v969 = vadd.f32 %v921, %v949
        %v970 = vadd.f32 %v922, %v951
        %v971 = vadd.f32 %v923, %v953
        %v972 = vadd.f32 %v924, %v955
        %v973 = vadd.f32 %v925, %v957
        %vm974 = vcmask 7168
        %975 = vst.msk [vmem:[#allocation3] sm:$0xff] %vm974, %v958
        %976 = vst.msk [vmem:[#allocation3 + $0x8] sm:$0xff] %vm974, %v959
        %977 = vst.msk [vmem:[#allocation3 + $0x10] sm:$0xff] %vm974, %v960
        %978 = vst.msk [vmem:[#allocation3 + $0x18] sm:$0xff] %vm974, %v961
        %979 = vst.msk [vmem:[#allocation3 + $0x20] sm:$0xff] %vm974, %v962
        %980 = vst.msk [vmem:[#allocation3 + $0x28] sm:$0xff] %vm974, %v963
        %981 = vst.msk [vmem:[#allocation3 + $0x30] sm:$0xff] %vm974, %v964
        %982 = vst.msk [vmem:[#allocation3 + $0x38] sm:$0xff] %vm974, %v965
        %983 = vst.msk [vmem:[#allocation3 + $0x40] sm:$0xff] %vm974, %v966
        %984 = vst.msk [vmem:[#allocation3 + $0x48] sm:$0xff] %vm974, %v967
        %985 = vst.msk [vmem:[#allocation3 + $0x50] sm:$0xff] %vm974, %v968
        %986 = vst.msk [vmem:[#allocation3 + $0x58] sm:$0xff] %vm974, %v969
        %987 = vst.msk [vmem:[#allocation3 + $0x60] sm:$0xff] %vm974, %v970
        %988 = vst.msk [vmem:[#allocation3 + $0x68] sm:$0xff] %vm974, %v971
        %989 = vst.msk [vmem:[#allocation3 + $0x70] sm:$0xff] %vm974, %v972
        %990 = vst.msk [vmem:[#allocation3 + $0x78] sm:$0xff] %vm974, %v973
        %v991 = vld [vmem:[#allocation4] sm:$0xff]
        %v992 = vld [vmem:[#allocation4 + $0x8] sm:$0xff]
        %v993 = vld [vmem:[#allocation4 + $0x10] sm:$0xff]
        %v994 = vld [vmem:[#allocation4 + $0x18] sm:$0xff]
        %v995 = vld [vmem:[#allocation4 + $0x20] sm:$0xff]
        %v996 = vld [vmem:[#allocation4 + $0x28] sm:$0xff]
        %v997 = vld [vmem:[#allocation4 + $0x30] sm:$0xff]
        %v998 = vld [vmem:[#allocation4 + $0x38] sm:$0xff]
        %v999 = vld [vmem:[#allocation4 + $0x40] sm:$0xff]
        %v1000 = vld [vmem:[#allocation4 + $0x48] sm:$0xff]
        %v1001 = vld [vmem:[#allocation4 + $0x50] sm:$0xff]
        %v1002 = vld [vmem:[#allocation4 + $0x58] sm:$0xff]
        %v1003 = vld [vmem:[#allocation4 + $0x60] sm:$0xff]
        %v1004 = vld [vmem:[#allocation4 + $0x68] sm:$0xff]
        %v1005 = vld [vmem:[#allocation4 + $0x70] sm:$0xff]
        %v1006 = vld [vmem:[#allocation4 + $0x78] sm:$0xff]
        %1008 = vset.pattern.permute.xlu0 0
        %1009 = vperm.xlu0 %1008, %v735
        %v1010 = vpop.permute.xlu0 %1009
        %1013 = vset.pattern.permute.xlu0 0
        %1014 = vperm.xlu0 %1013, %v737
        %v1015 = vpop.permute.xlu0 %1014
        %1018 = vset.pattern.permute.xlu0 0
        %1019 = vperm.xlu0 %1018, %v739
        %v1020 = vpop.permute.xlu0 %1019
        %1023 = vset.pattern.permute.xlu0 0
        %1024 = vperm.xlu0 %1023, %v741
        %v1025 = vpop.permute.xlu0 %1024
        %1028 = vset.pattern.permute.xlu0 0
        %1029 = vperm.xlu0 %1028, %v743
        %v1030 = vpop.permute.xlu0 %1029
        %1033 = vset.pattern.permute.xlu0 0
        %1034 = vperm.xlu0 %1033, %v745
        %v1035 = vpop.permute.xlu0 %1034
        %1038 = vset.pattern.permute.xlu0 0
        %1039 = vperm.xlu0 %1038, %v747
        %v1040 = vpop.permute.xlu0 %1039
        %1043 = vset.pattern.permute.xlu0 0
        %1044 = vperm.xlu0 %1043, %v749
        %v1045 = vpop.permute.xlu0 %1044
        %1048 = vset.pattern.permute.xlu0 0
        %1049 = vperm.xlu0 %1048, %v751
        %v1050 = vpop.permute.xlu0 %1049
        %1053 = vset.pattern.permute.xlu0 0
        %1054 = vperm.xlu0 %1053, %v753
        %v1055 = vpop.permute.xlu0 %1054
        %1058 = vset.pattern.permute.xlu0 0
        %1059 = vperm.xlu0 %1058, %v755
        %v1060 = vpop.permute.xlu0 %1059
        %1063 = vset.pattern.permute.xlu0 0
        %1064 = vperm.xlu0 %1063, %v757
        %v1065 = vpop.permute.xlu0 %1064
        %1068 = vset.pattern.permute.xlu0 0
        %1069 = vperm.xlu0 %1068, %v759
        %v1070 = vpop.permute.xlu0 %1069
        %1073 = vset.pattern.permute.xlu0 0
        %1074 = vperm.xlu0 %1073, %v761
        %v1075 = vpop.permute.xlu0 %1074
        %1078 = vset.pattern.permute.xlu0 0
        %1079 = vperm.xlu0 %1078, %v763
        %v1080 = vpop.permute.xlu0 %1079
        %1083 = vset.pattern.permute.xlu0 0
        %1084 = vperm.xlu0 %1083, %v765
        %v1085 = vpop.permute.xlu0 %1084
        %v1087 = vmul.f32 %v1010, %v991
        %v1088 = vmul.f32 %v1015, %v992
        %v1089 = vmul.f32 %v1020, %v993
        %v1090 = vmul.f32 %v1025, %v994
        %v1091 = vmul.f32 %v1030, %v995
        %v1092 = vmul.f32 %v1035, %v996
        %v1093 = vmul.f32 %v1040, %v997
        %v1094 = vmul.f32 %v1045, %v998
        %v1095 = vmul.f32 %v1050, %v999
        %v1096 = vmul.f32 %v1055, %v1000
        %v1097 = vmul.f32 %v1060, %v1001
        %v1098 = vmul.f32 %v1065, %v1002
        %v1099 = vmul.f32 %v1070, %v1003
        %v1100 = vmul.f32 %v1075, %v1004
        %v1101 = vmul.f32 %v1080, %v1005
        %v1102 = vmul.f32 %v1085, %v1006
        %v1103 = vpack.c.bf16 %v865, %v863
        %v1104 = vpack.c.bf16 %v869, %v867
        %v1105 = vpack.c.bf16 %v873, %v871
        %v1106 = vpack.c.bf16 %v877, %v875
        %v1107 = vpack.c.bf16 %v881, %v879
        %v1108 = vpack.c.bf16 %v885, %v883
        %v1109 = vpack.c.bf16 %v889, %v887
        %v1110 = vpack.c.bf16 %v893, %v891
        %v1111 = vld [vmem:[%s396] sm:$0xf]
        %v1112 = vld [vmem:[%s396 + $0x4] sm:$0xf]
        %v1113 = vld [vmem:[%s396 + $0x8] sm:$0xf]
        %v1114 = vld [vmem:[%s396 + $0xc] sm:$0xf]
        %v1115 = vld [vmem:[%s396 + $0x10] sm:$0xf]
        %v1116 = vld [vmem:[%s396 + $0x14] sm:$0xf]
        %v1117 = vld [vmem:[%s396 + $0x18] sm:$0xf]
        %v1118 = vld [vmem:[%s396 + $0x1c] sm:$0xf]
        %v1119 = vld [vmem:[%s396 + $0x20] sm:$0xf]
        %v1120 = vld [vmem:[%s396 + $0x24] sm:$0xf]
        %v1121 = vld [vmem:[%s396 + $0x28] sm:$0xf]
        %v1122 = vld [vmem:[%s396 + $0x2c] sm:$0xf]
        %v1123 = vld [vmem:[%s396 + $0x30] sm:$0xf]
        %v1124 = vld [vmem:[%s396 + $0x34] sm:$0xf]
        %v1125 = vld [vmem:[%s396 + $0x38] sm:$0xf]
        %v1126 = vld [vmem:[%s396 + $0x3c] sm:$0xf]
        %v1143 = vunpack.c.l.b16 %v1111
        %v1144 = vunpack.c.l.b16 %v1112
        %v1145 = vunpack.c.l.b16 %v1113
        %v1146 = vunpack.c.l.b16 %v1114
        %v1147 = vunpack.c.l.b16 %v1115
        %v1148 = vunpack.c.l.b16 %v1116
        %v1149 = vunpack.c.l.b16 %v1117
        %v1150 = vunpack.c.l.b16 %v1118
        %v1151 = vunpack.c.l.b16 %v1119
        %v1152 = vunpack.c.l.b16 %v1120
        %v1153 = vunpack.c.l.b16 %v1121
        %v1154 = vunpack.c.l.b16 %v1122
        %v1155 = vunpack.c.l.b16 %v1123
        %v1156 = vunpack.c.l.b16 %v1124
        %v1157 = vunpack.c.l.b16 %v1125
        %v1158 = vunpack.c.l.b16 %v1126
        %v1159 = vpack.c.b16 %v1144, %v1143
        %v1160 = vpack.c.b16 %v1146, %v1145
        %v1161 = vpack.c.b16 %v1148, %v1147
        %v1162 = vpack.c.b16 %v1150, %v1149
        %v1163 = vpack.c.b16 %v1152, %v1151
        %v1164 = vpack.c.b16 %v1154, %v1153
        %v1165 = vpack.c.b16 %v1156, %v1155
        %v1166 = vpack.c.b16 %v1158, %v1157
        %1175 = vmatpush.bf16.msra.mxu0 %v1166
        %1176 = vmatpush.bf16.msra.mxu0 %v1165
        %1177 = vmatpush.bf16.msra.mxu0 %v1164
        %1178 = vmatpush.bf16.msra.mxu0 %v1163
        %1179 = vmatpush.bf16.msra.mxu0 %v1162
        %1180 = vmatpush.bf16.msra.mxu0 %v1161
        %1181 = vmatpush.bf16.msra.mxu0 %v1160
        %1182 = vmatpush.bf16.msra.mxu0 %v1159
        %1183 = vmatmul.bf16.gmra.mxu0 %v1103
        %v1184 = vpop.f32.mrf.mxu0
        %v1185 = vadd.f32 0.0, %v1184
        %v1186 = vpop.f32.mrf.mxu0
        %v1187 = vadd.f32 0.0, %v1186
        %1188 = vmatmul.bf16.gmra.mxu0 %v1104
        %v1189 = vpop.f32.mrf.mxu0
        %v1190 = vadd.f32 0.0, %v1189
        %v1191 = vpop.f32.mrf.mxu0
        %v1192 = vadd.f32 0.0, %v1191
        %1193 = vmatmul.bf16.gmra.mxu0 %v1105
        %v1194 = vpop.f32.mrf.mxu0
        %v1195 = vadd.f32 0.0, %v1194
        %v1196 = vpop.f32.mrf.mxu0
        %v1197 = vadd.f32 0.0, %v1196
        %1198 = vmatmul.bf16.gmra.mxu0 %v1106
        %v1199 = vpop.f32.mrf.mxu0
        %v1200 = vadd.f32 0.0, %v1199
        %v1201 = vpop.f32.mrf.mxu0
        %v1202 = vadd.f32 0.0, %v1201
        %1203 = vmatmul.bf16.gmra.mxu0 %v1107
        %v1204 = vpop.f32.mrf.mxu0
        %v1205 = vadd.f32 0.0, %v1204
        %v1206 = vpop.f32.mrf.mxu0
        %v1207 = vadd.f32 0.0, %v1206
        %1208 = vmatmul.bf16.gmra.mxu0 %v1108
        %v1209 = vpop.f32.mrf.mxu0
        %v1210 = vadd.f32 0.0, %v1209
        %v1211 = vpop.f32.mrf.mxu0
        %v1212 = vadd.f32 0.0, %v1211
        %1213 = vmatmul.bf16.gmra.mxu0 %v1109
        %v1214 = vpop.f32.mrf.mxu0
        %v1215 = vadd.f32 0.0, %v1214
        %v1216 = vpop.f32.mrf.mxu0
        %v1217 = vadd.f32 0.0, %v1216
        %1218 = vmatmul.bf16.gmra.mxu0 %v1110
        %v1219 = vpop.f32.mrf.mxu0
        %v1220 = vadd.f32 0.0, %v1219
        %v1221 = vpop.f32.mrf.mxu0
        %v1222 = vadd.f32 0.0, %v1221
        %1223 = vdwg.mxu0
        %v1224 = vadd.f32 %v1087, %v1185
        %v1225 = vadd.f32 %v1088, %v1187
        %v1226 = vadd.f32 %v1089, %v1190
        %v1227 = vadd.f32 %v1090, %v1192
        %v1228 = vadd.f32 %v1091, %v1195
        %v1229 = vadd.f32 %v1092, %v1197
        %v1230 = vadd.f32 %v1093, %v1200
        %v1231 = vadd.f32 %v1094, %v1202
        %v1232 = vadd.f32 %v1095, %v1205
        %v1233 = vadd.f32 %v1096, %v1207
        %v1234 = vadd.f32 %v1097, %v1210
        %v1235 = vadd.f32 %v1098, %v1212
        %v1236 = vadd.f32 %v1099, %v1215
        %v1237 = vadd.f32 %v1100, %v1217
        %v1238 = vadd.f32 %v1101, %v1220
        %v1239 = vadd.f32 %v1102, %v1222
        %1240 = vst [vmem:[#allocation4] sm:$0xff] %v1224
        %1241 = vst [vmem:[#allocation4 + $0x8] sm:$0xff] %v1225
        %1242 = vst [vmem:[#allocation4 + $0x10] sm:$0xff] %v1226
        %1243 = vst [vmem:[#allocation4 + $0x18] sm:$0xff] %v1227
        %1244 = vst [vmem:[#allocation4 + $0x20] sm:$0xff] %v1228
        %1245 = vst [vmem:[#allocation4 + $0x28] sm:$0xff] %v1229
        %1246 = vst [vmem:[#allocation4 + $0x30] sm:$0xff] %v1230
        %1247 = vst [vmem:[#allocation4 + $0x38] sm:$0xff] %v1231
        %1248 = vst [vmem:[#allocation4 + $0x40] sm:$0xff] %v1232
        %1249 = vst [vmem:[#allocation4 + $0x48] sm:$0xff] %v1233
        %1250 = vst [vmem:[#allocation4 + $0x50] sm:$0xff] %v1234
        %1251 = vst [vmem:[#allocation4 + $0x58] sm:$0xff] %v1235
        %1252 = vst [vmem:[#allocation4 + $0x60] sm:$0xff] %v1236
        %1253 = vst [vmem:[#allocation4 + $0x68] sm:$0xff] %v1237
        %1254 = vst [vmem:[#allocation4 + $0x70] sm:$0xff] %v1238
        %1255 = vst [vmem:[#allocation4 + $0x78] sm:$0xff] %v1239
        %1256 = vst.msk [vmem:[#allocation2] sm:$0xff] %vm974, %v702
        %1257 = vst.msk [vmem:[#allocation2 + $0x8] sm:$0xff] %vm974, %v703
        %1258 = vst.msk [vmem:[#allocation2 + $0x10] sm:$0xff] %vm974, %v704
        %1259 = vst.msk [vmem:[#allocation2 + $0x18] sm:$0xff] %vm974, %v705
        %1260 = vst.msk [vmem:[#allocation2 + $0x20] sm:$0xff] %vm974, %v706
        %1261 = vst.msk [vmem:[#allocation2 + $0x28] sm:$0xff] %vm974, %v707
        %1262 = vst.msk [vmem:[#allocation2 + $0x30] sm:$0xff] %vm974, %v708
        %1263 = vst.msk [vmem:[#allocation2 + $0x38] sm:$0xff] %vm974, %v709
        %1264 = vst.msk [vmem:[#allocation2 + $0x40] sm:$0xff] %vm974, %v710
        %1265 = vst.msk [vmem:[#allocation2 + $0x48] sm:$0xff] %vm974, %v711
        %1266 = vst.msk [vmem:[#allocation2 + $0x50] sm:$0xff] %vm974, %v712
        %1267 = vst.msk [vmem:[#allocation2 + $0x58] sm:$0xff] %vm974, %v713
        %1268 = vst.msk [vmem:[#allocation2 + $0x60] sm:$0xff] %vm974, %v714
        %1269 = vst.msk [vmem:[#allocation2 + $0x68] sm:$0xff] %vm974, %v715
        %1270 = vst.msk [vmem:[#allocation2 + $0x70] sm:$0xff] %vm974, %v716
        %1271 = vst.msk [vmem:[#allocation2 + $0x78] sm:$0xff] %vm974, %v717
        %p1272 = scmp.eq.s32.totalorder %s21, 1
        // Predicated region
        $region86: #{gat_forward.7} parent=76 // pred_check
          %p1273 = pneg %p1272
        $region87: #{gat_forward.7} parent=76 // pred_check_branch
          %1275 = sbr.rel (%p1273) target = $region89
        $region88: #{gat_forward.7} parent=76 // pred_region
          %v1276 = vld [vmem:[#allocation3] sm:$0xff]
          %v1277 = vld [vmem:[#allocation3 + $0x8] sm:$0xff]
          %v1278 = vld [vmem:[#allocation3 + $0x10] sm:$0xff]
          %v1279 = vld [vmem:[#allocation3 + $0x18] sm:$0xff]
          %v1280 = vld [vmem:[#allocation3 + $0x20] sm:$0xff]
          %v1281 = vld [vmem:[#allocation3 + $0x28] sm:$0xff]
          %v1282 = vld [vmem:[#allocation3 + $0x30] sm:$0xff]
          %v1283 = vld [vmem:[#allocation3 + $0x38] sm:$0xff]
          %v1284 = vld [vmem:[#allocation3 + $0x40] sm:$0xff]
          %v1285 = vld [vmem:[#allocation3 + $0x48] sm:$0xff]
          %v1286 = vld [vmem:[#allocation3 + $0x50] sm:$0xff]
          %v1287 = vld [vmem:[#allocation3 + $0x58] sm:$0xff]
          %v1288 = vld [vmem:[#allocation3 + $0x60] sm:$0xff]
          %v1289 = vld [vmem:[#allocation3 + $0x68] sm:$0xff]
          %v1290 = vld [vmem:[#allocation3 + $0x70] sm:$0xff]
          %v1291 = vld [vmem:[#allocation3 + $0x78] sm:$0xff]
          %v1292 = vmax.f32 %v1276, 1e-30
          %v1293 = vmax.f32 %v1277, 1e-30
          %v1294 = vmax.f32 %v1278, 1e-30
          %v1295 = vmax.f32 %v1279, 1e-30
          %v1296 = vmax.f32 %v1280, 1e-30
          %v1297 = vmax.f32 %v1281, 1e-30
          %v1298 = vmax.f32 %v1282, 1e-30
          %v1299 = vmax.f32 %v1283, 1e-30
          %v1300 = vmax.f32 %v1284, 1e-30
          %v1301 = vmax.f32 %v1285, 1e-30
          %v1302 = vmax.f32 %v1286, 1e-30
          %v1303 = vmax.f32 %v1287, 1e-30
          %v1304 = vmax.f32 %v1288, 1e-30
          %v1305 = vmax.f32 %v1289, 1e-30
          %v1306 = vmax.f32 %v1290, 1e-30
          %v1307 = vmax.f32 %v1291, 1e-30
          %v1308 = vrcp.pop %v1292
          %v1309 = vrcp.pop %v1293
          %v1310 = vrcp.pop %v1294
          %v1311 = vrcp.pop %v1295
          %v1312 = vrcp.pop %v1296
          %v1313 = vrcp.pop %v1297
          %v1314 = vrcp.pop %v1298
          %v1315 = vrcp.pop %v1299
          %v1316 = vrcp.pop %v1300
          %v1317 = vrcp.pop %v1301
          %v1318 = vrcp.pop %v1302
          %v1319 = vrcp.pop %v1303
          %v1320 = vrcp.pop %v1304
          %v1321 = vrcp.pop %v1305
          %v1322 = vrcp.pop %v1306
          %v1323 = vrcp.pop %v1307
          %v1324 = vld [vmem:[#allocation4] sm:$0xff]
          %v1325 = vld [vmem:[#allocation4 + $0x8] sm:$0xff]
          %v1326 = vld [vmem:[#allocation4 + $0x10] sm:$0xff]
          %v1327 = vld [vmem:[#allocation4 + $0x18] sm:$0xff]
          %v1328 = vld [vmem:[#allocation4 + $0x20] sm:$0xff]
          %v1329 = vld [vmem:[#allocation4 + $0x28] sm:$0xff]
          %v1330 = vld [vmem:[#allocation4 + $0x30] sm:$0xff]
          %v1331 = vld [vmem:[#allocation4 + $0x38] sm:$0xff]
          %v1332 = vld [vmem:[#allocation4 + $0x40] sm:$0xff]
          %v1333 = vld [vmem:[#allocation4 + $0x48] sm:$0xff]
          %v1334 = vld [vmem:[#allocation4 + $0x50] sm:$0xff]
          %v1335 = vld [vmem:[#allocation4 + $0x58] sm:$0xff]
          %v1336 = vld [vmem:[#allocation4 + $0x60] sm:$0xff]
          %v1337 = vld [vmem:[#allocation4 + $0x68] sm:$0xff]
          %v1338 = vld [vmem:[#allocation4 + $0x70] sm:$0xff]
          %v1339 = vld [vmem:[#allocation4 + $0x78] sm:$0xff]
          %1341 = vset.pattern.permute.xlu0 0
          %1342 = vperm.xlu0 %1341, %v1308
          %v1343 = vpop.permute.xlu0 %1342
          %1346 = vset.pattern.permute.xlu0 0
          %1347 = vperm.xlu0 %1346, %v1309
          %v1348 = vpop.permute.xlu0 %1347
          %1351 = vset.pattern.permute.xlu0 0
          %1352 = vperm.xlu0 %1351, %v1310
          %v1353 = vpop.permute.xlu0 %1352
          %1356 = vset.pattern.permute.xlu0 0
          %1357 = vperm.xlu0 %1356, %v1311
          %v1358 = vpop.permute.xlu0 %1357
          %1361 = vset.pattern.permute.xlu0 0
          %1362 = vperm.xlu0 %1361, %v1312
          %v1363 = vpop.permute.xlu0 %1362
          %1366 = vset.pattern.permute.xlu0 0
          %1367 = vperm.xlu0 %1366, %v1313
          %v1368 = vpop.permute.xlu0 %1367
          %1371 = vset.pattern.permute.xlu0 0
          %1372 = vperm.xlu0 %1371, %v1314
          %v1373 = vpop.permute.xlu0 %1372
          %1376 = vset.pattern.permute.xlu0 0
          %1377 = vperm.xlu0 %1376, %v1315
          %v1378 = vpop.permute.xlu0 %1377
          %1381 = vset.pattern.permute.xlu0 0
          %1382 = vperm.xlu0 %1381, %v1316
          %v1383 = vpop.permute.xlu0 %1382
          %1386 = vset.pattern.permute.xlu0 0
          %1387 = vperm.xlu0 %1386, %v1317
          %v1388 = vpop.permute.xlu0 %1387
          %1391 = vset.pattern.permute.xlu0 0
          %1392 = vperm.xlu0 %1391, %v1318
          %v1393 = vpop.permute.xlu0 %1392
          %1396 = vset.pattern.permute.xlu0 0
          %1397 = vperm.xlu0 %1396, %v1319
          %v1398 = vpop.permute.xlu0 %1397
          %1401 = vset.pattern.permute.xlu0 0
          %1402 = vperm.xlu0 %1401, %v1320
          %v1403 = vpop.permute.xlu0 %1402
          %1406 = vset.pattern.permute.xlu0 0
          %1407 = vperm.xlu0 %1406, %v1321
          %v1408 = vpop.permute.xlu0 %1407
          %1411 = vset.pattern.permute.xlu0 0
          %1412 = vperm.xlu0 %1411, %v1322
          %v1413 = vpop.permute.xlu0 %1412
          %1416 = vset.pattern.permute.xlu0 0
          %1417 = vperm.xlu0 %1416, %v1323
          %v1418 = vpop.permute.xlu0 %1417
          %v1420 = vmul.f32 %v1324, %v1343
          %v1421 = vmul.f32 %v1325, %v1348
          %v1422 = vmul.f32 %v1326, %v1353
          %v1423 = vmul.f32 %v1327, %v1358
          %v1424 = vmul.f32 %v1328, %v1363
          %v1425 = vmul.f32 %v1329, %v1368
          %v1426 = vmul.f32 %v1330, %v1373
          %v1427 = vmul.f32 %v1331, %v1378
          %v1428 = vmul.f32 %v1332, %v1383
          %v1429 = vmul.f32 %v1333, %v1388
          %v1430 = vmul.f32 %v1334, %v1393
          %v1431 = vmul.f32 %v1335, %v1398
          %v1432 = vmul.f32 %v1336, %v1403
          %v1433 = vmul.f32 %v1337, %v1408
          %v1434 = vmul.f32 %v1338, %v1413
          %v1435 = vmul.f32 %v1339, %v1418
          %v1436 = vld [vmem:[%s4] sm:$0x1]
          %v1438 = vperm.slane %v1436, 0
          %v1440 = vadd.f32 %v1420, %v1438
          %v1441 = vadd.f32 %v1421, %v1438
          %v1442 = vadd.f32 %v1422, %v1438
          %v1443 = vadd.f32 %v1423, %v1438
          %v1444 = vadd.f32 %v1424, %v1438
          %v1445 = vadd.f32 %v1425, %v1438
          %v1446 = vadd.f32 %v1426, %v1438
          %v1447 = vadd.f32 %v1427, %v1438
          %v1448 = vadd.f32 %v1428, %v1438
          %v1449 = vadd.f32 %v1429, %v1438
          %v1450 = vadd.f32 %v1430, %v1438
          %v1451 = vadd.f32 %v1431, %v1438
          %v1452 = vadd.f32 %v1432, %v1438
          %v1453 = vadd.f32 %v1433, %v1438
          %v1454 = vadd.f32 %v1434, %v1438
          %v1455 = vadd.f32 %v1435, %v1438
          %v1456 = vmax.f32 %v1440, 0.0
          %v1457 = vmax.f32 %v1441, 0.0
          %v1458 = vmax.f32 %v1442, 0.0
          %v1459 = vmax.f32 %v1443, 0.0
          %v1460 = vmax.f32 %v1444, 0.0
          %v1461 = vmax.f32 %v1445, 0.0
          %v1462 = vmax.f32 %v1446, 0.0
          %v1463 = vmax.f32 %v1447, 0.0
          %v1464 = vmax.f32 %v1448, 0.0
          %v1465 = vmax.f32 %v1449, 0.0
          %v1466 = vmax.f32 %v1450, 0.0
          %v1467 = vmax.f32 %v1451, 0.0
          %v1468 = vmax.f32 %v1452, 0.0
          %v1469 = vmax.f32 %v1453, 0.0
          %v1470 = vmax.f32 %v1454, 0.0
          %v1471 = vmax.f32 %v1455, 0.0
          %1472 = vst [vmem:[%s403] sm:$0xff] %v1456
          %1473 = vst [vmem:[%s403 + $0x8] sm:$0xff] %v1457
          %1474 = vst [vmem:[%s403 + $0x10] sm:$0xff] %v1458
          %1475 = vst [vmem:[%s403 + $0x18] sm:$0xff] %v1459
          %1476 = vst [vmem:[%s403 + $0x20] sm:$0xff] %v1460
          %1477 = vst [vmem:[%s403 + $0x28] sm:$0xff] %v1461
          %1478 = vst [vmem:[%s403 + $0x30] sm:$0xff] %v1462
          %1479 = vst [vmem:[%s403 + $0x38] sm:$0xff] %v1463
          %1480 = vst [vmem:[%s403 + $0x40] sm:$0xff] %v1464
          %1481 = vst [vmem:[%s403 + $0x48] sm:$0xff] %v1465
          %1482 = vst [vmem:[%s403 + $0x50] sm:$0xff] %v1466
          %1483 = vst [vmem:[%s403 + $0x58] sm:$0xff] %v1467
          %1484 = vst [vmem:[%s403 + $0x60] sm:$0xff] %v1468
          %1485 = vst [vmem:[%s403 + $0x68] sm:$0xff] %v1469
          %1486 = vst [vmem:[%s403 + $0x70] sm:$0xff] %v1470
          %1487 = vst [vmem:[%s403 + $0x78] sm:$0xff] %v1471
        $region89: #{gat_forward.7} parent=76 // pred_fallthru
          _
        %s1488 = smul.u32 16, %s20
        %p1489 = scmp.lt.s32.totalorder %s1488, 31
        %s1490 = scalar_select %p1489, %s1488, 31
        %s1491 = smul.addr %s1490, 8
        %s1492 = scalar_lea.vmem %s5, %s1491
        // Predicated region
        $region90: #{gat_forward.7} parent=76 // pred_check
          %p1493 = pneg %p173
        $region91: #{gat_forward.7} parent=76 // pred_check_branch
          %1495 = sbr.rel (%p1493) target = $region93
        $region92: #{gat_forward.7} parent=76 // pred_region
          %s1496 = smul.u32 16, %s20
        $region93: #{gat_forward.7} parent=76 // pred_fallthru
          _
      $region77: #{gat_forward.7} parent=5 // pred_fallthru
        _
      %p1497 = scmp.le.s32.totalorder 2, %s11
      // Predicated region
      $region94: #{gat_forward.7} parent=5 // pred_check
        %p1498 = pneg %p1497
      $region95: #{gat_forward.7} parent=5 // pred_check_branch
        %1500 = sbr.rel (%p1498) target = $region97
      $region96: #{gat_forward.7} parent=5 // pred_region
        %s1501 = ssub.s32 %s11, 2
        // Predicated region
        $region98: #{gat_forward.7} parent=96 // pred_check
          %p1502 = pneg %p179
        $region99: #{gat_forward.7} parent=96 // pred_check_branch
          %1504 = sbr.rel (%p1502) target = $region101
        $region100: #{gat_forward.7} parent=96 // pred_region
          %s1505 = smul.u32 16, %s22
          %p1506 = scmp.lt.s32.totalorder %s1505, 31
          %s1507 = scalar_select %p1506, %s1505, 31
          %s1508 = smul.addr %s1507, 8
          %s1509 = scalar_lea.vmem %s5, %s1508
        $region101: #{gat_forward.7} parent=96 // pred_fallthru
          _
      $region97: #{gat_forward.7} parent=5 // pred_fallthru
        _
    $region6: #{gat_forward.7} parent=1 // loop_footer
      %s15 = sadd.s32 1, %s11
    $region7: #{gat_forward.7} parent=1 // loop_footer_branch
      %10 = sbr.rel target = $region3
    $region8: #{gat_forward.7} parent=1 // loop_exit
      _

// kernel: gat_forward.11
$region0: #{gat_forward.11}
  #allocation0 [shape = 'u32[]', space=smem, size = 0x4, offset = 0x4, fixed_abs, tag = 'smem constant byte address 0x4 - core index']
  #allocation1 [shape = 'u32[72,128]{1,0:T(1,128)}', space=vmem, size = 0x9000, scoped, tag = 'internal scratch']
  #allocation2 [shape = 'f32[128,1]{1,0:T(8,128)}', space=vmem, size = 0x10000, scoped, tag = 'scratch operand']
  #allocation3 [shape = 'f32[128,1]{1,0:T(8,128)}', space=vmem, size = 0x10000, scoped, tag = 'scratch operand']
  #allocation4 [shape = 'f32[128,128]{1,0:T(8,128)}', space=vmem, size = 0x10000, scoped, tag = 'scratch operand']
  %s0 = inlined_call_operand.vmem [shape: f32[256,1], index: 0, kind: input, shape index: {}]
  %s1 = inlined_call_operand.vmem [shape: f32[1,256], index: 1, kind: input, shape index: {}]
  %s2 = inlined_call_operand.vmem [shape: bf16[256,128], index: 2, kind: input, shape index: {}]
  %s3 = inlined_call_operand.vmem [shape: bf16[256,256], index: 3, kind: input, shape index: {}]
  %s4 = inlined_call_operand.vmem [shape: f32[1,128], index: 4, kind: input, shape index: {}]
  %s5 = inlined_call_operand.vmem [shape: f32[256,128], index: 5, kind: output, shape index: {}]
  %s6 = sld [smem:[#allocation0]]
  $region102: #{gat_forward.11} parent=0
    _
  %s8 = ssub.s32 1, %s6
  %s9 = scalar_select 0, %s8, %s6
  $region1: #{gat_forward.11} parent=0
    #allocation5 [shape = 'u8[65536]{0}', space=vmem, size = 0x10000, scoped, tag = 'input window, operand 3']
    loop: start=0, step=1, limit=6
    $region2: #{gat_forward.11} parent=1 // loop_pre_header
      _
    $region3: #{gat_forward.11} parent=1 // loop_header
      %s11 = sphi 0, %s15
      %p12 = scmp.ge.s32.totalorder %s11, 6
      %s18 = sphi 0, %s30
      %s19 = sphi 0, %s26
      %s20 = sphi 0, %s18
      %s21 = sphi 0, %s19
      %s22 = sphi 0, %s20
      %s23 = sphi 0, %s21
      %s33 = sphi 0, %s35
      %s36 = sphi 0, %s33
      %s37 = sphi 0, %s36
      %s53 = sphi 0, %s37
      %s59 = sphi 0, %s61
      %s62 = sphi 0, %s59
      %s63 = sphi 0, %s62
      %s79 = sphi 0, %s63
      %s85 = sphi 0, %s87
      %s88 = sphi 0, %s85
      %s89 = sphi 0, %s88
      %s105 = sphi 0, %s89
      %s113 = sphi 0, %s115
      %s116 = sphi 0, %s113
      %s117 = sphi 0, %s116
      %s133 = sphi 0, %s117
      %s137 = sphi 0, %s137
      %s139 = sphi 0, %s137
      %s140 = sphi 0, %s139
      %s154 = sphi 0, %s140
      %s160 = sphi 0, %s162
      %s163 = sphi 0, %s160
      %s164 = sphi 0, %s163
      %s180 = sphi 0, %s164
    $region4: #{gat_forward.11} parent=1 // loop_header_branch
      %14 = sbr.rel (%p12) target = $region8
    $region5: #{gat_forward.11} parent=1 // loop_body
      %s16 = ssub.s32 %s11, 1
      %s17 = ssub.s32 %s11, 2
      %s24 = sadd.s32 1, %s19
      %p25 = scmp.ge.s32.totalorder %s24, 2
      %s26 = scalar_select %p25, 0, %s24
      %s27 = sadd.s32 1, %s18
      %s28 = scalar_select %p25, %s27, %s18
      %p29 = scmp.ge.s32.totalorder %s28, 2
      %s30 = scalar_select %p29, 0, %s28
      %s31 = ssub.s32 %s18, %s30
      %p32 = scmp.eq.s32.totalorder %s31, 0
      %s34 = sadd.s32 %s33, 1
      %s35 = scalar_select %p32, %s33, %s34
      %p38 = pneg %p32
      %p39 = scmp.eq.s32.totalorder %s11, 3
      %p40 = por %p38, %p39
      %p41 = scmp.ne.s32.totalorder %s33, %s36
      %p42 = scmp.eq.s32.totalorder %s11, 0
      %p43 = por %p41, %p42
      %p44 = scmp.ne.s32.totalorder %s33, %s36
      %p45 = scmp.eq.s32.totalorder %s16, 3
      %p46 = por %p44, %p45
      %p47 = scmp.ne.s32.totalorder %s36, %s37
      %p48 = scmp.eq.s32.totalorder %s16, 0
      %p49 = por %p47, %p48
      %p50 = scmp.ne.s32.totalorder %s36, %s37
      %p51 = scmp.eq.s32.totalorder %s17, 3
      %p52 = por %p50, %p51
      %p54 = scmp.ne.s32.totalorder %s37, %s53
      %p55 = scmp.eq.s32.totalorder %s17, 0
      %p56 = por %p54, %p55
      %s57 = ssub.s32 %s19, %s26
      %p58 = scmp.eq.s32.totalorder %s57, 0
      %s60 = sadd.s32 %s59, 1
      %s61 = scalar_select %p58, %s59, %s60
      %p64 = pneg %p58
      %p65 = scmp.eq.s32.totalorder %s11, 3
      %p66 = por %p64, %p65
      %p67 = scmp.ne.s32.totalorder %s59, %s62
      %p68 = scmp.eq.s32.totalorder %s11, 0
      %p69 = por %p67, %p68
      %p70 = scmp.ne.s32.totalorder %s59, %s62
      %p71 = scmp.eq.s32.totalorder %s16, 3
      %p72 = por %p70, %p71
      %p73 = scmp.ne.s32.totalorder %s62, %s63
      %p74 = scmp.eq.s32.totalorder %s16, 0
      %p75 = por %p73, %p74
      %p76 = scmp.ne.s32.totalorder %s62, %s63
      %p77 = scmp.eq.s32.totalorder %s17, 3
      %p78 = por %p76, %p77
      %p80 = scmp.ne.s32.totalorder %s63, %s79
      %p81 = scmp.eq.s32.totalorder %s17, 0
      %p82 = por %p80, %p81
      %s83 = ssub.s32 %s19, %s26
      %p84 = scmp.eq.s32.totalorder %s83, 0
      %s86 = sadd.s32 %s85, 1
      %s87 = scalar_select %p84, %s85, %s86
      %p90 = pneg %p84
      %p91 = scmp.eq.s32.totalorder %s11, 3
      %p92 = por %p90, %p91
      %p93 = scmp.ne.s32.totalorder %s85, %s88
      %p94 = scmp.eq.s32.totalorder %s11, 0
      %p95 = por %p93, %p94
      %p96 = scmp.ne.s32.totalorder %s85, %s88
      %p97 = scmp.eq.s32.totalorder %s16, 3
      %p98 = por %p96, %p97
      %p99 = scmp.ne.s32.totalorder %s88, %s89
      %p100 = scmp.eq.s32.totalorder %s16, 0
      %p101 = por %p99, %p100
      %p102 = scmp.ne.s32.totalorder %s88, %s89
      %p103 = scmp.eq.s32.totalorder %s17, 3
      %p104 = por %p102, %p103
      %p106 = scmp.ne.s32.totalorder %s89, %s105
      %p107 = scmp.eq.s32.totalorder %s17, 0
      %p108 = por %p106, %p107
      %s109 = ssub.s32 %s18, %s30
      %s110 = ssub.s32 %s19, %s26
      %s111 = sor.u32 %s109, %s110
      %p112 = scmp.eq.s32.totalorder %s111, 0
      %s114 = sadd.s32 %s113, 1
      %s115 = scalar_select %p112, %s113, %s114
      %p118 = pneg %p112
      %p119 = scmp.eq.s32.totalorder %s11, 3
      %p120 = por %p118, %p119
      %p121 = scmp.ne.s32.totalorder %s113, %s116
      %p122 = scmp.eq.s32.totalorder %s11, 0
      %p123 = por %p121, %p122
      %p124 = scmp.ne.s32.totalorder %s113, %s116
      %p125 = scmp.eq.s32.totalorder %s16, 3
      %p126 = por %p124, %p125
      %p127 = scmp.ne.s32.totalorder %s116, %s117
      %p128 = scmp.eq.s32.totalorder %s16, 0
      %p129 = por %p127, %p128
      %p130 = scmp.ne.s32.totalorder %s116, %s117
      %p131 = scmp.eq.s32.totalorder %s17, 3
      %p132 = por %p130, %p131
      %p134 = scmp.ne.s32.totalorder %s117, %s133
      %p135 = scmp.eq.s32.totalorder %s17, 0
      %p136 = por %p134, %p135
      %s138 = sadd.s32 %s137, 1
      %p141 = scmp.eq.s32.totalorder %s11, 3
      %p142 = scmp.ne.s32.totalorder %s137, %s139
      %p143 = scmp.eq.s32.totalorder %s11, 0
      %p144 = por %p142, %p143
      %p145 = scmp.ne.s32.totalorder %s137, %s139
      %p146 = scmp.eq.s32.totalorder %s16, 3
      %p147 = por %p145, %p146
      %p148 = scmp.ne.s32.totalorder %s139, %s140
      %p149 = scmp.eq.s32.totalorder %s16, 0
      %p150 = por %p148, %p149
      %p151 = scmp.ne.s32.totalorder %s139, %s140
      %p152 = scmp.eq.s32.totalorder %s17, 3
      %p153 = por %p151, %p152
      %p155 = scmp.ne.s32.totalorder %s140, %s154
      %p156 = scmp.eq.s32.totalorder %s17, 0
      %p157 = por %p155, %p156
      %s158 = ssub.s32 %s18, %s30
      %p159 = scmp.eq.s32.totalorder %s158, 0
      %s161 = sadd.s32 %s160, 1
      %s162 = scalar_select %p159, %s160, %s161
      %p165 = pneg %p159
      %p166 = scmp.eq.s32.totalorder %s11, 3
      %p167 = por %p165, %p166
      %p168 = scmp.ne.s32.totalorder %s160, %s163
      %p169 = scmp.eq.s32.totalorder %s11, 0
      %p170 = por %p168, %p169
      %p171 = scmp.ne.s32.totalorder %s160, %s163
      %p172 = scmp.eq.s32.totalorder %s16, 3
      %p173 = por %p171, %p172
      %p174 = scmp.ne.s32.totalorder %s163, %s164
      %p175 = scmp.eq.s32.totalorder %s16, 0
      %p176 = por %p174, %p175
      %p177 = scmp.ne.s32.totalorder %s163, %s164
      %p178 = scmp.eq.s32.totalorder %s17, 3
      %p179 = por %p177, %p178
      %p181 = scmp.ne.s32.totalorder %s164, %s180
      %p182 = scmp.eq.s32.totalorder %s17, 0
      %p183 = por %p181, %p182
      %p184 = scmp.le.s32.totalorder 1, %s11
      %p185 = scmp.lt.s32.totalorder %s11, 5
      %p186 = pnand %p184, %p185
      %p187 = pneg %p186
      // Predicated region
      $region9: #{gat_forward.11} parent=5 // pred_check
        _
      $region10: #{gat_forward.11} parent=5 // pred_check_branch
        %189 = sbr.rel (%p186) target = $region12
      $region11: #{gat_forward.11} parent=5 // pred_region
        %s190 = ssub.s32 %s11, 1
        // Predicated region
        $region13: #{gat_forward.11} parent=11 // pred_check
          %p191 = pneg %p150
        $region14: #{gat_forward.11} parent=11 // pred_check_branch
          %193 = sbr.rel (%p191) target = $region16
        $region15: #{gat_forward.11} parent=11 // pred_region
          _
        $region16: #{gat_forward.11} parent=11 // pred_fallthru
          _
      $region12: #{gat_forward.11} parent=5 // pred_fallthru
        _
      %p194 = scmp.lt.s32.totalorder %s11, 4
      // Predicated region
      $region17: #{gat_forward.11} parent=5 // pred_check
        %p195 = pneg %p194
      $region18: #{gat_forward.11} parent=5 // pred_check_branch
        %197 = sbr.rel (%p195) target = $region20
      $region19: #{gat_forward.11} parent=5 // pred_region
        // Predicated region
        $region21: #{gat_forward.11} parent=19 // pred_check
          %p198 = pneg %p43
        $region22: #{gat_forward.11} parent=19 // pred_check_branch
          %200 = sbr.rel (%p198) target = $region24
        $region23: #{gat_forward.11} parent=19 // pred_region
          %s201 = smul.u32 16, %s18
          %p202 = scmp.lt.s32.totalorder %s201, 31
          %s203 = scalar_select %p202, %s201, 31
          %s204 = smul.addr %s203, 8
          %s205 = scalar_lea.vmem %s0, %s204
          %s206 = smul.u32 16, %s18
        $region24: #{gat_forward.11} parent=19 // pred_fallthru
          _
        // Predicated region
        $region25: #{gat_forward.11} parent=19 // pred_check
          %p207 = pneg %p69
        $region26: #{gat_forward.11} parent=19 // pred_check_branch
          %209 = sbr.rel (%p207) target = $region28
        $region27: #{gat_forward.11} parent=19 // pred_region
          %p210 = scmp.lt.s32.totalorder %s19, 1
          %s211 = scalar_select %p210, %s19, 1
          %s212 = scalar_lea.vmem %s1, %s211
        $region28: #{gat_forward.11} parent=19 // pred_fallthru
          _
        // Predicated region
        $region29: #{gat_forward.11} parent=19 // pred_check
          %p213 = pneg %p95
        $region30: #{gat_forward.11} parent=19 // pred_check_branch
          %215 = sbr.rel (%p213) target = $region32
        $region31: #{gat_forward.11} parent=19 // pred_region
          %s216 = smul.u32 16, %s19
          %p217 = scmp.lt.s32.totalorder %s216, 31
          %s218 = scalar_select %p217, %s216, 31
          %s219 = smul.addr %s218, 4
          %s220 = scalar_lea.vmem %s2, %s219
          %s221 = smul.u32 16, %s19
        $region32: #{gat_forward.11} parent=19 // pred_fallthru
          _
        // Predicated region
        $region33: #{gat_forward.11} parent=19 // pred_check
          %p222 = pneg %p123
        $region34: #{gat_forward.11} parent=19 // pred_check_branch
          %224 = sbr.rel (%p222) target = $region36
        $region35: #{gat_forward.11} parent=19 // pred_region
          %s225 = sand.u32 %s113, 1
          %s226 = sand.u32 %s113, 1
          %s227 = smul.addr %s226, 64
          %s228 = scalar_lea.vmem [#allocation5], %s227
          %s229 = smul.u32 16, %s18
          %s230 = smul.addr %s229, 2
          %s231 = sadd.s32 %s19, %s230
          %s232 = smul.addr %s231, 4
          %s233 = scalar_lea.vmem %s3, %s232
          // Predicated region
          $region37: #{gat_forward.11} parent=35 // pred_check
            _
          $region38: #{gat_forward.11} parent=35 // pred_check_branch
            %235 = sbr.rel (0) target = $region40
          $region39: #{gat_forward.11} parent=35 // pred_region
            // Predicated region
            $region41: #{gat_forward.11} parent=39 // pred_check
              _
            $region42: #{gat_forward.11} parent=39 // pred_check_branch
              %237 = sbr.rel target = $region44
            $region43: #{gat_forward.11} parent=39 // pred_region
              // Predicated region
              $region56: #{gat_forward.11} parent=43 // pred_check
                _
              $region57: #{gat_forward.11} parent=43 // pred_check_branch
                %283 = sbr.rel (0) target = $region59
              $region58: #{gat_forward.11} parent=43 // pred_region
                loop: start=0, step=1, limit=1
                $region60: #{gat_forward.11} parent=58 // loop_pre_header
                  _
                $region61: #{gat_forward.11} parent=58 // loop_header
                  %s285 = sphi 0, %s289
                  %p286 = scmp.ge.s32.totalorder %s285, 1
                  %s290 = sphi %s233, %s233
                  %s291 = sphi %s228, %s228
                $region62: #{gat_forward.11} parent=58 // loop_header_branch
                  %288 = sbr.rel (%p286) target = $region66
                $region63: #{gat_forward.11} parent=58 // loop_body
                  _
                $region64: #{gat_forward.11} parent=58 // loop_footer
                  %s289 = sadd.s32 1, %s285
                $region65: #{gat_forward.11} parent=58 // loop_footer_branch
                  %284 = sbr.rel target = $region61
                $region66: #{gat_forward.11} parent=58 // loop_exit
                  _
                %s293 = ssub.s32 16, 1
                loop: start=0, step=1, limit=1
                $region67: #{gat_forward.11} parent=58 // loop_pre_header
                  _
                $region68: #{gat_forward.11} parent=58 // loop_header
                  %s295 = sphi 0, %s299
                  %p296 = scmp.ge.s32.totalorder %s295, 1
                  %s300 = sphi %s233, %s233
                  %s301 = sphi %s228, %s228
                $region69: #{gat_forward.11} parent=58 // loop_header_branch
                  %298 = sbr.rel (%p296) target = $region73
                $region70: #{gat_forward.11} parent=58 // loop_body
                  %v302 = vld [vmem:[%s300] sm:%s293]
                  %303 = vst [vmem:[%s301] sm:%s293] %v302
                  %v304 = vld [vmem:[%s300 + $0x8] sm:%s293]
                  %305 = vst [vmem:[%s301 + $0x4] sm:%s293] %v304
                  %v306 = vld [vmem:[%s300 + $0x10] sm:%s293]
                  %307 = vst [vmem:[%s301 + $0x8] sm:%s293] %v306
                  %v308 = vld [vmem:[%s300 + $0x18] sm:%s293]
                  %309 = vst [vmem:[%s301 + $0xc] sm:%s293] %v308
                  %v310 = vld [vmem:[%s300 + $0x20] sm:%s293]
                  %311 = vst [vmem:[%s301 + $0x10] sm:%s293] %v310
                  %v312 = vld [vmem:[%s300 + $0x28] sm:%s293]
                  %313 = vst [vmem:[%s301 + $0x14] sm:%s293] %v312
                  %v314 = vld [vmem:[%s300 + $0x30] sm:%s293]
                  %315 = vst [vmem:[%s301 + $0x18] sm:%s293] %v314
                  %v316 = vld [vmem:[%s300 + $0x38] sm:%s293]
                  %317 = vst [vmem:[%s301 + $0x1c] sm:%s293] %v316
                  %v318 = vld [vmem:[%s300 + $0x40] sm:%s293]
                  %319 = vst [vmem:[%s301 + $0x20] sm:%s293] %v318
                  %v320 = vld [vmem:[%s300 + $0x48] sm:%s293]
                  %321 = vst [vmem:[%s301 + $0x24] sm:%s293] %v320
                  %v322 = vld [vmem:[%s300 + $0x50] sm:%s293]
                  %323 = vst [vmem:[%s301 + $0x28] sm:%s293] %v322
                  %v324 = vld [vmem:[%s300 + $0x58] sm:%s293]
                  %325 = vst [vmem:[%s301 + $0x2c] sm:%s293] %v324
                  %v326 = vld [vmem:[%s300 + $0x60] sm:%s293]
                  %327 = vst [vmem:[%s301 + $0x30] sm:%s293] %v326
                  %v328 = vld [vmem:[%s300 + $0x68] sm:%s293]
                  %329 = vst [vmem:[%s301 + $0x34] sm:%s293] %v328
                  %v330 = vld [vmem:[%s300 + $0x70] sm:%s293]
                  %331 = vst [vmem:[%s301 + $0x38] sm:%s293] %v330
                  %v332 = vld [vmem:[%s300 + $0x78] sm:%s293]
                  %333 = vst [vmem:[%s301 + $0x3c] sm:%s293] %v332
                $region71: #{gat_forward.11} parent=58 // loop_footer
                  %s299 = sadd.s32 1, %s295
                $region72: #{gat_forward.11} parent=58 // loop_footer_branch
                  %294 = sbr.rel target = $region68
                $region73: #{gat_forward.11} parent=58 // loop_exit
                  _
              $region59: #{gat_forward.11} parent=43 // pred_fallthru
                _
            $region44: #{gat_forward.11} parent=39 // pred_fallthru
              _
            // Predicated region
            $region45: #{gat_forward.11} parent=39 // pred_check
              _
            $region46: #{gat_forward.11} parent=39 // pred_check_branch
              %239 = sbr.rel (0) target = $region48
            $region47: #{gat_forward.11} parent=39 // pred_region
              %s241 = ssub.s32 16, 1
              loop: start=0, step=1, limit=1
              $region49: #{gat_forward.11} parent=47 // loop_pre_header
                _
              $region50: #{gat_forward.11} parent=47 // loop_header
                %s243 = sphi 0, %s247
                %p244 = scmp.ge.s32.totalorder %s243, 1
                %s248 = sphi %s233, %s233
                %s249 = sphi %s228, %s228
              $region51: #{gat_forward.11} parent=47 // loop_header_branch
                %246 = sbr.rel (%p244) target = $region55
              $region52: #{gat_forward.11} parent=47 // loop_body
                %v250 = vld [vmem:[%s248] sm:%s241]
                %251 = vst [vmem:[%s249] sm:%s241] %v250
                %v252 = vld [vmem:[%s248 + $0x8] sm:%s241]
                %253 = vst [vmem:[%s249 + $0x4] sm:%s241] %v252
                %v254 = vld [vmem:[%s248 + $0x10] sm:%s241]
                %255 = vst [vmem:[%s249 + $0x8] sm:%s241] %v254
                %v256 = vld [vmem:[%s248 + $0x18] sm:%s241]
                %257 = vst [vmem:[%s249 + $0xc] sm:%s241] %v256
                %v258 = vld [vmem:[%s248 + $0x20] sm:%s241]
                %259 = vst [vmem:[%s249 + $0x10] sm:%s241] %v258
                %v260 = vld [vmem:[%s248 + $0x28] sm:%s241]
                %261 = vst [vmem:[%s249 + $0x14] sm:%s241] %v260
                %v262 = vld [vmem:[%s248 + $0x30] sm:%s241]
                %263 = vst [vmem:[%s249 + $0x18] sm:%s241] %v262
                %v264 = vld [vmem:[%s248 + $0x38] sm:%s241]
                %265 = vst [vmem:[%s249 + $0x1c] sm:%s241] %v264
                %v266 = vld [vmem:[%s248 + $0x40] sm:%s241]
                %267 = vst [vmem:[%s249 + $0x20] sm:%s241] %v266
                %v268 = vld [vmem:[%s248 + $0x48] sm:%s241]
                %269 = vst [vmem:[%s249 + $0x24] sm:%s241] %v268
                %v270 = vld [vmem:[%s248 + $0x50] sm:%s241]
                %271 = vst [vmem:[%s249 + $0x28] sm:%s241] %v270
                %v272 = vld [vmem:[%s248 + $0x58] sm:%s241]
                %273 = vst [vmem:[%s249 + $0x2c] sm:%s241] %v272
                %v274 = vld [vmem:[%s248 + $0x60] sm:%s241]
                %275 = vst [vmem:[%s249 + $0x30] sm:%s241] %v274
                %v276 = vld [vmem:[%s248 + $0x68] sm:%s241]
                %277 = vst [vmem:[%s249 + $0x34] sm:%s241] %v276
                %v278 = vld [vmem:[%s248 + $0x70] sm:%s241]
                %279 = vst [vmem:[%s249 + $0x38] sm:%s241] %v278
                %v280 = vld [vmem:[%s248 + $0x78] sm:%s241]
                %281 = vst [vmem:[%s249 + $0x3c] sm:%s241] %v280
              $region53: #{gat_forward.11} parent=47 // loop_footer
                %s247 = sadd.s32 1, %s243
              $region54: #{gat_forward.11} parent=47 // loop_footer_branch
                %242 = sbr.rel target = $region50
              $region55: #{gat_forward.11} parent=47 // loop_exit
                _
            $region48: #{gat_forward.11} parent=39 // pred_fallthru
              _
          $region40: #{gat_forward.11} parent=35 // pred_fallthru
            _
          %334 = vnop
        $region36: #{gat_forward.11} parent=19 // pred_fallthru
          _
      $region20: #{gat_forward.11} parent=5 // pred_fallthru
        _
      %p335 = scmp.le.s32.totalorder 1, %s11
      %p336 = scmp.lt.s32.totalorder %s11, 5
      %p337 = pnand %p335, %p336
      %p338 = pneg %p337
      // Predicated region
      $region74: #{gat_forward.11} parent=5 // pred_check
        _
      $region75: #{gat_forward.11} parent=5 // pred_check_branch
        %340 = sbr.rel (%p337) target = $region77
      $region76: #{gat_forward.11} parent=5 // pred_region
        %s341 = ssub.s32 %s11, 1
        %s342 = sand.u32 %s116, 1
        %s343 = sand.u32 %s116, 1
        %s344 = smul.addr %s343, 64
        %s345 = scalar_lea.vmem [#allocation5], %s344
        // Predicated region
        $region78: #{gat_forward.11} parent=76 // pred_check
          %p346 = pneg %p129
        $region79: #{gat_forward.11} parent=76 // pred_check_branch
          %348 = sbr.rel (%p346) target = $region81
        $region80: #{gat_forward.11} parent=76 // pred_region
          _
        $region81: #{gat_forward.11} parent=76 // pred_fallthru
          _
        %s349 = smul.u32 16, %s20
        %p350 = scmp.lt.s32.totalorder %s349, 31
        %s351 = scalar_select %p350, %s349, 31
        %s352 = smul.addr %s351, 8
        %s353 = scalar_lea.vmem %s0, %s352
        %p354 = pneg %p49
        %p355 = pneg %p46
        %p356 = scmp.lt.s32.totalorder %s21, 1
        %s357 = scalar_select %p356, %s21, 1
        %s358 = scalar_lea.vmem %s1, %s357
        %p359 = pneg %p75
        %p360 = pneg %p72
        %s361 = smul.u32 16, %s21
        %p362 = scmp.lt.s32.totalorder %s361, 31
        %s363 = scalar_select %p362, %s361, 31
        %s364 = smul.addr %s363, 4
        %s365 = scalar_lea.vmem %s2, %s364
        %p366 = pneg %p101
        %p367 = pneg %p98
        %s368 = sand.u32 %s116, 1
        %s369 = sand.u32 %s116, 1
        %s370 = smul.addr %s369, 64
        %s371 = scalar_lea.vmem [#allocation5], %s370
        %p372 = pneg %p129
        %p373 = pneg %p126
        %p374 = pneg %p150
        %p375 = pneg %p147
        %p376 = pneg %p176
        %p377 = pneg %p173
        %s378 = smul.u32 16, %s20
        %p379 = scmp.lt.s32.totalorder %s378, 31
        %s380 = scalar_select %p379, %s378, 31
        %s381 = smul.addr %s380, 8
        %s382 = scalar_lea.vmem %s5, %s381
        %s383 = smul.u32 16, %s20
        %p384 = scmp.lt.s32.totalorder %s383, 31
        %s385 = scalar_select %p384, %s383, 31
        %s386 = smul.addr %s385, 8
        %s387 = scalar_lea.vmem %s0, %s386
        %s388 = smul.u32 16, %s20
        %p389 = scmp.lt.s32.totalorder %s21, 1
        %s390 = scalar_select %p389, %s21, 1
        %s391 = scalar_lea.vmem %s1, %s390
        %s392 = smul.u32 16, %s21
        %p393 = scmp.lt.s32.totalorder %s392, 31
        %s394 = scalar_select %p393, %s392, 31
        %s395 = smul.addr %s394, 4
        %s396 = scalar_lea.vmem %s2, %s395
        %s397 = smul.u32 16, %s21
        %s398 = smul.u32 16, %s20
        %s399 = smul.u32 16, %s20
        %p400 = scmp.lt.s32.totalorder %s399, 31
        %s401 = scalar_select %p400, %s399, 31
        %s402 = smul.addr %s401, 8
        %s403 = scalar_lea.vmem %s5, %s402
        %s404 = smul.u32 16, %s20
        %p405 = scmp.eq.s32.totalorder %s21, 0
        // Predicated region
        $region82: #{gat_forward.11} parent=76 // pred_check
          %p406 = pneg %p405
        $region83: #{gat_forward.11} parent=76 // pred_check_branch
          %408 = sbr.rel (%p406) target = $region85
        $region84: #{gat_forward.11} parent=76 // pred_region
          %vm409 = vcmask 7168
          %410 = vst.msk [vmem:[#allocation2] sm:$0xff] %vm409, -1e+30
          %411 = vst.msk [vmem:[#allocation2 + $0x8] sm:$0xff] %vm409, -1e+30
          %412 = vst.msk [vmem:[#allocation2 + $0x10] sm:$0xff] %vm409, -1e+30
          %413 = vst.msk [vmem:[#allocation2 + $0x18] sm:$0xff] %vm409, -1e+30
          %414 = vst.msk [vmem:[#allocation2 + $0x20] sm:$0xff] %vm409, -1e+30
          %415 = vst.msk [vmem:[#allocation2 + $0x28] sm:$0xff] %vm409, -1e+30
          %416 = vst.msk [vmem:[#allocation2 + $0x30] sm:$0xff] %vm409, -1e+30
          %417 = vst.msk [vmem:[#allocation2 + $0x38] sm:$0xff] %vm409, -1e+30
          %418 = vst.msk [vmem:[#allocation2 + $0x40] sm:$0xff] %vm409, -1e+30
          %419 = vst.msk [vmem:[#allocation2 + $0x48] sm:$0xff] %vm409, -1e+30
          %420 = vst.msk [vmem:[#allocation2 + $0x50] sm:$0xff] %vm409, -1e+30
          %421 = vst.msk [vmem:[#allocation2 + $0x58] sm:$0xff] %vm409, -1e+30
          %422 = vst.msk [vmem:[#allocation2 + $0x60] sm:$0xff] %vm409, -1e+30
          %423 = vst.msk [vmem:[#allocation2 + $0x68] sm:$0xff] %vm409, -1e+30
          %424 = vst.msk [vmem:[#allocation2 + $0x70] sm:$0xff] %vm409, -1e+30
          %425 = vst.msk [vmem:[#allocation2 + $0x78] sm:$0xff] %vm409, -1e+30
          %426 = vst.msk [vmem:[#allocation3] sm:$0xff] %vm409, 0.0
          %427 = vst.msk [vmem:[#allocation3 + $0x8] sm:$0xff] %vm409, 0.0
          %428 = vst.msk [vmem:[#allocation3 + $0x10] sm:$0xff] %vm409, 0.0
          %429 = vst.msk [vmem:[#allocation3 + $0x18] sm:$0xff] %vm409, 0.0
          %430 = vst.msk [vmem:[#allocation3 + $0x20] sm:$0xff] %vm409, 0.0
          %431 = vst.msk [vmem:[#allocation3 + $0x28] sm:$0xff] %vm409, 0.0
          %432 = vst.msk [vmem:[#allocation3 + $0x30] sm:$0xff] %vm409, 0.0
          %433 = vst.msk [vmem:[#allocation3 + $0x38] sm:$0xff] %vm409, 0.0
          %434 = vst.msk [vmem:[#allocation3 + $0x40] sm:$0xff] %vm409, 0.0
          %435 = vst.msk [vmem:[#allocation3 + $0x48] sm:$0xff] %vm409, 0.0
          %436 = vst.msk [vmem:[#allocation3 + $0x50] sm:$0xff] %vm409, 0.0
          %437 = vst.msk [vmem:[#allocation3 + $0x58] sm:$0xff] %vm409, 0.0
          %438 = vst.msk [vmem:[#allocation3 + $0x60] sm:$0xff] %vm409, 0.0
          %439 = vst.msk [vmem:[#allocation3 + $0x68] sm:$0xff] %vm409, 0.0
          %440 = vst.msk [vmem:[#allocation3 + $0x70] sm:$0xff] %vm409, 0.0
          %441 = vst.msk [vmem:[#allocation3 + $0x78] sm:$0xff] %vm409, 0.0
          %442 = vst [vmem:[#allocation4] sm:$0xff] 0.0
          %443 = vst [vmem:[#allocation4 + $0x8] sm:$0xff] 0.0
          %444 = vst [vmem:[#allocation4 + $0x10] sm:$0xff] 0.0
          %445 = vst [vmem:[#allocation4 + $0x18] sm:$0xff] 0.0
          %446 = vst [vmem:[#allocation4 + $0x20] sm:$0xff] 0.0
          %447 = vst [vmem:[#allocation4 + $0x28] sm:$0xff] 0.0
          %448 = vst [vmem:[#allocation4 + $0x30] sm:$0xff] 0.0
          %449 = vst [vmem:[#allocation4 + $0x38] sm:$0xff] 0.0
          %450 = vst [vmem:[#allocation4 + $0x40] sm:$0xff] 0.0
          %451 = vst [vmem:[#allocation4 + $0x48] sm:$0xff] 0.0
          %452 = vst [vmem:[#allocation4 + $0x50] sm:$0xff] 0.0
          %453 = vst [vmem:[#allocation4 + $0x58] sm:$0xff] 0.0
          %454 = vst [vmem:[#allocation4 + $0x60] sm:$0xff] 0.0
          %455 = vst [vmem:[#allocation4 + $0x68] sm:$0xff] 0.0
          %456 = vst [vmem:[#allocation4 + $0x70] sm:$0xff] 0.0
          %457 = vst [vmem:[#allocation4 + $0x78] sm:$0xff] 0.0
        $region85: #{gat_forward.11} parent=76 // pred_fallthru
          _
        %v458 = vld [vmem:[%s387] sm:$0xff]
        %v459 = vld [vmem:[%s387 + $0x8] sm:$0xff]
        %v460 = vld [vmem:[%s387 + $0x10] sm:$0xff]
        %v461 = vld [vmem:[%s387 + $0x18] sm:$0xff]
        %v462 = vld [vmem:[%s387 + $0x20] sm:$0xff]
        %v463 = vld [vmem:[%s387 + $0x28] sm:$0xff]
        %v464 = vld [vmem:[%s387 + $0x30] sm:$0xff]
        %v465 = vld [vmem:[%s387 + $0x38] sm:$0xff]
        %v466 = vld [vmem:[%s387 + $0x40] sm:$0xff]
        %v467 = vld [vmem:[%s387 + $0x48] sm:$0xff]
        %v468 = vld [vmem:[%s387 + $0x50] sm:$0xff]
        %v469 = vld [vmem:[%s387 + $0x58] sm:$0xff]
        %v470 = vld [vmem:[%s387 + $0x60] sm:$0xff]
        %v471 = vld [vmem:[%s387 + $0x68] sm:$0xff]
        %v472 = vld [vmem:[%s387 + $0x70] sm:$0xff]
        %v473 = vld [vmem:[%s387 + $0x78] sm:$0xff]
        %v474 = vld [vmem:[%s391] sm:$0x1]
        %476 = vset.pattern.permute.xlu0 0
        %477 = vperm.xlu0 %476, %v458
        %v478 = vpop.permute.xlu0 %477
        %481 = vset.pattern.permute.xlu0 0
        %482 = vperm.xlu0 %481, %v459
        %v483 = vpop.permute.xlu0 %482
        %486 = vset.pattern.permute.xlu0 0
        %487 = vperm.xlu0 %486, %v460
        %v488 = vpop.permute.xlu0 %487
        %491 = vset.pattern.permute.xlu0 0
        %492 = vperm.xlu0 %491, %v461
        %v493 = vpop.permute.xlu0 %492
        %496 = vset.pattern.permute.xlu0 0
        %497 = vperm.xlu0 %496, %v462
        %v498 = vpop.permute.xlu0 %497
        %501 = vset.pattern.permute.xlu0 0
        %502 = vperm.xlu0 %501, %v463
        %v503 = vpop.permute.xlu0 %502
        %506 = vset.pattern.permute.xlu0 0
        %507 = vperm.xlu0 %506, %v464
        %v508 = vpop.permute.xlu0 %507
        %511 = vset.pattern.permute.xlu0 0
        %512 = vperm.xlu0 %511, %v465
        %v513 = vpop.permute.xlu0 %512
        %516 = vset.pattern.permute.xlu0 0
        %517 = vperm.xlu0 %516, %v466
        %v518 = vpop.permute.xlu0 %517
        %521 = vset.pattern.permute.xlu0 0
        %522 = vperm.xlu0 %521, %v467
        %v523 = vpop.permute.xlu0 %522
        %526 = vset.pattern.permute.xlu0 0
        %527 = vperm.xlu0 %526, %v468
        %v528 = vpop.permute.xlu0 %527
        %531 = vset.pattern.permute.xlu0 0
        %532 = vperm.xlu0 %531, %v469
        %v533 = vpop.permute.xlu0 %532
        %536 = vset.pattern.permute.xlu0 0
        %537 = vperm.xlu0 %536, %v470
        %v538 = vpop.permute.xlu0 %537
        %541 = vset.pattern.permute.xlu0 0
        %542 = vperm.xlu0 %541, %v471
        %v543 = vpop.permute.xlu0 %542
        %546 = vset.pattern.permute.xlu0 0
        %547 = vperm.xlu0 %546, %v472
        %v548 = vpop.permute.xlu0 %547
        %551 = vset.pattern.permute.xlu0 0
        %552 = vperm.xlu0 %551, %v473
        %v553 = vpop.permute.xlu0 %552
        %v556 = vperm.slane %v474, 0
        %v558 = vadd.f32 %v478, %v556
        %v559 = vadd.f32 %v483, %v556
        %v560 = vadd.f32 %v488, %v556
        %v561 = vadd.f32 %v493, %v556
        %v562 = vadd.f32 %v498, %v556
        %v563 = vadd.f32 %v503, %v556
        %v564 = vadd.f32 %v508, %v556
        %v565 = vadd.f32 %v513, %v556
        %v566 = vadd.f32 %v518, %v556
        %v567 = vadd.f32 %v523, %v556
        %v568 = vadd.f32 %v528, %v556
        %v569 = vadd.f32 %v533, %v556
        %v570 = vadd.f32 %v538, %v556
        %v571 = vadd.f32 %v543, %v556
        %v572 = vadd.f32 %v548, %v556
        %v573 = vadd.f32 %v553, %v556
        %v574 = vmul.f32 %v558, 0.2
        %v575 = vmul.f32 %v559, 0.2
        %v576 = vmul.f32 %v560, 0.2
        %v577 = vmul.f32 %v561, 0.2
        %v578 = vmul.f32 %v562, 0.2
        %v579 = vmul.f32 %v563, 0.2
        %v580 = vmul.f32 %v564, 0.2
        %v581 = vmul.f32 %v565, 0.2
        %v582 = vmul.f32 %v566, 0.2
        %v583 = vmul.f32 %v567, 0.2
        %v584 = vmul.f32 %v568, 0.2
        %v585 = vmul.f32 %v569, 0.2
        %v586 = vmul.f32 %v570, 0.2
        %v587 = vmul.f32 %v571, 0.2
        %v588 = vmul.f32 %v572, 0.2
        %v589 = vmul.f32 %v573, 0.2
        %v590 = vmax.f32 %v558, %v574
        %v591 = vmax.f32 %v559, %v575
        %v592 = vmax.f32 %v560, %v576
        %v593 = vmax.f32 %v561, %v577
        %v594 = vmax.f32 %v562, %v578
        %v595 = vmax.f32 %v563, %v579
        %v596 = vmax.f32 %v564, %v580
        %v597 = vmax.f32 %v565, %v581
        %v598 = vmax.f32 %v566, %v582
        %v599 = vmax.f32 %v567, %v583
        %v600 = vmax.f32 %v568, %v584
        %v601 = vmax.f32 %v569, %v585
        %v602 = vmax.f32 %v570, %v586
        %v603 = vmax.f32 %v571, %v587
        %v604 = vmax.f32 %v572, %v588
        %v605 = vmax.f32 %v573, %v589
        %v606 = vld [vmem:[%s345] sm:$0xf]
        %v607 = vld [vmem:[%s345 + $0x4] sm:$0xf]
        %v608 = vld [vmem:[%s345 + $0x8] sm:$0xf]
        %v609 = vld [vmem:[%s345 + $0xc] sm:$0xf]
        %v610 = vld [vmem:[%s345 + $0x10] sm:$0xf]
        %v611 = vld [vmem:[%s345 + $0x14] sm:$0xf]
        %v612 = vld [vmem:[%s345 + $0x18] sm:$0xf]
        %v613 = vld [vmem:[%s345 + $0x1c] sm:$0xf]
        %v614 = vld [vmem:[%s345 + $0x20] sm:$0xf]
        %v615 = vld [vmem:[%s345 + $0x24] sm:$0xf]
        %v616 = vld [vmem:[%s345 + $0x28] sm:$0xf]
        %v617 = vld [vmem:[%s345 + $0x2c] sm:$0xf]
        %v618 = vld [vmem:[%s345 + $0x30] sm:$0xf]
        %v619 = vld [vmem:[%s345 + $0x34] sm:$0xf]
        %v620 = vld [vmem:[%s345 + $0x38] sm:$0xf]
        %v621 = vld [vmem:[%s345 + $0x3c] sm:$0xf]
        %v622 = vunpack.c.l.bf16 %v606
        %v623 = vunpack.c.l.bf16 %v607
        %v624 = vunpack.c.l.bf16 %v608
        %v625 = vunpack.c.l.bf16 %v609
        %v626 = vunpack.c.l.bf16 %v610
        %v627 = vunpack.c.l.bf16 %v611
        %v628 = vunpack.c.l.bf16 %v612
        %v629 = vunpack.c.l.bf16 %v613
        %v630 = vunpack.c.l.bf16 %v614
        %v631 = vunpack.c.l.bf16 %v615
        %v632 = vunpack.c.l.bf16 %v616
        %v633 = vunpack.c.l.bf16 %v617
        %v634 = vunpack.c.l.bf16 %v618
        %v635 = vunpack.c.l.bf16 %v619
        %v636 = vunpack.c.l.bf16 %v620
        %v637 = vunpack.c.l.bf16 %v621
        %v638 = vadd.f32 %v590, %v622
        %v639 = vadd.f32 %v591, %v623
        %v640 = vadd.f32 %v592, %v624
        %v641 = vadd.f32 %v593, %v625
        %v642 = vadd.f32 %v594, %v626
        %v643 = vadd.f32 %v595, %v627
        %v644 = vadd.f32 %v596, %v628
        %v645 = vadd.f32 %v597, %v629
        %v646 = vadd.f32 %v598, %v630
        %v647 = vadd.f32 %v599, %v631
        %v648 = vadd.f32 %v600, %v632
        %v649 = vadd.f32 %v601, %v633
        %v650 = vadd.f32 %v602, %v634
        %v651 = vadd.f32 %v603, %v635
        %v652 = vadd.f32 %v604, %v636
        %v653 = vadd.f32 %v605, %v637
        %v654 = vld [vmem:[#allocation2] sm:$0xff]
        %v655 = vld [vmem:[#allocation2 + $0x8] sm:$0xff]
        %v656 = vld [vmem:[#allocation2 + $0x10] sm:$0xff]
        %v657 = vld [vmem:[#allocation2 + $0x18] sm:$0xff]
        %v658 = vld [vmem:[#allocation2 + $0x20] sm:$0xff]
        %v659 = vld [vmem:[#allocation2 + $0x28] sm:$0xff]
        %v660 = vld [vmem:[#allocation2 + $0x30] sm:$0xff]
        %v661 = vld [vmem:[#allocation2 + $0x38] sm:$0xff]
        %v662 = vld [vmem:[#allocation2 + $0x40] sm:$0xff]
        %v663 = vld [vmem:[#allocation2 + $0x48] sm:$0xff]
        %v664 = vld [vmem:[#allocation2 + $0x50] sm:$0xff]
        %v665 = vld [vmem:[#allocation2 + $0x58] sm:$0xff]
        %v666 = vld [vmem:[#allocation2 + $0x60] sm:$0xff]
        %v667 = vld [vmem:[#allocation2 + $0x68] sm:$0xff]
        %v668 = vld [vmem:[#allocation2 + $0x70] sm:$0xff]
        %v669 = vld [vmem:[#allocation2 + $0x78] sm:$0xff]
        %670 = vmax.xlane.f32.xlu0 %v638
        %v671 = vpop.xlane.xlu0 %670
        %672 = vmax.xlane.f32.xlu0 %v639
        %v673 = vpop.xlane.xlu0 %672
        %674 = vmax.xlane.f32.xlu0 %v640
        %v675 = vpop.xlane.xlu0 %674
        %676 = vmax.xlane.f32.xlu0 %v641
        %v677 = vpop.xlane.xlu0 %676
        %678 = vmax.xlane.f32.xlu0 %v642
        %v679 = vpop.xlane.xlu0 %678
        %680 = vmax.xlane.f32.xlu0 %v643
        %v681 = vpop.xlane.xlu0 %680
        %682 = vmax.xlane.f32.xlu0 %v644
        %v683 = vpop.xlane.xlu0 %682
        %684 = vmax.xlane.f32.xlu0 %v645
        %v685 = vpop.xlane.xlu0 %684
        %686 = vmax.xlane.f32.xlu0 %v646
        %v687 = vpop.xlane.xlu0 %686
        %688 = vmax.xlane.f32.xlu0 %v647
        %v689 = vpop.xlane.xlu0 %688
        %690 = vmax.xlane.f32.xlu0 %v648
        %v691 = vpop.xlane.xlu0 %690
        %692 = vmax.xlane.f32.xlu0 %v649
        %v693 = vpop.xlane.xlu0 %692
        %694 = vmax.xlane.f32.xlu0 %v650
        %v695 = vpop.xlane.xlu0 %694
        %696 = vmax.xlane.f32.xlu0 %v651
        %v697 = vpop.xlane.xlu0 %696
        %698 = vmax.xlane.f32.xlu0 %v652
        %v699 = vpop.xlane.xlu0 %698
        %700 = vmax.xlane.f32.xlu0 %v653
        %v701 = vpop.xlane.xlu0 %700
        %v702 = vmax.f32 %v654, %v671
        %v703 = vmax.f32 %v655, %v673
        %v704 = vmax.f32 %v656, %v675
        %v705 = vmax.f32 %v657, %v677
        %v706 = vmax.f32 %v658, %v679
        %v707 = vmax.f32 %v659, %v681
        %v708 = vmax.f32 %v660, %v683
        %v709 = vmax.f32 %v661, %v685
        %v710 = vmax.f32 %v662, %v687
        %v711 = vmax.f32 %v663, %v689
        %v712 = vmax.f32 %v664, %v691
        %v713 = vmax.f32 %v665, %v693
        %v714 = vmax.f32 %v666, %v695
        %v715 = vmax.f32 %v667, %v697
        %v716 = vmax.f32 %v668, %v699
        %v717 = vmax.f32 %v669, %v701
        %v718 = vsub.f32 %v654, %v702
        %v719 = vsub.f32 %v655, %v703
        %v720 = vsub.f32 %v656, %v704
        %v721 = vsub.f32 %v657, %v705
        %v722 = vsub.f32 %v658, %v706
        %v723 = vsub.f32 %v659, %v707
        %v724 = vsub.f32 %v660, %v708
        %v725 = vsub.f32 %v661, %v709
        %v726 = vsub.f32 %v662, %v710
        %v727 = vsub.f32 %v663, %v711
        %v728 = vsub.f32 %v664, %v712
        %v729 = vsub.f32 %v665, %v713
        %v730 = vsub.f32 %v666, %v714
        %v731 = vsub.f32 %v667, %v715
        %v732 = vsub.f32 %v668, %v716
        %v733 = vsub.f32 %v669, %v717
        %v734 = vmul.f32 %v718, 1.442695
        %v735 = vpow.pop %v734
        %v736 = vmul.f32 %v719, 1.442695
        %v737 = vpow.pop %v736
        %v738 = vmul.f32 %v720, 1.442695
        %v739 = vpow.pop %v738
        %v740 = vmul.f32 %v721, 1.442695
        %v741 = vpow.pop %v740
        %v742 = vmul.f32 %v722, 1.442695
        %v743 = vpow.pop %v742
        %v744 = vmul.f32 %v723, 1.442695
        %v745 = vpow.pop %v744
        %v746 = vmul.f32 %v724, 1.442695
        %v747 = vpow.pop %v746
        %v748 = vmul.f32 %v725, 1.442695
        %v749 = vpow.pop %v748
        %v750 = vmul.f32 %v726, 1.442695
        %v751 = vpow.pop %v750
        %v752 = vmul.f32 %v727, 1.442695
        %v753 = vpow.pop %v752
        %v754 = vmul.f32 %v728, 1.442695
        %v755 = vpow.pop %v754
        %v756 = vmul.f32 %v729, 1.442695
        %v757 = vpow.pop %v756
        %v758 = vmul.f32 %v730, 1.442695
        %v759 = vpow.pop %v758
        %v760 = vmul.f32 %v731, 1.442695
        %v761 = vpow.pop %v760
        %v762 = vmul.f32 %v732, 1.442695
        %v763 = vpow.pop %v762
        %v764 = vmul.f32 %v733, 1.442695
        %v765 = vpow.pop %v764
        %767 = vset.pattern.permute.xlu0 0
        %768 = vperm.xlu0 %767, %v702
        %v769 = vpop.permute.xlu0 %768
        %772 = vset.pattern.permute.xlu0 0
        %773 = vperm.xlu0 %772, %v703
        %v774 = vpop.permute.xlu0 %773
        %777 = vset.pattern.permute.xlu0 0
        %778 = vperm.xlu0 %777, %v704
        %v779 = vpop.permute.xlu0 %778
        %782 = vset.pattern.permute.xlu0 0
        %783 = vperm.xlu0 %782, %v705
        %v784 = vpop.permute.xlu0 %783
        %787 = vset.pattern.permute.xlu0 0
        %788 = vperm.xlu0 %787, %v706
        %v789 = vpop.permute.xlu0 %788
        %792 = vset.pattern.permute.xlu0 0
        %793 = vperm.xlu0 %792, %v707
        %v794 = vpop.permute.xlu0 %793
        %797 = vset.pattern.permute.xlu0 0
        %798 = vperm.xlu0 %797, %v708
        %v799 = vpop.permute.xlu0 %798
        %802 = vset.pattern.permute.xlu0 0
        %803 = vperm.xlu0 %802, %v709
        %v804 = vpop.permute.xlu0 %803
        %807 = vset.pattern.permute.xlu0 0
        %808 = vperm.xlu0 %807, %v710
        %v809 = vpop.permute.xlu0 %808
        %812 = vset.pattern.permute.xlu0 0
        %813 = vperm.xlu0 %812, %v711
        %v814 = vpop.permute.xlu0 %813
        %817 = vset.pattern.permute.xlu0 0
        %818 = vperm.xlu0 %817, %v712
        %v819 = vpop.permute.xlu0 %818
        %822 = vset.pattern.permute.xlu0 0
        %823 = vperm.xlu0 %822, %v713
        %v824 = vpop.permute.xlu0 %823
        %827 = vset.pattern.permute.xlu0 0
        %828 = vperm.xlu0 %827, %v714
        %v829 = vpop.permute.xlu0 %828
        %832 = vset.pattern.permute.xlu0 0
        %833 = vperm.xlu0 %832, %v715
        %v834 = vpop.permute.xlu0 %833
        %837 = vset.pattern.permute.xlu0 0
        %838 = vperm.xlu0 %837, %v716
        %v839 = vpop.permute.xlu0 %838
        %842 = vset.pattern.permute.xlu0 0
        %843 = vperm.xlu0 %842, %v717
        %v844 = vpop.permute.xlu0 %843
        %v846 = vsub.f32 %v638, %v769
        %v847 = vsub.f32 %v639, %v774
        %v848 = vsub.f32 %v640, %v779
        %v849 = vsub.f32 %v641, %v784
        %v850 = vsub.f32 %v642, %v789
        %v851 = vsub.f32 %v643, %v794
        %v852 = vsub.f32 %v644, %v799
        %v853 = vsub.f32 %v645, %v804
        %v854 = vsub.f32 %v646, %v809
        %v855 = vsub.f32 %v647, %v814
        %v856 = vsub.f32 %v648, %v819
        %v857 = vsub.f32 %v649, %v824
        %v858 = vsub.f32 %v650, %v829
        %v859 = vsub.f32 %v651, %v834
        %v860 = vsub.f32 %v652, %v839
        %v861 = vsub.f32 %v653, %v844
        %v862 = vmul.f32 %v846, 1.442695
        %v863 = vpow.pop %v862
        %v864 = vmul.f32 %v847, 1.442695
        %v865 = vpow.pop %v864
        %v866 = vmul.f32 %v848, 1.442695
        %v867 = vpow.pop %v866
        %v868 = vmul.f32 %v849, 1.442695
        %v869 = vpow.pop %v868
        %v870 = vmul.f32 %v850, 1.442695
        %v871 = vpow.pop %v870
        %v872 = vmul.f32 %v851, 1.442695
        %v873 = vpow.pop %v872
        %v874 = vmul.f32 %v852, 1.442695
        %v875 = vpow.pop %v874
        %v876 = vmul.f32 %v853, 1.442695
        %v877 = vpow.pop %v876
        %v878 = vmul.f32 %v854, 1.442695
        %v879 = vpow.pop %v878
        %v880 = vmul.f32 %v855, 1.442695
        %v881 = vpow.pop %v880
        %v882 = vmul.f32 %v856, 1.442695
        %v883 = vpow.pop %v882
        %v884 = vmul.f32 %v857, 1.442695
        %v885 = vpow.pop %v884
        %v886 = vmul.f32 %v858, 1.442695
        %v887 = vpow.pop %v886
        %v888 = vmul.f32 %v859, 1.442695
        %v889 = vpow.pop %v888
        %v890 = vmul.f32 %v860, 1.442695
        %v891 = vpow.pop %v890
        %v892 = vmul.f32 %v861, 1.442695
        %v893 = vpow.pop %v892
        %v894 = vld [vmem:[#allocation3] sm:$0xff]
        %v895 = vld [vmem:[#allocation3 + $0x8] sm:$0xff]
        %v896 = vld [vmem:[#allocation3 + $0x10] sm:$0xff]
        %v897 = vld [vmem:[#allocation3 + $0x18] sm:$0xff]
        %v898 = vld [vmem:[#allocation3 + $0x20] sm:$0xff]
        %v899 = vld [vmem:[#allocation3 + $0x28] sm:$0xff]
        %v900 = vld [vmem:[#allocation3 + $0x30] sm:$0xff]
        %v901 = vld [vmem:[#allocation3 + $0x38] sm:$0xff]
        %v902 = vld [vmem:[#allocation3 + $0x40] sm:$0xff]
        %v903 = vld [vmem:[#allocation3 + $0x48] sm:$0xff]
        %v904 = vld [vmem:[#allocation3 + $0x50] sm:$0xff]
        %v905 = vld [vmem:[#allocation3 + $0x58] sm:$0xff]
        %v906 = vld [vmem:[#allocation3 + $0x60] sm:$0xff]
        %v907 = vld [vmem:[#allocation3 + $0x68] sm:$0xff]
        %v908 = vld [vmem:[#allocation3 + $0x70] sm:$0xff]
        %v909 = vld [vmem:[#allocation3 + $0x78] sm:$0xff]
        %v910 = vmul.f32 %v735, %v894
        %v911 = vmul.f32 %v737, %v895
        %v912 = vmul.f32 %v739, %v896
        %v913 = vmul.f32 %v741, %v897
        %v914 = vmul.f32 %v743, %v898
        %v915 = vmul.f32 %v745, %v899
        %v916 = vmul.f32 %v747, %v900
        %v917 = vmul.f32 %v749, %v901
        %v918 = vmul.f32 %v751, %v902
        %v919 = vmul.f32 %v753, %v903
        %v920 = vmul.f32 %v755, %v904
        %v921 = vmul.f32 %v757, %v905
        %v922 = vmul.f32 %v759, %v906
        %v923 = vmul.f32 %v761, %v907
        %v924 = vmul.f32 %v763, %v908
        %v925 = vmul.f32 %v765, %v909
        %926 = vadd.xlane.f32.xlu0 %v863
        %v927 = vpop.xlane.xlu0 %926
        %928 = vadd.xlane.f32.xlu0 %v865
        %v929 = vpop.xlane.xlu0 %928
        %930 = vadd.xlane.f32.xlu0 %v867
        %v931 = vpop.xlane.xlu0 %930
        %932 = vadd.xlane.f32.xlu0 %v869
        %v933 = vpop.xlane.xlu0 %932
        %934 = vadd.xlane.f32.xlu0 %v871
        %v935 = vpop.xlane.xlu0 %934
        %936 = vadd.xlane.f32.xlu0 %v873
        %v937 = vpop.xlane.xlu0 %936
        %938 = vadd.xlane.f32.xlu0 %v875
        %v939 = vpop.xlane.xlu0 %938
        %940 = vadd.xlane.f32.xlu0 %v877
        %v941 = vpop.xlane.xlu0 %940
        %942 = vadd.xlane.f32.xlu0 %v879
        %v943 = vpop.xlane.xlu0 %942
        %944 = vadd.xlane.f32.xlu0 %v881
        %v945 = vpop.xlane.xlu0 %944
        %946 = vadd.xlane.f32.xlu0 %v883
        %v947 = vpop.xlane.xlu0 %946
        %948 = vadd.xlane.f32.xlu0 %v885
        %v949 = vpop.xlane.xlu0 %948
        %950 = vadd.xlane.f32.xlu0 %v887
        %v951 = vpop.xlane.xlu0 %950
        %952 = vadd.xlane.f32.xlu0 %v889
        %v953 = vpop.xlane.xlu0 %952
        %954 = vadd.xlane.f32.xlu0 %v891
        %v955 = vpop.xlane.xlu0 %954
        %956 = vadd.xlane.f32.xlu0 %v893
        %v957 = vpop.xlane.xlu0 %956
        %v958 = vadd.f32 %v910, %v927
        %v959 = vadd.f32 %v911, %v929
        %v960 = vadd.f32 %v912, %v931
        %v961 = vadd.f32 %v913, %v933
        %v962 = vadd.f32 %v914, %v935
        %v963 = vadd.f32 %v915, %v937
        %v964 = vadd.f32 %v916, %v939
        %v965 = vadd.f32 %v917, %v941
        %v966 = vadd.f32 %v918, %v943
        %v967 = vadd.f32 %v919, %v945
        %v968 = vadd.f32 %v920, %v947
        %v969 = vadd.f32 %v921, %v949
        %v970 = vadd.f32 %v922, %v951
        %v971 = vadd.f32 %v923, %v953
        %v972 = vadd.f32 %v924, %v955
        %v973 = vadd.f32 %v925, %v957
        %vm974 = vcmask 7168
        %975 = vst.msk [vmem:[#allocation3] sm:$0xff] %vm974, %v958
        %976 = vst.msk [vmem:[#allocation3 + $0x8] sm:$0xff] %vm974, %v959
        %977 = vst.msk [vmem:[#allocation3 + $0x10] sm:$0xff] %vm974, %v960
        %978 = vst.msk [vmem:[#allocation3 + $0x18] sm:$0xff] %vm974, %v961
        %979 = vst.msk [vmem:[#allocation3 + $0x20] sm:$0xff] %vm974, %v962
        %980 = vst.msk [vmem:[#allocation3 + $0x28] sm:$0xff] %vm974, %v963
        %981 = vst.msk [vmem:[#allocation3 + $0x30] sm:$0xff] %vm974, %v964
        %982 = vst.msk [vmem:[#allocation3 + $0x38] sm:$0xff] %vm974, %v965
        %983 = vst.msk [vmem:[#allocation3 + $0x40] sm:$0xff] %vm974, %v966
        %984 = vst.msk [vmem:[#allocation3 + $0x48] sm:$0xff] %vm974, %v967
        %985 = vst.msk [vmem:[#allocation3 + $0x50] sm:$0xff] %vm974, %v968
        %986 = vst.msk [vmem:[#allocation3 + $0x58] sm:$0xff] %vm974, %v969
        %987 = vst.msk [vmem:[#allocation3 + $0x60] sm:$0xff] %vm974, %v970
        %988 = vst.msk [vmem:[#allocation3 + $0x68] sm:$0xff] %vm974, %v971
        %989 = vst.msk [vmem:[#allocation3 + $0x70] sm:$0xff] %vm974, %v972
        %990 = vst.msk [vmem:[#allocation3 + $0x78] sm:$0xff] %vm974, %v973
        %v991 = vld [vmem:[#allocation4] sm:$0xff]
        %v992 = vld [vmem:[#allocation4 + $0x8] sm:$0xff]
        %v993 = vld [vmem:[#allocation4 + $0x10] sm:$0xff]
        %v994 = vld [vmem:[#allocation4 + $0x18] sm:$0xff]
        %v995 = vld [vmem:[#allocation4 + $0x20] sm:$0xff]
        %v996 = vld [vmem:[#allocation4 + $0x28] sm:$0xff]
        %v997 = vld [vmem:[#allocation4 + $0x30] sm:$0xff]
        %v998 = vld [vmem:[#allocation4 + $0x38] sm:$0xff]
        %v999 = vld [vmem:[#allocation4 + $0x40] sm:$0xff]
        %v1000 = vld [vmem:[#allocation4 + $0x48] sm:$0xff]
        %v1001 = vld [vmem:[#allocation4 + $0x50] sm:$0xff]
        %v1002 = vld [vmem:[#allocation4 + $0x58] sm:$0xff]
        %v1003 = vld [vmem:[#allocation4 + $0x60] sm:$0xff]
        %v1004 = vld [vmem:[#allocation4 + $0x68] sm:$0xff]
        %v1005 = vld [vmem:[#allocation4 + $0x70] sm:$0xff]
        %v1006 = vld [vmem:[#allocation4 + $0x78] sm:$0xff]
        %1008 = vset.pattern.permute.xlu0 0
        %1009 = vperm.xlu0 %1008, %v735
        %v1010 = vpop.permute.xlu0 %1009
        %1013 = vset.pattern.permute.xlu0 0
        %1014 = vperm.xlu0 %1013, %v737
        %v1015 = vpop.permute.xlu0 %1014
        %1018 = vset.pattern.permute.xlu0 0
        %1019 = vperm.xlu0 %1018, %v739
        %v1020 = vpop.permute.xlu0 %1019
        %1023 = vset.pattern.permute.xlu0 0
        %1024 = vperm.xlu0 %1023, %v741
        %v1025 = vpop.permute.xlu0 %1024
        %1028 = vset.pattern.permute.xlu0 0
        %1029 = vperm.xlu0 %1028, %v743
        %v1030 = vpop.permute.xlu0 %1029
        %1033 = vset.pattern.permute.xlu0 0
        %1034 = vperm.xlu0 %1033, %v745
        %v1035 = vpop.permute.xlu0 %1034
        %1038 = vset.pattern.permute.xlu0 0
        %1039 = vperm.xlu0 %1038, %v747
        %v1040 = vpop.permute.xlu0 %1039
        %1043 = vset.pattern.permute.xlu0 0
        %1044 = vperm.xlu0 %1043, %v749
        %v1045 = vpop.permute.xlu0 %1044
        %1048 = vset.pattern.permute.xlu0 0
        %1049 = vperm.xlu0 %1048, %v751
        %v1050 = vpop.permute.xlu0 %1049
        %1053 = vset.pattern.permute.xlu0 0
        %1054 = vperm.xlu0 %1053, %v753
        %v1055 = vpop.permute.xlu0 %1054
        %1058 = vset.pattern.permute.xlu0 0
        %1059 = vperm.xlu0 %1058, %v755
        %v1060 = vpop.permute.xlu0 %1059
        %1063 = vset.pattern.permute.xlu0 0
        %1064 = vperm.xlu0 %1063, %v757
        %v1065 = vpop.permute.xlu0 %1064
        %1068 = vset.pattern.permute.xlu0 0
        %1069 = vperm.xlu0 %1068, %v759
        %v1070 = vpop.permute.xlu0 %1069
        %1073 = vset.pattern.permute.xlu0 0
        %1074 = vperm.xlu0 %1073, %v761
        %v1075 = vpop.permute.xlu0 %1074
        %1078 = vset.pattern.permute.xlu0 0
        %1079 = vperm.xlu0 %1078, %v763
        %v1080 = vpop.permute.xlu0 %1079
        %1083 = vset.pattern.permute.xlu0 0
        %1084 = vperm.xlu0 %1083, %v765
        %v1085 = vpop.permute.xlu0 %1084
        %v1087 = vmul.f32 %v1010, %v991
        %v1088 = vmul.f32 %v1015, %v992
        %v1089 = vmul.f32 %v1020, %v993
        %v1090 = vmul.f32 %v1025, %v994
        %v1091 = vmul.f32 %v1030, %v995
        %v1092 = vmul.f32 %v1035, %v996
        %v1093 = vmul.f32 %v1040, %v997
        %v1094 = vmul.f32 %v1045, %v998
        %v1095 = vmul.f32 %v1050, %v999
        %v1096 = vmul.f32 %v1055, %v1000
        %v1097 = vmul.f32 %v1060, %v1001
        %v1098 = vmul.f32 %v1065, %v1002
        %v1099 = vmul.f32 %v1070, %v1003
        %v1100 = vmul.f32 %v1075, %v1004
        %v1101 = vmul.f32 %v1080, %v1005
        %v1102 = vmul.f32 %v1085, %v1006
        %v1103 = vpack.c.bf16 %v865, %v863
        %v1104 = vpack.c.bf16 %v869, %v867
        %v1105 = vpack.c.bf16 %v873, %v871
        %v1106 = vpack.c.bf16 %v877, %v875
        %v1107 = vpack.c.bf16 %v881, %v879
        %v1108 = vpack.c.bf16 %v885, %v883
        %v1109 = vpack.c.bf16 %v889, %v887
        %v1110 = vpack.c.bf16 %v893, %v891
        %v1111 = vld [vmem:[%s396] sm:$0xf]
        %v1112 = vld [vmem:[%s396 + $0x4] sm:$0xf]
        %v1113 = vld [vmem:[%s396 + $0x8] sm:$0xf]
        %v1114 = vld [vmem:[%s396 + $0xc] sm:$0xf]
        %v1115 = vld [vmem:[%s396 + $0x10] sm:$0xf]
        %v1116 = vld [vmem:[%s396 + $0x14] sm:$0xf]
        %v1117 = vld [vmem:[%s396 + $0x18] sm:$0xf]
        %v1118 = vld [vmem:[%s396 + $0x1c] sm:$0xf]
        %v1119 = vld [vmem:[%s396 + $0x20] sm:$0xf]
        %v1120 = vld [vmem:[%s396 + $0x24] sm:$0xf]
        %v1121 = vld [vmem:[%s396 + $0x28] sm:$0xf]
        %v1122 = vld [vmem:[%s396 + $0x2c] sm:$0xf]
        %v1123 = vld [vmem:[%s396 + $0x30] sm:$0xf]
        %v1124 = vld [vmem:[%s396 + $0x34] sm:$0xf]
        %v1125 = vld [vmem:[%s396 + $0x38] sm:$0xf]
        %v1126 = vld [vmem:[%s396 + $0x3c] sm:$0xf]
        %v1143 = vunpack.c.l.b16 %v1111
        %v1144 = vunpack.c.l.b16 %v1112
        %v1145 = vunpack.c.l.b16 %v1113
        %v1146 = vunpack.c.l.b16 %v1114
        %v1147 = vunpack.c.l.b16 %v1115
        %v1148 = vunpack.c.l.b16 %v1116
        %v1149 = vunpack.c.l.b16 %v1117
        %v1150 = vunpack.c.l.b16 %v1118
        %v1151 = vunpack.c.l.b16 %v1119
        %v1152 = vunpack.c.l.b16 %v1120
        %v1153 = vunpack.c.l.b16 %v1121
        %v1154 = vunpack.c.l.b16 %v1122
        %v1155 = vunpack.c.l.b16 %v1123
        %v1156 = vunpack.c.l.b16 %v1124
        %v1157 = vunpack.c.l.b16 %v1125
        %v1158 = vunpack.c.l.b16 %v1126
        %v1159 = vpack.c.b16 %v1144, %v1143
        %v1160 = vpack.c.b16 %v1146, %v1145
        %v1161 = vpack.c.b16 %v1148, %v1147
        %v1162 = vpack.c.b16 %v1150, %v1149
        %v1163 = vpack.c.b16 %v1152, %v1151
        %v1164 = vpack.c.b16 %v1154, %v1153
        %v1165 = vpack.c.b16 %v1156, %v1155
        %v1166 = vpack.c.b16 %v1158, %v1157
        %1175 = vmatpush.bf16.msra.mxu0 %v1166
        %1176 = vmatpush.bf16.msra.mxu0 %v1165
        %1177 = vmatpush.bf16.msra.mxu0 %v1164
        %1178 = vmatpush.bf16.msra.mxu0 %v1163
        %1179 = vmatpush.bf16.msra.mxu0 %v1162
        %1180 = vmatpush.bf16.msra.mxu0 %v1161
        %1181 = vmatpush.bf16.msra.mxu0 %v1160
        %1182 = vmatpush.bf16.msra.mxu0 %v1159
        %1183 = vmatmul.bf16.gmra.mxu0 %v1103
        %v1184 = vpop.f32.mrf.mxu0
        %v1185 = vadd.f32 0.0, %v1184
        %v1186 = vpop.f32.mrf.mxu0
        %v1187 = vadd.f32 0.0, %v1186
        %1188 = vmatmul.bf16.gmra.mxu0 %v1104
        %v1189 = vpop.f32.mrf.mxu0
        %v1190 = vadd.f32 0.0, %v1189
        %v1191 = vpop.f32.mrf.mxu0
        %v1192 = vadd.f32 0.0, %v1191
        %1193 = vmatmul.bf16.gmra.mxu0 %v1105
        %v1194 = vpop.f32.mrf.mxu0
        %v1195 = vadd.f32 0.0, %v1194
        %v1196 = vpop.f32.mrf.mxu0
        %v1197 = vadd.f32 0.0, %v1196
        %1198 = vmatmul.bf16.gmra.mxu0 %v1106
        %v1199 = vpop.f32.mrf.mxu0
        %v1200 = vadd.f32 0.0, %v1199
        %v1201 = vpop.f32.mrf.mxu0
        %v1202 = vadd.f32 0.0, %v1201
        %1203 = vmatmul.bf16.gmra.mxu0 %v1107
        %v1204 = vpop.f32.mrf.mxu0
        %v1205 = vadd.f32 0.0, %v1204
        %v1206 = vpop.f32.mrf.mxu0
        %v1207 = vadd.f32 0.0, %v1206
        %1208 = vmatmul.bf16.gmra.mxu0 %v1108
        %v1209 = vpop.f32.mrf.mxu0
        %v1210 = vadd.f32 0.0, %v1209
        %v1211 = vpop.f32.mrf.mxu0
        %v1212 = vadd.f32 0.0, %v1211
        %1213 = vmatmul.bf16.gmra.mxu0 %v1109
        %v1214 = vpop.f32.mrf.mxu0
        %v1215 = vadd.f32 0.0, %v1214
        %v1216 = vpop.f32.mrf.mxu0
        %v1217 = vadd.f32 0.0, %v1216
        %1218 = vmatmul.bf16.gmra.mxu0 %v1110
        %v1219 = vpop.f32.mrf.mxu0
        %v1220 = vadd.f32 0.0, %v1219
        %v1221 = vpop.f32.mrf.mxu0
        %v1222 = vadd.f32 0.0, %v1221
        %1223 = vdwg.mxu0
        %v1224 = vadd.f32 %v1087, %v1185
        %v1225 = vadd.f32 %v1088, %v1187
        %v1226 = vadd.f32 %v1089, %v1190
        %v1227 = vadd.f32 %v1090, %v1192
        %v1228 = vadd.f32 %v1091, %v1195
        %v1229 = vadd.f32 %v1092, %v1197
        %v1230 = vadd.f32 %v1093, %v1200
        %v1231 = vadd.f32 %v1094, %v1202
        %v1232 = vadd.f32 %v1095, %v1205
        %v1233 = vadd.f32 %v1096, %v1207
        %v1234 = vadd.f32 %v1097, %v1210
        %v1235 = vadd.f32 %v1098, %v1212
        %v1236 = vadd.f32 %v1099, %v1215
        %v1237 = vadd.f32 %v1100, %v1217
        %v1238 = vadd.f32 %v1101, %v1220
        %v1239 = vadd.f32 %v1102, %v1222
        %1240 = vst [vmem:[#allocation4] sm:$0xff] %v1224
        %1241 = vst [vmem:[#allocation4 + $0x8] sm:$0xff] %v1225
        %1242 = vst [vmem:[#allocation4 + $0x10] sm:$0xff] %v1226
        %1243 = vst [vmem:[#allocation4 + $0x18] sm:$0xff] %v1227
        %1244 = vst [vmem:[#allocation4 + $0x20] sm:$0xff] %v1228
        %1245 = vst [vmem:[#allocation4 + $0x28] sm:$0xff] %v1229
        %1246 = vst [vmem:[#allocation4 + $0x30] sm:$0xff] %v1230
        %1247 = vst [vmem:[#allocation4 + $0x38] sm:$0xff] %v1231
        %1248 = vst [vmem:[#allocation4 + $0x40] sm:$0xff] %v1232
        %1249 = vst [vmem:[#allocation4 + $0x48] sm:$0xff] %v1233
        %1250 = vst [vmem:[#allocation4 + $0x50] sm:$0xff] %v1234
        %1251 = vst [vmem:[#allocation4 + $0x58] sm:$0xff] %v1235
        %1252 = vst [vmem:[#allocation4 + $0x60] sm:$0xff] %v1236
        %1253 = vst [vmem:[#allocation4 + $0x68] sm:$0xff] %v1237
        %1254 = vst [vmem:[#allocation4 + $0x70] sm:$0xff] %v1238
        %1255 = vst [vmem:[#allocation4 + $0x78] sm:$0xff] %v1239
        %1256 = vst.msk [vmem:[#allocation2] sm:$0xff] %vm974, %v702
        %1257 = vst.msk [vmem:[#allocation2 + $0x8] sm:$0xff] %vm974, %v703
        %1258 = vst.msk [vmem:[#allocation2 + $0x10] sm:$0xff] %vm974, %v704
        %1259 = vst.msk [vmem:[#allocation2 + $0x18] sm:$0xff] %vm974, %v705
        %1260 = vst.msk [vmem:[#allocation2 + $0x20] sm:$0xff] %vm974, %v706
        %1261 = vst.msk [vmem:[#allocation2 + $0x28] sm:$0xff] %vm974, %v707
        %1262 = vst.msk [vmem:[#allocation2 + $0x30] sm:$0xff] %vm974, %v708
        %1263 = vst.msk [vmem:[#allocation2 + $0x38] sm:$0xff] %vm974, %v709
        %1264 = vst.msk [vmem:[#allocation2 + $0x40] sm:$0xff] %vm974, %v710
        %1265 = vst.msk [vmem:[#allocation2 + $0x48] sm:$0xff] %vm974, %v711
        %1266 = vst.msk [vmem:[#allocation2 + $0x50] sm:$0xff] %vm974, %v712
        %1267 = vst.msk [vmem:[#allocation2 + $0x58] sm:$0xff] %vm974, %v713
        %1268 = vst.msk [vmem:[#allocation2 + $0x60] sm:$0xff] %vm974, %v714
        %1269 = vst.msk [vmem:[#allocation2 + $0x68] sm:$0xff] %vm974, %v715
        %1270 = vst.msk [vmem:[#allocation2 + $0x70] sm:$0xff] %vm974, %v716
        %1271 = vst.msk [vmem:[#allocation2 + $0x78] sm:$0xff] %vm974, %v717
        %p1272 = scmp.eq.s32.totalorder %s21, 1
        // Predicated region
        $region86: #{gat_forward.11} parent=76 // pred_check
          %p1273 = pneg %p1272
        $region87: #{gat_forward.11} parent=76 // pred_check_branch
          %1275 = sbr.rel (%p1273) target = $region89
        $region88: #{gat_forward.11} parent=76 // pred_region
          %v1276 = vld [vmem:[#allocation3] sm:$0xff]
          %v1277 = vld [vmem:[#allocation3 + $0x8] sm:$0xff]
          %v1278 = vld [vmem:[#allocation3 + $0x10] sm:$0xff]
          %v1279 = vld [vmem:[#allocation3 + $0x18] sm:$0xff]
          %v1280 = vld [vmem:[#allocation3 + $0x20] sm:$0xff]
          %v1281 = vld [vmem:[#allocation3 + $0x28] sm:$0xff]
          %v1282 = vld [vmem:[#allocation3 + $0x30] sm:$0xff]
          %v1283 = vld [vmem:[#allocation3 + $0x38] sm:$0xff]
          %v1284 = vld [vmem:[#allocation3 + $0x40] sm:$0xff]
          %v1285 = vld [vmem:[#allocation3 + $0x48] sm:$0xff]
          %v1286 = vld [vmem:[#allocation3 + $0x50] sm:$0xff]
          %v1287 = vld [vmem:[#allocation3 + $0x58] sm:$0xff]
          %v1288 = vld [vmem:[#allocation3 + $0x60] sm:$0xff]
          %v1289 = vld [vmem:[#allocation3 + $0x68] sm:$0xff]
          %v1290 = vld [vmem:[#allocation3 + $0x70] sm:$0xff]
          %v1291 = vld [vmem:[#allocation3 + $0x78] sm:$0xff]
          %v1292 = vmax.f32 %v1276, 1e-30
          %v1293 = vmax.f32 %v1277, 1e-30
          %v1294 = vmax.f32 %v1278, 1e-30
          %v1295 = vmax.f32 %v1279, 1e-30
          %v1296 = vmax.f32 %v1280, 1e-30
          %v1297 = vmax.f32 %v1281, 1e-30
          %v1298 = vmax.f32 %v1282, 1e-30
          %v1299 = vmax.f32 %v1283, 1e-30
          %v1300 = vmax.f32 %v1284, 1e-30
          %v1301 = vmax.f32 %v1285, 1e-30
          %v1302 = vmax.f32 %v1286, 1e-30
          %v1303 = vmax.f32 %v1287, 1e-30
          %v1304 = vmax.f32 %v1288, 1e-30
          %v1305 = vmax.f32 %v1289, 1e-30
          %v1306 = vmax.f32 %v1290, 1e-30
          %v1307 = vmax.f32 %v1291, 1e-30
          %v1308 = vrcp.pop %v1292
          %v1309 = vrcp.pop %v1293
          %v1310 = vrcp.pop %v1294
          %v1311 = vrcp.pop %v1295
          %v1312 = vrcp.pop %v1296
          %v1313 = vrcp.pop %v1297
          %v1314 = vrcp.pop %v1298
          %v1315 = vrcp.pop %v1299
          %v1316 = vrcp.pop %v1300
          %v1317 = vrcp.pop %v1301
          %v1318 = vrcp.pop %v1302
          %v1319 = vrcp.pop %v1303
          %v1320 = vrcp.pop %v1304
          %v1321 = vrcp.pop %v1305
          %v1322 = vrcp.pop %v1306
          %v1323 = vrcp.pop %v1307
          %v1324 = vld [vmem:[#allocation4] sm:$0xff]
          %v1325 = vld [vmem:[#allocation4 + $0x8] sm:$0xff]
          %v1326 = vld [vmem:[#allocation4 + $0x10] sm:$0xff]
          %v1327 = vld [vmem:[#allocation4 + $0x18] sm:$0xff]
          %v1328 = vld [vmem:[#allocation4 + $0x20] sm:$0xff]
          %v1329 = vld [vmem:[#allocation4 + $0x28] sm:$0xff]
          %v1330 = vld [vmem:[#allocation4 + $0x30] sm:$0xff]
          %v1331 = vld [vmem:[#allocation4 + $0x38] sm:$0xff]
          %v1332 = vld [vmem:[#allocation4 + $0x40] sm:$0xff]
          %v1333 = vld [vmem:[#allocation4 + $0x48] sm:$0xff]
          %v1334 = vld [vmem:[#allocation4 + $0x50] sm:$0xff]
          %v1335 = vld [vmem:[#allocation4 + $0x58] sm:$0xff]
          %v1336 = vld [vmem:[#allocation4 + $0x60] sm:$0xff]
          %v1337 = vld [vmem:[#allocation4 + $0x68] sm:$0xff]
          %v1338 = vld [vmem:[#allocation4 + $0x70] sm:$0xff]
          %v1339 = vld [vmem:[#allocation4 + $0x78] sm:$0xff]
          %1341 = vset.pattern.permute.xlu0 0
          %1342 = vperm.xlu0 %1341, %v1308
          %v1343 = vpop.permute.xlu0 %1342
          %1346 = vset.pattern.permute.xlu0 0
          %1347 = vperm.xlu0 %1346, %v1309
          %v1348 = vpop.permute.xlu0 %1347
          %1351 = vset.pattern.permute.xlu0 0
          %1352 = vperm.xlu0 %1351, %v1310
          %v1353 = vpop.permute.xlu0 %1352
          %1356 = vset.pattern.permute.xlu0 0
          %1357 = vperm.xlu0 %1356, %v1311
          %v1358 = vpop.permute.xlu0 %1357
          %1361 = vset.pattern.permute.xlu0 0
          %1362 = vperm.xlu0 %1361, %v1312
          %v1363 = vpop.permute.xlu0 %1362
          %1366 = vset.pattern.permute.xlu0 0
          %1367 = vperm.xlu0 %1366, %v1313
          %v1368 = vpop.permute.xlu0 %1367
          %1371 = vset.pattern.permute.xlu0 0
          %1372 = vperm.xlu0 %1371, %v1314
          %v1373 = vpop.permute.xlu0 %1372
          %1376 = vset.pattern.permute.xlu0 0
          %1377 = vperm.xlu0 %1376, %v1315
          %v1378 = vpop.permute.xlu0 %1377
          %1381 = vset.pattern.permute.xlu0 0
          %1382 = vperm.xlu0 %1381, %v1316
          %v1383 = vpop.permute.xlu0 %1382
          %1386 = vset.pattern.permute.xlu0 0
          %1387 = vperm.xlu0 %1386, %v1317
          %v1388 = vpop.permute.xlu0 %1387
          %1391 = vset.pattern.permute.xlu0 0
          %1392 = vperm.xlu0 %1391, %v1318
          %v1393 = vpop.permute.xlu0 %1392
          %1396 = vset.pattern.permute.xlu0 0
          %1397 = vperm.xlu0 %1396, %v1319
          %v1398 = vpop.permute.xlu0 %1397
          %1401 = vset.pattern.permute.xlu0 0
          %1402 = vperm.xlu0 %1401, %v1320
          %v1403 = vpop.permute.xlu0 %1402
          %1406 = vset.pattern.permute.xlu0 0
          %1407 = vperm.xlu0 %1406, %v1321
          %v1408 = vpop.permute.xlu0 %1407
          %1411 = vset.pattern.permute.xlu0 0
          %1412 = vperm.xlu0 %1411, %v1322
          %v1413 = vpop.permute.xlu0 %1412
          %1416 = vset.pattern.permute.xlu0 0
          %1417 = vperm.xlu0 %1416, %v1323
          %v1418 = vpop.permute.xlu0 %1417
          %v1420 = vmul.f32 %v1324, %v1343
          %v1421 = vmul.f32 %v1325, %v1348
          %v1422 = vmul.f32 %v1326, %v1353
          %v1423 = vmul.f32 %v1327, %v1358
          %v1424 = vmul.f32 %v1328, %v1363
          %v1425 = vmul.f32 %v1329, %v1368
          %v1426 = vmul.f32 %v1330, %v1373
          %v1427 = vmul.f32 %v1331, %v1378
          %v1428 = vmul.f32 %v1332, %v1383
          %v1429 = vmul.f32 %v1333, %v1388
          %v1430 = vmul.f32 %v1334, %v1393
          %v1431 = vmul.f32 %v1335, %v1398
          %v1432 = vmul.f32 %v1336, %v1403
          %v1433 = vmul.f32 %v1337, %v1408
          %v1434 = vmul.f32 %v1338, %v1413
          %v1435 = vmul.f32 %v1339, %v1418
          %v1436 = vld [vmem:[%s4] sm:$0x1]
          %v1438 = vperm.slane %v1436, 0
          %v1440 = vadd.f32 %v1420, %v1438
          %v1441 = vadd.f32 %v1421, %v1438
          %v1442 = vadd.f32 %v1422, %v1438
          %v1443 = vadd.f32 %v1423, %v1438
          %v1444 = vadd.f32 %v1424, %v1438
          %v1445 = vadd.f32 %v1425, %v1438
          %v1446 = vadd.f32 %v1426, %v1438
          %v1447 = vadd.f32 %v1427, %v1438
          %v1448 = vadd.f32 %v1428, %v1438
          %v1449 = vadd.f32 %v1429, %v1438
          %v1450 = vadd.f32 %v1430, %v1438
          %v1451 = vadd.f32 %v1431, %v1438
          %v1452 = vadd.f32 %v1432, %v1438
          %v1453 = vadd.f32 %v1433, %v1438
          %v1454 = vadd.f32 %v1434, %v1438
          %v1455 = vadd.f32 %v1435, %v1438
          %v1456 = vlaneseq
          %v1457 = vand.u32 %v1456, 127
          %vm1458 = vcmp.lt.s32.totalorder %v1457, 8
          %v1459 = vsel %vm1458, %v1440, -1e+30
          %v1460 = vsel %vm1458, %v1441, -1e+30
          %v1461 = vsel %vm1458, %v1442, -1e+30
          %v1462 = vsel %vm1458, %v1443, -1e+30
          %v1463 = vsel %vm1458, %v1444, -1e+30
          %v1464 = vsel %vm1458, %v1445, -1e+30
          %v1465 = vsel %vm1458, %v1446, -1e+30
          %v1466 = vsel %vm1458, %v1447, -1e+30
          %v1467 = vsel %vm1458, %v1448, -1e+30
          %v1468 = vsel %vm1458, %v1449, -1e+30
          %v1469 = vsel %vm1458, %v1450, -1e+30
          %v1470 = vsel %vm1458, %v1451, -1e+30
          %v1471 = vsel %vm1458, %v1452, -1e+30
          %v1472 = vsel %vm1458, %v1453, -1e+30
          %v1473 = vsel %vm1458, %v1454, -1e+30
          %v1474 = vsel %vm1458, %v1455, -1e+30
          %1475 = vmax.xlane.f32.xlu0 %v1459
          %v1476 = vpop.xlane.xlu0 %1475
          %1477 = vmax.xlane.f32.xlu0 %v1460
          %v1478 = vpop.xlane.xlu0 %1477
          %1479 = vmax.xlane.f32.xlu0 %v1461
          %v1480 = vpop.xlane.xlu0 %1479
          %1481 = vmax.xlane.f32.xlu0 %v1462
          %v1482 = vpop.xlane.xlu0 %1481
          %1483 = vmax.xlane.f32.xlu0 %v1463
          %v1484 = vpop.xlane.xlu0 %1483
          %1485 = vmax.xlane.f32.xlu0 %v1464
          %v1486 = vpop.xlane.xlu0 %1485
          %1487 = vmax.xlane.f32.xlu0 %v1465
          %v1488 = vpop.xlane.xlu0 %1487
          %1489 = vmax.xlane.f32.xlu0 %v1466
          %v1490 = vpop.xlane.xlu0 %1489
          %1491 = vmax.xlane.f32.xlu0 %v1467
          %v1492 = vpop.xlane.xlu0 %1491
          %1493 = vmax.xlane.f32.xlu0 %v1468
          %v1494 = vpop.xlane.xlu0 %1493
          %1495 = vmax.xlane.f32.xlu0 %v1469
          %v1496 = vpop.xlane.xlu0 %1495
          %1497 = vmax.xlane.f32.xlu0 %v1470
          %v1498 = vpop.xlane.xlu0 %1497
          %1499 = vmax.xlane.f32.xlu0 %v1471
          %v1500 = vpop.xlane.xlu0 %1499
          %1501 = vmax.xlane.f32.xlu0 %v1472
          %v1502 = vpop.xlane.xlu0 %1501
          %1503 = vmax.xlane.f32.xlu0 %v1473
          %v1504 = vpop.xlane.xlu0 %1503
          %1505 = vmax.xlane.f32.xlu0 %v1474
          %v1506 = vpop.xlane.xlu0 %1505
          %v1507 = vsub.f32 %v1459, %v1476
          %v1508 = vsub.f32 %v1460, %v1478
          %v1509 = vsub.f32 %v1461, %v1480
          %v1510 = vsub.f32 %v1462, %v1482
          %v1511 = vsub.f32 %v1463, %v1484
          %v1512 = vsub.f32 %v1464, %v1486
          %v1513 = vsub.f32 %v1465, %v1488
          %v1514 = vsub.f32 %v1466, %v1490
          %v1515 = vsub.f32 %v1467, %v1492
          %v1516 = vsub.f32 %v1468, %v1494
          %v1517 = vsub.f32 %v1469, %v1496
          %v1518 = vsub.f32 %v1470, %v1498
          %v1519 = vsub.f32 %v1471, %v1500
          %v1520 = vsub.f32 %v1472, %v1502
          %v1521 = vsub.f32 %v1473, %v1504
          %v1522 = vsub.f32 %v1474, %v1506
          %v1523 = vmul.f32 %v1507, 1.442695
          %v1524 = vpow.pop %v1523
          %v1525 = vmul.f32 %v1508, 1.442695
          %v1526 = vpow.pop %v1525
          %v1527 = vmul.f32 %v1509, 1.442695
          %v1528 = vpow.pop %v1527
          %v1529 = vmul.f32 %v1510, 1.442695
          %v1530 = vpow.pop %v1529
          %v1531 = vmul.f32 %v1511, 1.442695
          %v1532 = vpow.pop %v1531
          %v1533 = vmul.f32 %v1512, 1.442695
          %v1534 = vpow.pop %v1533
          %v1535 = vmul.f32 %v1513, 1.442695
          %v1536 = vpow.pop %v1535
          %v1537 = vmul.f32 %v1514, 1.442695
          %v1538 = vpow.pop %v1537
          %v1539 = vmul.f32 %v1515, 1.442695
          %v1540 = vpow.pop %v1539
          %v1541 = vmul.f32 %v1516, 1.442695
          %v1542 = vpow.pop %v1541
          %v1543 = vmul.f32 %v1517, 1.442695
          %v1544 = vpow.pop %v1543
          %v1545 = vmul.f32 %v1518, 1.442695
          %v1546 = vpow.pop %v1545
          %v1547 = vmul.f32 %v1519, 1.442695
          %v1548 = vpow.pop %v1547
          %v1549 = vmul.f32 %v1520, 1.442695
          %v1550 = vpow.pop %v1549
          %v1551 = vmul.f32 %v1521, 1.442695
          %v1552 = vpow.pop %v1551
          %v1553 = vmul.f32 %v1522, 1.442695
          %v1554 = vpow.pop %v1553
          %1555 = vadd.xlane.f32.xlu0 %v1524
          %v1556 = vpop.xlane.xlu0 %1555
          %1557 = vadd.xlane.f32.xlu0 %v1526
          %v1558 = vpop.xlane.xlu0 %1557
          %1559 = vadd.xlane.f32.xlu0 %v1528
          %v1560 = vpop.xlane.xlu0 %1559
          %1561 = vadd.xlane.f32.xlu0 %v1530
          %v1562 = vpop.xlane.xlu0 %1561
          %1563 = vadd.xlane.f32.xlu0 %v1532
          %v1564 = vpop.xlane.xlu0 %1563
          %1565 = vadd.xlane.f32.xlu0 %v1534
          %v1566 = vpop.xlane.xlu0 %1565
          %1567 = vadd.xlane.f32.xlu0 %v1536
          %v1568 = vpop.xlane.xlu0 %1567
          %1569 = vadd.xlane.f32.xlu0 %v1538
          %v1570 = vpop.xlane.xlu0 %1569
          %1571 = vadd.xlane.f32.xlu0 %v1540
          %v1572 = vpop.xlane.xlu0 %1571
          %1573 = vadd.xlane.f32.xlu0 %v1542
          %v1574 = vpop.xlane.xlu0 %1573
          %1575 = vadd.xlane.f32.xlu0 %v1544
          %v1576 = vpop.xlane.xlu0 %1575
          %1577 = vadd.xlane.f32.xlu0 %v1546
          %v1578 = vpop.xlane.xlu0 %1577
          %1579 = vadd.xlane.f32.xlu0 %v1548
          %v1580 = vpop.xlane.xlu0 %1579
          %1581 = vadd.xlane.f32.xlu0 %v1550
          %v1582 = vpop.xlane.xlu0 %1581
          %1583 = vadd.xlane.f32.xlu0 %v1552
          %v1584 = vpop.xlane.xlu0 %1583
          %1585 = vadd.xlane.f32.xlu0 %v1554
          %v1586 = vpop.xlane.xlu0 %1585
          %v1587 = vlog2.pop %v1556
          %v1588 = vmul.f32 %v1587, 0.6931472
          %v1589 = vlog2.pop %v1558
          %v1590 = vmul.f32 %v1589, 0.6931472
          %v1591 = vlog2.pop %v1560
          %v1592 = vmul.f32 %v1591, 0.6931472
          %v1593 = vlog2.pop %v1562
          %v1594 = vmul.f32 %v1593, 0.6931472
          %v1595 = vlog2.pop %v1564
          %v1596 = vmul.f32 %v1595, 0.6931472
          %v1597 = vlog2.pop %v1566
          %v1598 = vmul.f32 %v1597, 0.6931472
          %v1599 = vlog2.pop %v1568
          %v1600 = vmul.f32 %v1599, 0.6931472
          %v1601 = vlog2.pop %v1570
          %v1602 = vmul.f32 %v1601, 0.6931472
          %v1603 = vlog2.pop %v1572
          %v1604 = vmul.f32 %v1603, 0.6931472
          %v1605 = vlog2.pop %v1574
          %v1606 = vmul.f32 %v1605, 0.6931472
          %v1607 = vlog2.pop %v1576
          %v1608 = vmul.f32 %v1607, 0.6931472
          %v1609 = vlog2.pop %v1578
          %v1610 = vmul.f32 %v1609, 0.6931472
          %v1611 = vlog2.pop %v1580
          %v1612 = vmul.f32 %v1611, 0.6931472
          %v1613 = vlog2.pop %v1582
          %v1614 = vmul.f32 %v1613, 0.6931472
          %v1615 = vlog2.pop %v1584
          %v1616 = vmul.f32 %v1615, 0.6931472
          %v1617 = vlog2.pop %v1586
          %v1618 = vmul.f32 %v1617, 0.6931472
          %v1619 = vsub.f32 %v1507, %v1588
          %v1620 = vsub.f32 %v1508, %v1590
          %v1621 = vsub.f32 %v1509, %v1592
          %v1622 = vsub.f32 %v1510, %v1594
          %v1623 = vsub.f32 %v1511, %v1596
          %v1624 = vsub.f32 %v1512, %v1598
          %v1625 = vsub.f32 %v1513, %v1600
          %v1626 = vsub.f32 %v1514, %v1602
          %v1627 = vsub.f32 %v1515, %v1604
          %v1628 = vsub.f32 %v1516, %v1606
          %v1629 = vsub.f32 %v1517, %v1608
          %v1630 = vsub.f32 %v1518, %v1610
          %v1631 = vsub.f32 %v1519, %v1612
          %v1632 = vsub.f32 %v1520, %v1614
          %v1633 = vsub.f32 %v1521, %v1616
          %v1634 = vsub.f32 %v1522, %v1618
          %1635 = vst [vmem:[%s403] sm:$0xff] %v1619
          %1636 = vst [vmem:[%s403 + $0x8] sm:$0xff] %v1620
          %1637 = vst [vmem:[%s403 + $0x10] sm:$0xff] %v1621
          %1638 = vst [vmem:[%s403 + $0x18] sm:$0xff] %v1622
          %1639 = vst [vmem:[%s403 + $0x20] sm:$0xff] %v1623
          %1640 = vst [vmem:[%s403 + $0x28] sm:$0xff] %v1624
          %1641 = vst [vmem:[%s403 + $0x30] sm:$0xff] %v1625
          %1642 = vst [vmem:[%s403 + $0x38] sm:$0xff] %v1626
          %1643 = vst [vmem:[%s403 + $0x40] sm:$0xff] %v1627
          %1644 = vst [vmem:[%s403 + $0x48] sm:$0xff] %v1628
          %1645 = vst [vmem:[%s403 + $0x50] sm:$0xff] %v1629
          %1646 = vst [vmem:[%s403 + $0x58] sm:$0xff] %v1630
          %1647 = vst [vmem:[%s403 + $0x60] sm:$0xff] %v1631
          %1648 = vst [vmem:[%s403 + $0x68] sm:$0xff] %v1632
          %1649 = vst [vmem:[%s403 + $0x70] sm:$0xff] %v1633
          %1650 = vst [vmem:[%s403 + $0x78] sm:$0xff] %v1634
        $region89: #{gat_forward.11} parent=76 // pred_fallthru
          _
        %s1651 = smul.u32 16, %s20
        %p1652 = scmp.lt.s32.totalorder %s1651, 31
        %s1653 = scalar_select %p1652, %s1651, 31
        %s1654 = smul.addr %s1653, 8
        %s1655 = scalar_lea.vmem %s5, %s1654
        // Predicated region
        $region90: #{gat_forward.11} parent=76 // pred_check
          %p1656 = pneg %p173
        $region91: #{gat_forward.11} parent=76 // pred_check_branch
          %1658 = sbr.rel (%p1656) target = $region93
        $region92: #{gat_forward.11} parent=76 // pred_region
          %s1659 = smul.u32 16, %s20
        $region93: #{gat_forward.11} parent=76 // pred_fallthru
          _
      $region77: #{gat_forward.11} parent=5 // pred_fallthru
        _
      %p1660 = scmp.le.s32.totalorder 2, %s11
      // Predicated region
      $region94: #{gat_forward.11} parent=5 // pred_check
        %p1661 = pneg %p1660
      $region95: #{gat_forward.11} parent=5 // pred_check_branch
        %1663 = sbr.rel (%p1661) target = $region97
      $region96: #{gat_forward.11} parent=5 // pred_region
        %s1664 = ssub.s32 %s11, 2
        // Predicated region
        $region98: #{gat_forward.11} parent=96 // pred_check
          %p1665 = pneg %p179
        $region99: #{gat_forward.11} parent=96 // pred_check_branch
          %1667 = sbr.rel (%p1665) target = $region101
        $region100: #{gat_forward.11} parent=96 // pred_region
          %s1668 = smul.u32 16, %s22
          %p1669 = scmp.lt.s32.totalorder %s1668, 31
          %s1670 = scalar_select %p1669, %s1668, 31
          %s1671 = smul.addr %s1670, 8
          %s1672 = scalar_lea.vmem %s5, %s1671
        $region101: #{gat_forward.11} parent=96 // pred_fallthru
          _
      $region97: #{gat_forward.11} parent=5 // pred_fallthru
        _
    $region6: #{gat_forward.11} parent=1 // loop_footer
      %s15 = sadd.s32 1, %s11
    $region7: #{gat_forward.11} parent=1 // loop_footer_branch
      %10 = sbr.rel target = $region3
    $region8: #{gat_forward.11} parent=1 // loop_exit
      _

</llo_original>
